<compile_context>
chip_gen: v6e
topology: v6e:2x2x1
jax: 0.10.0
libtpu: 0.0.40
codegen_flags: <defaults>
</compile_context>

<pallas_src>
import math
import numpy as np
import jax
import jax.numpy as jnp
from jax.experimental import pallas as pl
from jax.experimental.pallas import tpu as pltpu

NPAD = 128            # lane padding of the Nclass output row
UNROLL_PARENTS = 16   # fully unroll the parent recurrence for trees up to this size


# ------------------------------ fused kernel --------------------------------

def make_fused_tree_kernel(*, num_parents, num_heads, hidden, max_children, n_wo):
    mh = num_heads * hidden

    def kernel(tree_ref, cnt_ref,            # SMEM scalar prefetch (child table, counts)
               q_ref, wkv_ref, *rest):       # VMEM-resident inputs / output / scratch
        wo_refs = rest[:n_wo]
        woutT_ref = rest[n_wo]
        bout_ref = rest[n_wo + 1]
        o_ref = rest[n_wo + 2]
        node_h_ref = rest[n_wo + 3]          # [1 + num_parents (padded to 8), H]
        child_ref = rest[n_wo + 4]           # [Cmax, H] contiguous child staging buffer

        def wo_cascade(h):
            # h <- sigmoid(WO[i] @ h)  ==  h_row @ WO[i].T  (cascade of heads-1 mats)
            for wo_ref in wo_refs:
                h = jax.nn.sigmoid(
                    jnp.dot(h, wo_ref[...], preferred_element_type=jnp.float32))
            return h

        # ---- shared leaf state (row 0).  child_h == 0 => key == val == 0, so every
        # head output is exactly zero for every leaf regardless of its word; all leaves
        # therefore equal WO-cascade(zeros).  Computed once, stored once.
        # NOTE: must stay before the parent loop — padded child slots read row 0.
        node_h_ref[0:1, :] = wo_cascade(jnp.zeros((1, mh), jnp.float32))

        lane = jax.lax.broadcasted_iota(jnp.int32, (1, max_children), 1)

        def per_parent(p):
            # Stage the children of parent p into one contiguous [Cmax, H] block.
            for j in range(max_children):
                cidx = tree_ref[p, j]                              # SMEM scalar read
                child_ref[pl.ds(j, 1), :] = node_h_ref[pl.ds(cidx, 1), :]
            child_h = child_ref[...]                               # [Cmax, H]
            valid = lane < cnt_ref[p]                              # mask padded slots

            # One fused K/V projection for every head: [Cmax, 2*heads*H].
            kv = jnp.dot(child_h, wkv_ref[...], preferred_element_type=jnp.float32)
            # Pre-computed, pre-scaled query row (loop-invariant, hoisted to wrapper).
            q_row = q_ref[pl.ds(p, 1), :]                          # [1, heads*H]

            tmps = []
            for i in range(num_heads):
                q_i = q_row[:, i * hidden:(i + 1) * hidden]
                k_i = kv[:, i * hidden:(i + 1) * hidden]
                v_i = kv[:, (num_heads + i) * hidden:(num_heads + i + 1) * hidden]
                # Original module: head 0 divides by sqrt(H), heads >= 1 multiply by
                # sqrt(H) — that asymmetric scale is folded into WQ in the wrapper.
                scores = jax.lax.dot_general(q_i, k_i, (((1,), (1,)), ((), ())),
                                             preferred_element_type=jnp.float32)
                scores = jnp.where(valid, scores, jnp.float32(-1e30))
                m = jnp.max(scores, axis=-1, keepdims=True)
                e = jnp.exp(scores - m)
                attn = e / jnp.sum(e, axis=-1, keepdims=True)      # exact softmax
                tmps.append(jnp.dot(attn, v_i, preferred_element_type=jnp.float32))

            h = wo_cascade(jnp.concatenate(tmps, axis=1))          # [1, H]
            node_h_ref[pl.ds(1 + p, 1), :] = h                     # persistent writeback

        if num_parents <= UNROLL_PARENTS:
            for p in range(num_parents):               # fully unrolled, LLO-visible
                per_parent(p)
        else:
            pl.loop(0, num_parents)(per_parent)        # in-kernel sequential recurrence

        # ---- root = last parent row; class probabilities on the padded 128-lane row.
        # W_out is zero-padded and the bias pad lanes hold -1e30, so the softmax over
        # the padded row is exact over the real classes.
        root = node_h_ref[num_parents:num_parents + 1, :]
        logits = (jnp.dot(root, woutT_ref[...], preferred_element_type=jnp.float32)
                  + bout_ref[...])
        mo = jnp.max(logits, axis=-1, keepdims=True)
        eo = jnp.exp(logits - mo)
        o_ref[...] = eo / jnp.sum(eo, axis=-1, keepdims=True)

    return kernel


# ------------------------------ model wrapper --------------------------------

def init_params(key, *, word_dim, hidden_dim, nclass, multi_head):
    ks = jax.random.split(key, 5 + (multi_head - 1))

    def mat(k, shape):
        return 0.1 * jax.random.normal(k, shape, jnp.float32)

    return {
        "E_bu": mat(ks[0], (hidden_dim, word_dim)),
        "WQ": mat(ks[1], (multi_head, hidden_dim, hidden_dim)),
        "WK": mat(ks[2], (multi_head, hidden_dim, hidden_dim)),
        "WV": mat(ks[3], (multi_head, hidden_dim, hidden_dim)),
        "WO": [mat(ks[5 + i], ((multi_head - i - 1) * hidden_dim,
                               hidden_dim * (multi_head - i)))
               for i in range(multi_head - 1)],
        "W_out_bu": mat(ks[4], (nclass, hidden_dim)),
        "b_out_bu": jnp.zeros((nclass,), jnp.float32),
        # W_z_bu / U_z_bu / b_z_bu / W_r_bu / ... exist in the PyTorch __init__ but are
        # never used by forward(), so they are intentionally not instantiated.
    }


def multi_attention_fcn_predict(params, x_word, x_index, tree_children, child_counts):
    """Bottom-up tree forward; returns class probabilities (== module.predict_up)."""
    num_parents, max_children = tree_children.shape
    num_nodes, _ = x_word.shape
    num_leaves = num_nodes - num_parents
    hidden = params["E_bu"].shape[0]
    nclass = params["W_out_bu"].shape[0]
    multi_head = params["WQ"].shape[0]
    n_wo = multi_head - 1

    # -------- loop-invariant work hoisted out of the recurrence (plain JAX) --------
    # parent word embeddings   xe_p = sum_j word_j * E_bu[:, idx_j]        -> [P, H]
    ebuT = params["E_bu"].T                                                # [V, H]
    x_word_par = x_word[num_leaves:].astype(jnp.float32)                   # [P, L]
    x_index_par = x_index[num_leaves:].astype(jnp.int32)                   # [P, L]
    xe_par = jnp.einsum("pl,plh->ph", x_word_par, ebuT[x_index_par])       # [P, H]

    # per-head queries with the (1/sqrt(H) | sqrt(H)) head scale folded into WQ
    scale = jnp.array([1.0 / math.sqrt(hidden)]
                      + [math.sqrt(hidden)] * (multi_head - 1), jnp.float32)
    wq_scaled = params["WQ"] * scale[:, None, None]                        # [M, H, H]
    wq_all = jnp.concatenate([wq_scaled[i] for i in range(multi_head)], axis=1)
    q_par = xe_par @ wq_all                                                # [P, M*H]

    # fused per-head K/V slabs -> one [H, 2*M*H] matrix (one MXU matmul per parent)
    wkv_all = jnp.concatenate([params["WK"][i] for i in range(multi_head)]
                              + [params["WV"][i] for i in range(multi_head)], axis=1)

    # Weights pre-transposed so every in-kernel product is row-major `x @ W`.
    woT = [w.T for w in params["WO"]]
    woutT_pad = jnp.zeros((hidden, NPAD), jnp.float32).at[:, :nclass].set(
        params["W_out_bu"].T)
    bout_pad = jnp.full((1, NPAD), -1e30, jnp.float32).at[0, :nclass].set(
        params["b_out_bu"])

    kernel = make_fused_tree_kernel(
        num_parents=num_parents, num_heads=multi_head, hidden=hidden,
        max_children=max_children, n_wo=n_wo)

    def _const(shape):
        nd = len(shape)

        def idx(*_):                 # (grid idx, *scalar-prefetch refs) ignored
            return (0,) * nd

        return pl.BlockSpec(shape, idx)

    tensor_inputs = [q_par, wkv_all, *woT, woutT_pad, bout_pad]
    in_specs = [_const(tuple(a.shape)) for a in tensor_inputs]

    state_rows = ((num_parents + 1 + 7) // 8) * 8   # shared leaf row + one per parent

    probs_pad = pl.pallas_call(
        kernel,
        out_shape=jax.ShapeDtypeStruct((1, NPAD), jnp.float32),
        grid_spec=pltpu.PrefetchScalarGridSpec(
            num_scalar_prefetch=2,
            grid=(1,),                               # whole recurrence in one grid step
            in_specs=in_specs,
            out_specs=_const((1, NPAD)),
            scratch_shapes=[pltpu.VMEM((state_rows, hidden), jnp.float32),
                            pltpu.VMEM((max_children, hidden), jnp.float32)]),
        compiler_params=pltpu.CompilerParams(
            dimension_semantics=("arbitrary",)),
    )(tree_children.astype(jnp.int32), child_counts.astype(jnp.int32), *tensor_inputs)

    return probs_pad[0, :nclass]


@jax.jit
def multi_attention_fcn_forward(params, x_word, x_index, tree_children,
                                child_counts, y):
    pred = multi_attention_fcn_predict(params, x_word, x_index,
                                       tree_children, child_counts)
    loss = jnp.sum((y.astype(jnp.float32) - pred) ** 2)    # plain-JAX glue (scalar)
    return pred, loss


def build_child_tables(tree, num_leaves):
    """Host-side preprocessing of the static tree.  Children of parent r live in
    tree[r, :-1] with -1 padding (as in the PyTorch code); compact them to the front,
    record the per-parent child count, and remap node indices to the compact node_h
    rows used by the kernel: every leaf -> shared row 0 (all leaf states are identical
    by construction), parent k -> row 1 + k."""
    tree_np = np.asarray(tree)
    cand = tree_np[:, :-1]
    num_parents, cmax = cand.shape
    children = np.zeros((num_parents, cmax), np.int32)
    counts = np.zeros((num_parents,), np.int32)
    for r in range(num_parents):
        kids = cand[r][cand[r] > -1]
        counts[r] = kids.size
        children[r, :kids.size] = np.where(kids < num_leaves, 0,
                                           kids - num_leaves + 1)
    return jnp.asarray(children), jnp.asarray(counts)


# ---------------------------------- main -------------------------------------

if __name__ == "__main__":
    word_dim, hidden_dim, nclass = 16, 128, 4
    multi_head = 3
    words_per_node = 8
    num_leaves, num_parents = 5, 3
    num_nodes = num_leaves + num_parents
    # (degree only affects the all-zero leaf child_h, so it is result-invariant.)

    key = jax.random.PRNGKey(0)
    kp, kw, ki = jax.random.split(key, 3)
    params = init_params(kp, word_dim=word_dim, hidden_dim=hidden_dim,
                         nclass=nclass, multi_head=multi_head)

    x_word = jax.random.uniform(kw, (num_nodes, words_per_node), jnp.float32)
    x_index = jax.random.randint(
        ki, (num_nodes, words_per_node), 0, word_dim).astype(jnp.int32)
    # per-parent rows: child node indices in row[:-1], -1 = none; bottom-up order
    # (later parents may reference earlier parents: nodes 5 and 6 are parents 0, 1).
    tree = np.array([[0, 1, -1, -1],
                     [2, 3, 4, -1],
                     [5, 6, -1, -1]], dtype=np.int32)
    tree_children, child_counts = build_child_tables(tree, num_leaves)
    y = jnp.zeros((nclass,), jnp.float32).at[1].set(1.0)

    pred, loss = multi_attention_fcn_forward(params, x_word, x_index,
                                             tree_children, child_counts, y)
    pred = jax.block_until_ready(pred)

    assert pred.shape == (nclass,)
    assert np.isfinite(np.asarray(pred)).all()
    assert np.isfinite(float(loss))
    assert abs(float(jnp.sum(pred)) - 1.0) < 1e-3
    print("KERNEL_OK")
</pallas_src>

<mosaic_0001>
module attributes {stable_mosaic.version = 11 : i64} {
  func.func @kernel(%arg0: i32, %arg1: memref<3x3xi32, #tpu.memory_space<smem>>, %arg2: memref<3xi32, #tpu.memory_space<smem>>, %arg3: memref<3x384xf32, #tpu.memory_space<vmem>>, %arg4: memref<128x768xf32, #tpu.memory_space<vmem>>, %arg5: memref<384x256xf32, #tpu.memory_space<vmem>>, %arg6: memref<256x128xf32, #tpu.memory_space<vmem>>, %arg7: memref<128x128xf32, #tpu.memory_space<vmem>>, %arg8: memref<1x128xf32, #tpu.memory_space<vmem>>, %arg9: memref<1x128xf32, #tpu.memory_space<vmem>>, %arg10: memref<8x128xf32, #tpu.memory_space<vmem>>, %arg11: memref<3x128xf32, #tpu.memory_space<vmem>>) attributes {dimension_semantics = [#tpu.dimension_semantics<arbitrary>], iteration_bounds = array<i64: 1>, scalar_prefetch = 2 : i64, scratch_operands = 2 : i64, tpu.core_type = #tpu.core_type<tc>, window_params = [{pipeline_mode = #tpu.pipeline_mode<synchronous>, transform_indices = @transform_0, window_bounds = array<i64: 3, 384>}, {pipeline_mode = #tpu.pipeline_mode<synchronous>, transform_indices = @transform_1, window_bounds = array<i64: 128, 768>}, {pipeline_mode = #tpu.pipeline_mode<synchronous>, transform_indices = @transform_2, window_bounds = array<i64: 384, 256>}, {pipeline_mode = #tpu.pipeline_mode<synchronous>, transform_indices = @transform_3, window_bounds = array<i64: 256, 128>}, {pipeline_mode = #tpu.pipeline_mode<synchronous>, transform_indices = @transform_4, window_bounds = array<i64: 128, 128>}, {pipeline_mode = #tpu.pipeline_mode<synchronous>, transform_indices = @transform_5, window_bounds = array<i64: 1, 128>}, {pipeline_mode = #tpu.pipeline_mode<synchronous>, transform_indices = @transform_6, window_bounds = array<i64: 1, 128>}]} {
    %cst = arith.constant 0.000000e+00 : f32
    %0 = vector.broadcast %cst : f32 to vector<1x384xf32>
    %c0 = arith.constant 0 : index
    %c0_0 = arith.constant 0 : index
    %1 = vector.load %arg5[%c0, %c0_0] : memref<384x256xf32, #tpu.memory_space<vmem>>, vector<384x256xf32>
    %cst_1 = arith.constant dense<0.000000e+00> : vector<1x256xf32>
    %2 = tpu.matmul %0, %1, %cst_1 {dimension_numbers = #tpu.dot_dimension_numbers<[1], [0], [0], [1], [0, 0, 1, 1], [], []>} : vector<1x384xf32>, vector<384x256xf32>, vector<1x256xf32> -> vector<1x256xf32>
    %3 = arith.negf %2 : vector<1x256xf32>
    %4 = math.exp %3 : vector<1x256xf32>
    %cst_2 = arith.constant 1.000000e+00 : f32
    %5 = vector.broadcast %cst_2 : f32 to vector<1x256xf32>
    %6 = arith.addf %5, %4 : vector<1x256xf32>
    %7 = arith.divf %5, %6 : vector<1x256xf32>
    %c0_3 = arith.constant 0 : index
    %c0_4 = arith.constant 0 : index
    %8 = vector.load %arg6[%c0_3, %c0_4] : memref<256x128xf32, #tpu.memory_space<vmem>>, vector<256x128xf32>
    %cst_5 = arith.constant dense<0.000000e+00> : vector<1x128xf32>
    %9 = tpu.matmul %7, %8, %cst_5 {dimension_numbers = #tpu.dot_dimension_numbers<[1], [0], [0], [1], [0, 0, 1, 1], [], []>} : vector<1x256xf32>, vector<256x128xf32>, vector<1x128xf32> -> vector<1x128xf32>
    %10 = arith.negf %9 : vector<1x128xf32>
    %11 = math.exp %10 : vector<1x128xf32>
    %cst_6 = arith.constant 1.000000e+00 : f32
    %12 = vector.broadcast %cst_6 : f32 to vector<1x128xf32>
    %13 = arith.addf %12, %11 : vector<1x128xf32>
    %14 = arith.divf %12, %13 : vector<1x128xf32>
    %c0_7 = arith.constant 0 : index
    %c0_8 = arith.constant 0 : index
    %15 = vector.load %arg10[%c0_7, %c0_8] : memref<8x128xf32, #tpu.memory_space<vmem>>, vector<1x128xf32>
    tpu.vector_store %arg10[%c0_7, %c0_8], %14 {strides = array<i32>} : memref<8x128xf32, #tpu.memory_space<vmem>>, vector<1x128xf32>,
    %16 = tpu.iota {dimensions = array<i32: 1>} : vector<1x3xi32>
    %c0_9 = arith.constant 0 : index
    %c0_10 = arith.constant 0 : index
    %17 = memref.load %arg1[%c0_9, %c0_10] : memref<3x3xi32, #tpu.memory_space<smem>>
    %18 = arith.index_cast %17 : i32 to index
    %c0_11 = arith.constant 0 : index
    %19 = vector.load %arg10[%18, %c0_11] : memref<8x128xf32, #tpu.memory_space<vmem>>, vector<1x128xf32>
    %c0_12 = arith.constant 0 : index
    %c0_13 = arith.constant 0 : index
    %20 = vector.load %arg11[%c0_12, %c0_13] : memref<3x128xf32, #tpu.memory_space<vmem>>, vector<1x128xf32>
    tpu.vector_store %arg11[%c0_12, %c0_13], %19 {strides = array<i32>} : memref<3x128xf32, #tpu.memory_space<vmem>>, vector<1x128xf32>,
    %c0_14 = arith.constant 0 : index
    %c1 = arith.constant 1 : index
    %21 = memref.load %arg1[%c0_14, %c1] : memref<3x3xi32, #tpu.memory_space<smem>>
    %22 = arith.index_cast %21 : i32 to index
    %c0_15 = arith.constant 0 : index
    %23 = vector.load %arg10[%22, %c0_15] : memref<8x128xf32, #tpu.memory_space<vmem>>, vector<1x128xf32>
    %c1_16 = arith.constant 1 : index
    %c0_17 = arith.constant 0 : index
    %24 = vector.load %arg11[%c1_16, %c0_17] : memref<3x128xf32, #tpu.memory_space<vmem>>, vector<1x128xf32>
    tpu.vector_store %arg11[%c1_16, %c0_17], %23 {strides = array<i32>} : memref<3x128xf32, #tpu.memory_space<vmem>>, vector<1x128xf32>,
    %c0_18 = arith.constant 0 : index
    %c2 = arith.constant 2 : index
    %25 = memref.load %arg1[%c0_18, %c2] : memref<3x3xi32, #tpu.memory_space<smem>>
    %26 = arith.index_cast %25 : i32 to index
    %c0_19 = arith.constant 0 : index
    %27 = vector.load %arg10[%26, %c0_19] : memref<8x128xf32, #tpu.memory_space<vmem>>, vector<1x128xf32>
    %c2_20 = arith.constant 2 : index
    %c0_21 = arith.constant 0 : index
    %28 = vector.load %arg11[%c2_20, %c0_21] : memref<3x128xf32, #tpu.memory_space<vmem>>, vector<1x128xf32>
    tpu.vector_store %arg11[%c2_20, %c0_21], %27 {strides = array<i32>} : memref<3x128xf32, #tpu.memory_space<vmem>>, vector<1x128xf32>,
    %c0_22 = arith.constant 0 : index
    %c0_23 = arith.constant 0 : index
    %29 = vector.load %arg11[%c0_22, %c0_23] : memref<3x128xf32, #tpu.memory_space<vmem>>, vector<3x128xf32>
    %c0_24 = arith.constant 0 : index
    %30 = memref.load %arg2[%c0_24] : memref<3xi32, #tpu.memory_space<smem>>
    %31 = vector.broadcast %30 : i32 to vector<1x3xi32>
    %32 = arith.cmpi slt, %16, %31 : vector<1x3xi32>
    %c0_25 = arith.constant 0 : index
    %c0_26 = arith.constant 0 : index
    %33 = vector.load %arg4[%c0_25, %c0_26] : memref<128x768xf32, #tpu.memory_space<vmem>>, vector<128x768xf32>
    %cst_27 = arith.constant dense<0.000000e+00> : vector<3x768xf32>
    %34 = tpu.matmul %29, %33, %cst_27 {dimension_numbers = #tpu.dot_dimension_numbers<[1], [0], [0], [1], [0, 0, 1, 1], [], []>} : vector<3x128xf32>, vector<128x768xf32>, vector<3x768xf32> -> vector<3x768xf32>
    %c0_28 = arith.constant 0 : index
    %c0_29 = arith.constant 0 : index
    %35 = vector.load %arg3[%c0_28, %c0_29] : memref<3x384xf32, #tpu.memory_space<vmem>>, vector<1x384xf32>
    %36 = vector.extract_strided_slice %35 {offsets = [0, 0], sizes = [1, 128], strides = [1, 1]} : vector<1x384xf32> to vector<1x128xf32>
    %37 = vector.extract_strided_slice %34 {offsets = [0, 0], sizes = [3, 128], strides = [1, 1]} : vector<3x768xf32> to vector<3x128xf32>
    %38 = vector.extract_strided_slice %34 {offsets = [0, 384], sizes = [3, 128], strides = [1, 1]} : vector<3x768xf32> to vector<3x128xf32>
    %cst_30 = arith.constant dense<0.000000e+00> : vector<1x3xf32>
    %39 = tpu.matmul %36, %37, %cst_30 {dimension_numbers = #tpu.dot_dimension_numbers<[1], [1], [0], [0], [0, 0, 1, 0], [], []>} : vector<1x128xf32>, vector<3x128xf32>, vector<1x3xf32> -> vector<1x3xf32>
    %cst_31 = arith.constant -1.000000e+30 : f32
    %40 = vector.broadcast %cst_31 : f32 to vector<1x3xf32>
    %41 = arith.select %32, %39, %40 : vector<1x3xi1>, vector<1x3xf32>
    %cst_32 = arith.constant dense<0xFF800000> : vector<1xf32>
    %42 = vector.multi_reduction <maximumf>, %41, %cst_32 [1] : vector<1x3xf32> to vector<1xf32>
    %43 = vector.shape_cast %42 : vector<1xf32> to vector<1x1xf32>
    %44 = vector.broadcast %43 : vector<1x1xf32> to vector<1x3xf32>
    %45 = arith.subf %41, %44 : vector<1x3xf32>
    %46 = math.exp %45 : vector<1x3xf32>
    %cst_33 = arith.constant dense<0.000000e+00> : vector<1xf32>
    %47 = vector.multi_reduction <add>, %46, %cst_33 [1] : vector<1x3xf32> to vector<1xf32>
    %48 = vector.shape_cast %47 : vector<1xf32> to vector<1x1xf32>
    %49 = vector.broadcast %48 : vector<1x1xf32> to vector<1x3xf32>
    %50 = arith.divf %46, %49 : vector<1x3xf32>
    %cst_34 = arith.constant dense<0.000000e+00> : vector<1x128xf32>
    %51 = tpu.matmul %50, %38, %cst_34 {dimension_numbers = #tpu.dot_dimension_numbers<[1], [0], [0], [1], [0, 0, 1, 1], [], []>} : vector<1x3xf32>, vector<3x128xf32>, vector<1x128xf32> -> vector<1x128xf32>
    %52 = vector.extract_strided_slice %35 {offsets = [0, 128], sizes = [1, 128], strides = [1, 1]} : vector<1x384xf32> to vector<1x128xf32>
    %53 = vector.extract_strided_slice %34 {offsets = [0, 128], sizes = [3, 128], strides = [1, 1]} : vector<3x768xf32> to vector<3x128xf32>
    %54 = vector.extract_strided_slice %34 {offsets = [0, 512], sizes = [3, 128], strides = [1, 1]} : vector<3x768xf32> to vector<3x128xf32>
    %cst_35 = arith.constant dense<0.000000e+00> : vector<1x3xf32>
    %55 = tpu.matmul %52, %53, %cst_35 {dimension_numbers = #tpu.dot_dimension_numbers<[1], [1], [0], [0], [0, 0, 1, 0], [], []>} : vector<1x128xf32>, vector<3x128xf32>, vector<1x3xf32> -> vector<1x3xf32>
    %cst_36 = arith.constant -1.000000e+30 : f32
    %56 = vector.broadcast %cst_36 : f32 to vector<1x3xf32>
    %57 = arith.select %32, %55, %56 : vector<1x3xi1>, vector<1x3xf32>
    %cst_37 = arith.constant dense<0xFF800000> : vector<1xf32>
    %58 = vector.multi_reduction <maximumf>, %57, %cst_37 [1] : vector<1x3xf32> to vector<1xf32>
    %59 = vector.shape_cast %58 : vector<1xf32> to vector<1x1xf32>
    %60 = vector.broadcast %59 : vector<1x1xf32> to vector<1x3xf32>
    %61 = arith.subf %57, %60 : vector<1x3xf32>
    %62 = math.exp %61 : vector<1x3xf32>
    %cst_38 = arith.constant dense<0.000000e+00> : vector<1xf32>
    %63 = vector.multi_reduction <add>, %62, %cst_38 [1] : vector<1x3xf32> to vector<1xf32>
    %64 = vector.shape_cast %63 : vector<1xf32> to vector<1x1xf32>
    %65 = vector.broadcast %64 : vector<1x1xf32> to vector<1x3xf32>
    %66 = arith.divf %62, %65 : vector<1x3xf32>
    %cst_39 = arith.constant dense<0.000000e+00> : vector<1x128xf32>
    %67 = tpu.matmul %66, %54, %cst_39 {dimension_numbers = #tpu.dot_dimension_numbers<[1], [0], [0], [1], [0, 0, 1, 1], [], []>} : vector<1x3xf32>, vector<3x128xf32>, vector<1x128xf32> -> vector<1x128xf32>
    %68 = vector.extract_strided_slice %35 {offsets = [0, 256], sizes = [1, 128], strides = [1, 1]} : vector<1x384xf32> to vector<1x128xf32>
    %69 = vector.extract_strided_slice %34 {offsets = [0, 256], sizes = [3, 128], strides = [1, 1]} : vector<3x768xf32> to vector<3x128xf32>
    %70 = vector.extract_strided_slice %34 {offsets = [0, 640], sizes = [3, 128], strides = [1, 1]} : vector<3x768xf32> to vector<3x128xf32>
    %cst_40 = arith.constant dense<0.000000e+00> : vector<1x3xf32>
    %71 = tpu.matmul %68, %69, %cst_40 {dimension_numbers = #tpu.dot_dimension_numbers<[1], [1], [0], [0], [0, 0, 1, 0], [], []>} : vector<1x128xf32>, vector<3x128xf32>, vector<1x3xf32> -> vector<1x3xf32>
    %cst_41 = arith.constant -1.000000e+30 : f32
    %72 = vector.broadcast %cst_41 : f32 to vector<1x3xf32>
    %73 = arith.select %32, %71, %72 : vector<1x3xi1>, vector<1x3xf32>
    %cst_42 = arith.constant dense<0xFF800000> : vector<1xf32>
    %74 = vector.multi_reduction <maximumf>, %73, %cst_42 [1] : vector<1x3xf32> to vector<1xf32>
    %75 = vector.shape_cast %74 : vector<1xf32> to vector<1x1xf32>
    %76 = vector.broadcast %75 : vector<1x1xf32> to vector<1x3xf32>
    %77 = arith.subf %73, %76 : vector<1x3xf32>
    %78 = math.exp %77 : vector<1x3xf32>
    %cst_43 = arith.constant dense<0.000000e+00> : vector<1xf32>
    %79 = vector.multi_reduction <add>, %78, %cst_43 [1] : vector<1x3xf32> to vector<1xf32>
    %80 = vector.shape_cast %79 : vector<1xf32> to vector<1x1xf32>
    %81 = vector.broadcast %80 : vector<1x1xf32> to vector<1x3xf32>
    %82 = arith.divf %78, %81 : vector<1x3xf32>
    %cst_44 = arith.constant dense<0.000000e+00> : vector<1x128xf32>
    %83 = tpu.matmul %82, %70, %cst_44 {dimension_numbers = #tpu.dot_dimension_numbers<[1], [0], [0], [1], [0, 0, 1, 1], [], []>} : vector<1x3xf32>, vector<3x128xf32>, vector<1x128xf32> -> vector<1x128xf32>
    %84 = tpu.concatenate %51, %67, %83 in 1 : vector<1x128xf32>, vector<1x128xf32>, vector<1x128xf32> -> vector<1x384xf32>
    %c0_45 = arith.constant 0 : index
    %c0_46 = arith.constant 0 : index
    %85 = vector.load %arg5[%c0_45, %c0_46] : memref<384x256xf32, #tpu.memory_space<vmem>>, vector<384x256xf32>
    %cst_47 = arith.constant dense<0.000000e+00> : vector<1x256xf32>
    %86 = tpu.matmul %84, %85, %cst_47 {dimension_numbers = #tpu.dot_dimension_numbers<[1], [0], [0], [1], [0, 0, 1, 1], [], []>} : vector<1x384xf32>, vector<384x256xf32>, vector<1x256xf32> -> vector<1x256xf32>
    %87 = arith.negf %86 : vector<1x256xf32>
    %88 = math.exp %87 : vector<1x256xf32>
    %cst_48 = arith.constant 1.000000e+00 : f32
    %89 = vector.broadcast %cst_48 : f32 to vector<1x256xf32>
    %90 = arith.addf %89, %88 : vector<1x256xf32>
    %91 = arith.divf %89, %90 : vector<1x256xf32>
    %c0_49 = arith.constant 0 : index
    %c0_50 = arith.constant 0 : index
    %92 = vector.load %arg6[%c0_49, %c0_50] : memref<256x128xf32, #tpu.memory_space<vmem>>, vector<256x128xf32>
    %cst_51 = arith.constant dense<0.000000e+00> : vector<1x128xf32>
    %93 = tpu.matmul %91, %92, %cst_51 {dimension_numbers = #tpu.dot_dimension_numbers<[1], [0], [0], [1], [0, 0, 1, 1], [], []>} : vector<1x256xf32>, vector<256x128xf32>, vector<1x128xf32> -> vector<1x128xf32>
    %94 = arith.negf %93 : vector<1x128xf32>
    %95 = math.exp %94 : vector<1x128xf32>
    %cst_52 = arith.constant 1.000000e+00 : f32
    %96 = vector.broadcast %cst_52 : f32 to vector<1x128xf32>
    %97 = arith.addf %96, %95 : vector<1x128xf32>
    %98 = arith.divf %96, %97 : vector<1x128xf32>
    %c1_53 = arith.constant 1 : index
    %c0_54 = arith.constant 0 : index
    %99 = vector.load %arg10[%c1_53, %c0_54] : memref<8x128xf32, #tpu.memory_space<vmem>>, vector<1x128xf32>
    tpu.vector_store %arg10[%c1_53, %c0_54], %98 {strides = array<i32>} : memref<8x128xf32, #tpu.memory_space<vmem>>, vector<1x128xf32>,
    %c1_55 = arith.constant 1 : index
    %c0_56 = arith.constant 0 : index
    %100 = memref.load %arg1[%c1_55, %c0_56] : memref<3x3xi32, #tpu.memory_space<smem>>
    %101 = arith.index_cast %100 : i32 to index
    %c0_57 = arith.constant 0 : index
    %102 = vector.load %arg10[%101, %c0_57] : memref<8x128xf32, #tpu.memory_space<vmem>>, vector<1x128xf32>
    %c0_58 = arith.constant 0 : index
    %c0_59 = arith.constant 0 : index
    %103 = vector.load %arg11[%c0_58, %c0_59] : memref<3x128xf32, #tpu.memory_space<vmem>>, vector<1x128xf32>
    tpu.vector_store %arg11[%c0_58, %c0_59], %102 {strides = array<i32>} : memref<3x128xf32, #tpu.memory_space<vmem>>, vector<1x128xf32>,
    %c1_60 = arith.constant 1 : index
    %c1_61 = arith.constant 1 : index
    %104 = memref.load %arg1[%c1_60, %c1_61] : memref<3x3xi32, #tpu.memory_space<smem>>
    %105 = arith.index_cast %104 : i32 to index
    %c0_62 = arith.constant 0 : index
    %106 = vector.load %arg10[%105, %c0_62] : memref<8x128xf32, #tpu.memory_space<vmem>>, vector<1x128xf32>
    %c1_63 = arith.constant 1 : index
    %c0_64 = arith.constant 0 : index
    %107 = vector.load %arg11[%c1_63, %c0_64] : memref<3x128xf32, #tpu.memory_space<vmem>>, vector<1x128xf32>
    tpu.vector_store %arg11[%c1_63, %c0_64], %106 {strides = array<i32>} : memref<3x128xf32, #tpu.memory_space<vmem>>, vector<1x128xf32>,
    %c1_65 = arith.constant 1 : index
    %c2_66 = arith.constant 2 : index
    %108 = memref.load %arg1[%c1_65, %c2_66] : memref<3x3xi32, #tpu.memory_space<smem>>
    %109 = arith.index_cast %108 : i32 to index
    %c0_67 = arith.constant 0 : index
    %110 = vector.load %arg10[%109, %c0_67] : memref<8x128xf32, #tpu.memory_space<vmem>>, vector<1x128xf32>
    %c2_68 = arith.constant 2 : index
    %c0_69 = arith.constant 0 : index
    %111 = vector.load %arg11[%c2_68, %c0_69] : memref<3x128xf32, #tpu.memory_space<vmem>>, vector<1x128xf32>
    tpu.vector_store %arg11[%c2_68, %c0_69], %110 {strides = array<i32>} : memref<3x128xf32, #tpu.memory_space<vmem>>, vector<1x128xf32>,
    %c0_70 = arith.constant 0 : index
    %c0_71 = arith.constant 0 : index
    %112 = vector.load %arg11[%c0_70, %c0_71] : memref<3x128xf32, #tpu.memory_space<vmem>>, vector<3x128xf32>
    %c1_72 = arith.constant 1 : index
    %113 = memref.load %arg2[%c1_72] : memref<3xi32, #tpu.memory_space<smem>>
    %114 = vector.broadcast %113 : i32 to vector<1x3xi32>
    %115 = arith.cmpi slt, %16, %114 : vector<1x3xi32>
    %c0_73 = arith.constant 0 : index
    %c0_74 = arith.constant 0 : index
    %116 = vector.load %arg4[%c0_73, %c0_74] : memref<128x768xf32, #tpu.memory_space<vmem>>, vector<128x768xf32>
    %cst_75 = arith.constant dense<0.000000e+00> : vector<3x768xf32>
    %117 = tpu.matmul %112, %116, %cst_75 {dimension_numbers = #tpu.dot_dimension_numbers<[1], [0], [0], [1], [0, 0, 1, 1], [], []>} : vector<3x128xf32>, vector<128x768xf32>, vector<3x768xf32> -> vector<3x768xf32>
    %c1_76 = arith.constant 1 : index
    %c0_77 = arith.constant 0 : index
    %118 = vector.load %arg3[%c1_76, %c0_77] : memref<3x384xf32, #tpu.memory_space<vmem>>, vector<1x384xf32>
    %119 = vector.extract_strided_slice %118 {offsets = [0, 0], sizes = [1, 128], strides = [1, 1]} : vector<1x384xf32> to vector<1x128xf32>
    %120 = vector.extract_strided_slice %117 {offsets = [0, 0], sizes = [3, 128], strides = [1, 1]} : vector<3x768xf32> to vector<3x128xf32>
    %121 = vector.extract_strided_slice %117 {offsets = [0, 384], sizes = [3, 128], strides = [1, 1]} : vector<3x768xf32> to vector<3x128xf32>
    %cst_78 = arith.constant dense<0.000000e+00> : vector<1x3xf32>
    %122 = tpu.matmul %119, %120, %cst_78 {dimension_numbers = #tpu.dot_dimension_numbers<[1], [1], [0], [0], [0, 0, 1, 0], [], []>} : vector<1x128xf32>, vector<3x128xf32>, vector<1x3xf32> -> vector<1x3xf32>
    %cst_79 = arith.constant -1.000000e+30 : f32
    %123 = vector.broadcast %cst_79 : f32 to vector<1x3xf32>
    %124 = arith.select %115, %122, %123 : vector<1x3xi1>, vector<1x3xf32>
    %cst_80 = arith.constant dense<0xFF800000> : vector<1xf32>
    %125 = vector.multi_reduction <maximumf>, %124, %cst_80 [1] : vector<1x3xf32> to vector<1xf32>
    %126 = vector.shape_cast %125 : vector<1xf32> to vector<1x1xf32>
    %127 = vector.broadcast %126 : vector<1x1xf32> to vector<1x3xf32>
    %128 = arith.subf %124, %127 : vector<1x3xf32>
    %129 = math.exp %128 : vector<1x3xf32>
    %cst_81 = arith.constant dense<0.000000e+00> : vector<1xf32>
    %130 = vector.multi_reduction <add>, %129, %cst_81 [1] : vector<1x3xf32> to vector<1xf32>
    %131 = vector.shape_cast %130 : vector<1xf32> to vector<1x1xf32>
    %132 = vector.broadcast %131 : vector<1x1xf32> to vector<1x3xf32>
    %133 = arith.divf %129, %132 : vector<1x3xf32>
    %cst_82 = arith.constant dense<0.000000e+00> : vector<1x128xf32>
    %134 = tpu.matmul %133, %121, %cst_82 {dimension_numbers = #tpu.dot_dimension_numbers<[1], [0], [0], [1], [0, 0, 1, 1], [], []>} : vector<1x3xf32>, vector<3x128xf32>, vector<1x128xf32> -> vector<1x128xf32>
    %135 = vector.extract_strided_slice %118 {offsets = [0, 128], sizes = [1, 128], strides = [1, 1]} : vector<1x384xf32> to vector<1x128xf32>
    %136 = vector.extract_strided_slice %117 {offsets = [0, 128], sizes = [3, 128], strides = [1, 1]} : vector<3x768xf32> to vector<3x128xf32>
    %137 = vector.extract_strided_slice %117 {offsets = [0, 512], sizes = [3, 128], strides = [1, 1]} : vector<3x768xf32> to vector<3x128xf32>
    %cst_83 = arith.constant dense<0.000000e+00> : vector<1x3xf32>
    %138 = tpu.matmul %135, %136, %cst_83 {dimension_numbers = #tpu.dot_dimension_numbers<[1], [1], [0], [0], [0, 0, 1, 0], [], []>} : vector<1x128xf32>, vector<3x128xf32>, vector<1x3xf32> -> vector<1x3xf32>
    %cst_84 = arith.constant -1.000000e+30 : f32
    %139 = vector.broadcast %cst_84 : f32 to vector<1x3xf32>
    %140 = arith.select %115, %138, %139 : vector<1x3xi1>, vector<1x3xf32>
    %cst_85 = arith.constant dense<0xFF800000> : vector<1xf32>
    %141 = vector.multi_reduction <maximumf>, %140, %cst_85 [1] : vector<1x3xf32> to vector<1xf32>
    %142 = vector.shape_cast %141 : vector<1xf32> to vector<1x1xf32>
    %143 = vector.broadcast %142 : vector<1x1xf32> to vector<1x3xf32>
    %144 = arith.subf %140, %143 : vector<1x3xf32>
    %145 = math.exp %144 : vector<1x3xf32>
    %cst_86 = arith.constant dense<0.000000e+00> : vector<1xf32>
    %146 = vector.multi_reduction <add>, %145, %cst_86 [1] : vector<1x3xf32> to vector<1xf32>
    %147 = vector.shape_cast %146 : vector<1xf32> to vector<1x1xf32>
    %148 = vector.broadcast %147 : vector<1x1xf32> to vector<1x3xf32>
    %149 = arith.divf %145, %148 : vector<1x3xf32>
    %cst_87 = arith.constant dense<0.000000e+00> : vector<1x128xf32>
    %150 = tpu.matmul %149, %137, %cst_87 {dimension_numbers = #tpu.dot_dimension_numbers<[1], [0], [0], [1], [0, 0, 1, 1], [], []>} : vector<1x3xf32>, vector<3x128xf32>, vector<1x128xf32> -> vector<1x128xf32>
    %151 = vector.extract_strided_slice %118 {offsets = [0, 256], sizes = [1, 128], strides = [1, 1]} : vector<1x384xf32> to vector<1x128xf32>
    %152 = vector.extract_strided_slice %117 {offsets = [0, 256], sizes = [3, 128], strides = [1, 1]} : vector<3x768xf32> to vector<3x128xf32>
    %153 = vector.extract_strided_slice %117 {offsets = [0, 640], sizes = [3, 128], strides = [1, 1]} : vector<3x768xf32> to vector<3x128xf32>
    %cst_88 = arith.constant dense<0.000000e+00> : vector<1x3xf32>
    %154 = tpu.matmul %151, %152, %cst_88 {dimension_numbers = #tpu.dot_dimension_numbers<[1], [1], [0], [0], [0, 0, 1, 0], [], []>} : vector<1x128xf32>, vector<3x128xf32>, vector<1x3xf32> -> vector<1x3xf32>
    %cst_89 = arith.constant -1.000000e+30 : f32
    %155 = vector.broadcast %cst_89 : f32 to vector<1x3xf32>
    %156 = arith.select %115, %154, %155 : vector<1x3xi1>, vector<1x3xf32>
    %cst_90 = arith.constant dense<0xFF800000> : vector<1xf32>
    %157 = vector.multi_reduction <maximumf>, %156, %cst_90 [1] : vector<1x3xf32> to vector<1xf32>
    %158 = vector.shape_cast %157 : vector<1xf32> to vector<1x1xf32>
    %159 = vector.broadcast %158 : vector<1x1xf32> to vector<1x3xf32>
    %160 = arith.subf %156, %159 : vector<1x3xf32>
    %161 = math.exp %160 : vector<1x3xf32>
    %cst_91 = arith.constant dense<0.000000e+00> : vector<1xf32>
    %162 = vector.multi_reduction <add>, %161, %cst_91 [1] : vector<1x3xf32> to vector<1xf32>
    %163 = vector.shape_cast %162 : vector<1xf32> to vector<1x1xf32>
    %164 = vector.broadcast %163 : vector<1x1xf32> to vector<1x3xf32>
    %165 = arith.divf %161, %164 : vector<1x3xf32>
    %cst_92 = arith.constant dense<0.000000e+00> : vector<1x128xf32>
    %166 = tpu.matmul %165, %153, %cst_92 {dimension_numbers = #tpu.dot_dimension_numbers<[1], [0], [0], [1], [0, 0, 1, 1], [], []>} : vector<1x3xf32>, vector<3x128xf32>, vector<1x128xf32> -> vector<1x128xf32>
    %167 = tpu.concatenate %134, %150, %166 in 1 : vector<1x128xf32>, vector<1x128xf32>, vector<1x128xf32> -> vector<1x384xf32>
    %c0_93 = arith.constant 0 : index
    %c0_94 = arith.constant 0 : index
    %168 = vector.load %arg5[%c0_93, %c0_94] : memref<384x256xf32, #tpu.memory_space<vmem>>, vector<384x256xf32>
    %cst_95 = arith.constant dense<0.000000e+00> : vector<1x256xf32>
    %169 = tpu.matmul %167, %168, %cst_95 {dimension_numbers = #tpu.dot_dimension_numbers<[1], [0], [0], [1], [0, 0, 1, 1], [], []>} : vector<1x384xf32>, vector<384x256xf32>, vector<1x256xf32> -> vector<1x256xf32>
    %170 = arith.negf %169 : vector<1x256xf32>
    %171 = math.exp %170 : vector<1x256xf32>
    %cst_96 = arith.constant 1.000000e+00 : f32
    %172 = vector.broadcast %cst_96 : f32 to vector<1x256xf32>
    %173 = arith.addf %172, %171 : vector<1x256xf32>
    %174 = arith.divf %172, %173 : vector<1x256xf32>
    %c0_97 = arith.constant 0 : index
    %c0_98 = arith.constant 0 : index
    %175 = vector.load %arg6[%c0_97, %c0_98] : memref<256x128xf32, #tpu.memory_space<vmem>>, vector<256x128xf32>
    %cst_99 = arith.constant dense<0.000000e+00> : vector<1x128xf32>
    %176 = tpu.matmul %174, %175, %cst_99 {dimension_numbers = #tpu.dot_dimension_numbers<[1], [0], [0], [1], [0, 0, 1, 1], [], []>} : vector<1x256xf32>, vector<256x128xf32>, vector<1x128xf32> -> vector<1x128xf32>
    %177 = arith.negf %176 : vector<1x128xf32>
    %178 = math.exp %177 : vector<1x128xf32>
    %cst_100 = arith.constant 1.000000e+00 : f32
    %179 = vector.broadcast %cst_100 : f32 to vector<1x128xf32>
    %180 = arith.addf %179, %178 : vector<1x128xf32>
    %181 = arith.divf %179, %180 : vector<1x128xf32>
    %c2_101 = arith.constant 2 : index
    %c0_102 = arith.constant 0 : index
    %182 = vector.load %arg10[%c2_101, %c0_102] : memref<8x128xf32, #tpu.memory_space<vmem>>, vector<1x128xf32>
    tpu.vector_store %arg10[%c2_101, %c0_102], %181 {strides = array<i32>} : memref<8x128xf32, #tpu.memory_space<vmem>>, vector<1x128xf32>,
    %c2_103 = arith.constant 2 : index
    %c0_104 = arith.constant 0 : index
    %183 = memref.load %arg1[%c2_103, %c0_104] : memref<3x3xi32, #tpu.memory_space<smem>>
    %184 = arith.index_cast %183 : i32 to index
    %c0_105 = arith.constant 0 : index
    %185 = vector.load %arg10[%184, %c0_105] : memref<8x128xf32, #tpu.memory_space<vmem>>, vector<1x128xf32>
    %c0_106 = arith.constant 0 : index
    %c0_107 = arith.constant 0 : index
    %186 = vector.load %arg11[%c0_106, %c0_107] : memref<3x128xf32, #tpu.memory_space<vmem>>, vector<1x128xf32>
    tpu.vector_store %arg11[%c0_106, %c0_107], %185 {strides = array<i32>} : memref<3x128xf32, #tpu.memory_space<vmem>>, vector<1x128xf32>,
    %c2_108 = arith.constant 2 : index
    %c1_109 = arith.constant 1 : index
    %187 = memref.load %arg1[%c2_108, %c1_109] : memref<3x3xi32, #tpu.memory_space<smem>>
    %188 = arith.index_cast %187 : i32 to index
    %c0_110 = arith.constant 0 : index
    %189 = vector.load %arg10[%188, %c0_110] : memref<8x128xf32, #tpu.memory_space<vmem>>, vector<1x128xf32>
    %c1_111 = arith.constant 1 : index
    %c0_112 = arith.constant 0 : index
    %190 = vector.load %arg11[%c1_111, %c0_112] : memref<3x128xf32, #tpu.memory_space<vmem>>, vector<1x128xf32>
    tpu.vector_store %arg11[%c1_111, %c0_112], %189 {strides = array<i32>} : memref<3x128xf32, #tpu.memory_space<vmem>>, vector<1x128xf32>,
    %c2_113 = arith.constant 2 : index
    %c2_114 = arith.constant 2 : index
    %191 = memref.load %arg1[%c2_113, %c2_114] : memref<3x3xi32, #tpu.memory_space<smem>>
    %192 = arith.index_cast %191 : i32 to index
    %c0_115 = arith.constant 0 : index
    %193 = vector.load %arg10[%192, %c0_115] : memref<8x128xf32, #tpu.memory_space<vmem>>, vector<1x128xf32>
    %c2_116 = arith.constant 2 : index
    %c0_117 = arith.constant 0 : index
    %194 = vector.load %arg11[%c2_116, %c0_117] : memref<3x128xf32, #tpu.memory_space<vmem>>, vector<1x128xf32>
    tpu.vector_store %arg11[%c2_116, %c0_117], %193 {strides = array<i32>} : memref<3x128xf32, #tpu.memory_space<vmem>>, vector<1x128xf32>,
    %c0_118 = arith.constant 0 : index
    %c0_119 = arith.constant 0 : index
    %195 = vector.load %arg11[%c0_118, %c0_119] : memref<3x128xf32, #tpu.memory_space<vmem>>, vector<3x128xf32>
    %c2_120 = arith.constant 2 : index
    %196 = memref.load %arg2[%c2_120] : memref<3xi32, #tpu.memory_space<smem>>
    %197 = vector.broadcast %196 : i32 to vector<1x3xi32>
    %198 = arith.cmpi slt, %16, %197 : vector<1x3xi32>
    %c0_121 = arith.constant 0 : index
    %c0_122 = arith.constant 0 : index
    %199 = vector.load %arg4[%c0_121, %c0_122] : memref<128x768xf32, #tpu.memory_space<vmem>>, vector<128x768xf32>
    %cst_123 = arith.constant dense<0.000000e+00> : vector<3x768xf32>
    %200 = tpu.matmul %195, %199, %cst_123 {dimension_numbers = #tpu.dot_dimension_numbers<[1], [0], [0], [1], [0, 0, 1, 1], [], []>} : vector<3x128xf32>, vector<128x768xf32>, vector<3x768xf32> -> vector<3x768xf32>
    %c2_124 = arith.constant 2 : index
    %c0_125 = arith.constant 0 : index
    %201 = vector.load %arg3[%c2_124, %c0_125] : memref<3x384xf32, #tpu.memory_space<vmem>>, vector<1x384xf32>
    %202 = vector.extract_strided_slice %201 {offsets = [0, 0], sizes = [1, 128], strides = [1, 1]} : vector<1x384xf32> to vector<1x128xf32>
    %203 = vector.extract_strided_slice %200 {offsets = [0, 0], sizes = [3, 128], strides = [1, 1]} : vector<3x768xf32> to vector<3x128xf32>
    %204 = vector.extract_strided_slice %200 {offsets = [0, 384], sizes = [3, 128], strides = [1, 1]} : vector<3x768xf32> to vector<3x128xf32>
    %cst_126 = arith.constant dense<0.000000e+00> : vector<1x3xf32>
    %205 = tpu.matmul %202, %203, %cst_126 {dimension_numbers = #tpu.dot_dimension_numbers<[1], [1], [0], [0], [0, 0, 1, 0], [], []>} : vector<1x128xf32>, vector<3x128xf32>, vector<1x3xf32> -> vector<1x3xf32>
    %cst_127 = arith.constant -1.000000e+30 : f32
    %206 = vector.broadcast %cst_127 : f32 to vector<1x3xf32>
    %207 = arith.select %198, %205, %206 : vector<1x3xi1>, vector<1x3xf32>
    %cst_128 = arith.constant dense<0xFF800000> : vector<1xf32>
    %208 = vector.multi_reduction <maximumf>, %207, %cst_128 [1] : vector<1x3xf32> to vector<1xf32>
    %209 = vector.shape_cast %208 : vector<1xf32> to vector<1x1xf32>
    %210 = vector.broadcast %209 : vector<1x1xf32> to vector<1x3xf32>
    %211 = arith.subf %207, %210 : vector<1x3xf32>
    %212 = math.exp %211 : vector<1x3xf32>
    %cst_129 = arith.constant dense<0.000000e+00> : vector<1xf32>
    %213 = vector.multi_reduction <add>, %212, %cst_129 [1] : vector<1x3xf32> to vector<1xf32>
    %214 = vector.shape_cast %213 : vector<1xf32> to vector<1x1xf32>
    %215 = vector.broadcast %214 : vector<1x1xf32> to vector<1x3xf32>
    %216 = arith.divf %212, %215 : vector<1x3xf32>
    %cst_130 = arith.constant dense<0.000000e+00> : vector<1x128xf32>
    %217 = tpu.matmul %216, %204, %cst_130 {dimension_numbers = #tpu.dot_dimension_numbers<[1], [0], [0], [1], [0, 0, 1, 1], [], []>} : vector<1x3xf32>, vector<3x128xf32>, vector<1x128xf32> -> vector<1x128xf32>
    %218 = vector.extract_strided_slice %201 {offsets = [0, 128], sizes = [1, 128], strides = [1, 1]} : vector<1x384xf32> to vector<1x128xf32>
    %219 = vector.extract_strided_slice %200 {offsets = [0, 128], sizes = [3, 128], strides = [1, 1]} : vector<3x768xf32> to vector<3x128xf32>
    %220 = vector.extract_strided_slice %200 {offsets = [0, 512], sizes = [3, 128], strides = [1, 1]} : vector<3x768xf32> to vector<3x128xf32>
    %cst_131 = arith.constant dense<0.000000e+00> : vector<1x3xf32>
    %221 = tpu.matmul %218, %219, %cst_131 {dimension_numbers = #tpu.dot_dimension_numbers<[1], [1], [0], [0], [0, 0, 1, 0], [], []>} : vector<1x128xf32>, vector<3x128xf32>, vector<1x3xf32> -> vector<1x3xf32>
    %cst_132 = arith.constant -1.000000e+30 : f32
    %222 = vector.broadcast %cst_132 : f32 to vector<1x3xf32>
    %223 = arith.select %198, %221, %222 : vector<1x3xi1>, vector<1x3xf32>
    %cst_133 = arith.constant dense<0xFF800000> : vector<1xf32>
    %224 = vector.multi_reduction <maximumf>, %223, %cst_133 [1] : vector<1x3xf32> to vector<1xf32>
    %225 = vector.shape_cast %224 : vector<1xf32> to vector<1x1xf32>
    %226 = vector.broadcast %225 : vector<1x1xf32> to vector<1x3xf32>
    %227 = arith.subf %223, %226 : vector<1x3xf32>
    %228 = math.exp %227 : vector<1x3xf32>
    %cst_134 = arith.constant dense<0.000000e+00> : vector<1xf32>
    %229 = vector.multi_reduction <add>, %228, %cst_134 [1] : vector<1x3xf32> to vector<1xf32>
    %230 = vector.shape_cast %229 : vector<1xf32> to vector<1x1xf32>
    %231 = vector.broadcast %230 : vector<1x1xf32> to vector<1x3xf32>
    %232 = arith.divf %228, %231 : vector<1x3xf32>
    %cst_135 = arith.constant dense<0.000000e+00> : vector<1x128xf32>
    %233 = tpu.matmul %232, %220, %cst_135 {dimension_numbers = #tpu.dot_dimension_numbers<[1], [0], [0], [1], [0, 0, 1, 1], [], []>} : vector<1x3xf32>, vector<3x128xf32>, vector<1x128xf32> -> vector<1x128xf32>
    %234 = vector.extract_strided_slice %201 {offsets = [0, 256], sizes = [1, 128], strides = [1, 1]} : vector<1x384xf32> to vector<1x128xf32>
    %235 = vector.extract_strided_slice %200 {offsets = [0, 256], sizes = [3, 128], strides = [1, 1]} : vector<3x768xf32> to vector<3x128xf32>
    %236 = vector.extract_strided_slice %200 {offsets = [0, 640], sizes = [3, 128], strides = [1, 1]} : vector<3x768xf32> to vector<3x128xf32>
    %cst_136 = arith.constant dense<0.000000e+00> : vector<1x3xf32>
    %237 = tpu.matmul %234, %235, %cst_136 {dimension_numbers = #tpu.dot_dimension_numbers<[1], [1], [0], [0], [0, 0, 1, 0], [], []>} : vector<1x128xf32>, vector<3x128xf32>, vector<1x3xf32> -> vector<1x3xf32>
    %cst_137 = arith.constant -1.000000e+30 : f32
    %238 = vector.broadcast %cst_137 : f32 to vector<1x3xf32>
    %239 = arith.select %198, %237, %238 : vector<1x3xi1>, vector<1x3xf32>
    %cst_138 = arith.constant dense<0xFF800000> : vector<1xf32>
    %240 = vector.multi_reduction <maximumf>, %239, %cst_138 [1] : vector<1x3xf32> to vector<1xf32>
    %241 = vector.shape_cast %240 : vector<1xf32> to vector<1x1xf32>
    %242 = vector.broadcast %241 : vector<1x1xf32> to vector<1x3xf32>
    %243 = arith.subf %239, %242 : vector<1x3xf32>
    %244 = math.exp %243 : vector<1x3xf32>
    %cst_139 = arith.constant dense<0.000000e+00> : vector<1xf32>
    %245 = vector.multi_reduction <add>, %244, %cst_139 [1] : vector<1x3xf32> to vector<1xf32>
    %246 = vector.shape_cast %245 : vector<1xf32> to vector<1x1xf32>
    %247 = vector.broadcast %246 : vector<1x1xf32> to vector<1x3xf32>
    %248 = arith.divf %244, %247 : vector<1x3xf32>
    %cst_140 = arith.constant dense<0.000000e+00> : vector<1x128xf32>
    %249 = tpu.matmul %248, %236, %cst_140 {dimension_numbers = #tpu.dot_dimension_numbers<[1], [0], [0], [1], [0, 0, 1, 1], [], []>} : vector<1x3xf32>, vector<3x128xf32>, vector<1x128xf32> -> vector<1x128xf32>
    %250 = tpu.concatenate %217, %233, %249 in 1 : vector<1x128xf32>, vector<1x128xf32>, vector<1x128xf32> -> vector<1x384xf32>
    %c0_141 = arith.constant 0 : index
    %c0_142 = arith.constant 0 : index
    %251 = vector.load %arg5[%c0_141, %c0_142] : memref<384x256xf32, #tpu.memory_space<vmem>>, vector<384x256xf32>
    %cst_143 = arith.constant dense<0.000000e+00> : vector<1x256xf32>
    %252 = tpu.matmul %250, %251, %cst_143 {dimension_numbers = #tpu.dot_dimension_numbers<[1], [0], [0], [1], [0, 0, 1, 1], [], []>} : vector<1x384xf32>, vector<384x256xf32>, vector<1x256xf32> -> vector<1x256xf32>
    %253 = arith.negf %252 : vector<1x256xf32>
    %254 = math.exp %253 : vector<1x256xf32>
    %cst_144 = arith.constant 1.000000e+00 : f32
    %255 = vector.broadcast %cst_144 : f32 to vector<1x256xf32>
    %256 = arith.addf %255, %254 : vector<1x256xf32>
    %257 = arith.divf %255, %256 : vector<1x256xf32>
    %c0_145 = arith.constant 0 : index
    %c0_146 = arith.constant 0 : index
    %258 = vector.load %arg6[%c0_145, %c0_146] : memref<256x128xf32, #tpu.memory_space<vmem>>, vector<256x128xf32>
    %cst_147 = arith.constant dense<0.000000e+00> : vector<1x128xf32>
    %259 = tpu.matmul %257, %258, %cst_147 {dimension_numbers = #tpu.dot_dimension_numbers<[1], [0], [0], [1], [0, 0, 1, 1], [], []>} : vector<1x256xf32>, vector<256x128xf32>, vector<1x128xf32> -> vector<1x128xf32>
    %260 = arith.negf %259 : vector<1x128xf32>
    %261 = math.exp %260 : vector<1x128xf32>
    %cst_148 = arith.constant 1.000000e+00 : f32
    %262 = vector.broadcast %cst_148 : f32 to vector<1x128xf32>
    %263 = arith.addf %262, %261 : vector<1x128xf32>
    %264 = arith.divf %262, %263 : vector<1x128xf32>
    %c3 = arith.constant 3 : index
    %c0_149 = arith.constant 0 : index
    %265 = vector.load %arg10[%c3, %c0_149] : memref<8x128xf32, #tpu.memory_space<vmem>>, vector<1x128xf32>
    tpu.vector_store %arg10[%c3, %c0_149], %264 {strides = array<i32>} : memref<8x128xf32, #tpu.memory_space<vmem>>, vector<1x128xf32>,
    %c3_150 = arith.constant 3 : index
    %c0_151 = arith.constant 0 : index
    %266 = vector.load %arg10[%c3_150, %c0_151] : memref<8x128xf32, #tpu.memory_space<vmem>>, vector<1x128xf32>
    %c0_152 = arith.constant 0 : index
    %c0_153 = arith.constant 0 : index
    %267 = vector.load %arg7[%c0_152, %c0_153] : memref<128x128xf32, #tpu.memory_space<vmem>>, vector<128x128xf32>
    %cst_154 = arith.constant dense<0.000000e+00> : vector<1x128xf32>
    %268 = tpu.matmul %266, %267, %cst_154 {dimension_numbers = #tpu.dot_dimension_numbers<[1], [0], [0], [1], [0, 0, 1, 1], [], []>} : vector<1x128xf32>, vector<128x128xf32>, vector<1x128xf32> -> vector<1x128xf32>
    %c0_155 = arith.constant 0 : index
    %c0_156 = arith.constant 0 : index
    %269 = vector.load %arg8[%c0_155, %c0_156] : memref<1x128xf32, #tpu.memory_space<vmem>>, vector<1x128xf32>
    %270 = arith.addf %268, %269 : vector<1x128xf32>
    %cst_157 = arith.constant dense<0xFF800000> : vector<1xf32>
    %271 = vector.multi_reduction <maximumf>, %270, %cst_157 [1] : vector<1x128xf32> to vector<1xf32>
    %272 = vector.shape_cast %271 : vector<1xf32> to vector<1x1xf32>
    %273 = vector.broadcast %272 : vector<1x1xf32> to vector<1x128xf32>
    %274 = arith.subf %270, %273 : vector<1x128xf32>
    %275 = math.exp %274 : vector<1x128xf32>
    %cst_158 = arith.constant dense<0.000000e+00> : vector<1xf32>
    %276 = vector.multi_reduction <add>, %275, %cst_158 [1] : vector<1x128xf32> to vector<1xf32>
    %277 = vector.shape_cast %276 : vector<1xf32> to vector<1x1xf32>
    %278 = vector.broadcast %277 : vector<1x1xf32> to vector<1x128xf32>
    %279 = arith.divf %275, %278 : vector<1x128xf32>
    %c0_159 = arith.constant 0 : index
    %c0_160 = arith.constant 0 : index
    %280 = vector.load %arg9[%c0_159, %c0_160] : memref<1x128xf32, #tpu.memory_space<vmem>>, vector<1x128xf32>
    tpu.vector_store %arg9[%c0_159, %c0_160], %279 {strides = array<i32>} : memref<1x128xf32, #tpu.memory_space<vmem>>, vector<1x128xf32>,
    return
  }
  func.func @transform_0(%arg0: i32, %arg1: memref<3x3xi32, #tpu.memory_space<smem>>, %arg2: memref<3xi32, #tpu.memory_space<smem>>) -> (i32, i32) {
    %c0_i32 = arith.constant 0 : i32
    %c0_i32_0 = arith.constant 0 : i32
    %c0_i32_1 = arith.constant 0 : i32
    return %c0_i32, %c0_i32_0 : i32, i32
  }
  func.func @transform_1(%arg0: i32, %arg1: memref<3x3xi32, #tpu.memory_space<smem>>, %arg2: memref<3xi32, #tpu.memory_space<smem>>) -> (i32, i32) {
    %c0_i32 = arith.constant 0 : i32
    %c0_i32_0 = arith.constant 0 : i32
    %c0_i32_1 = arith.constant 0 : i32
    return %c0_i32, %c0_i32_0 : i32, i32
  }
  func.func @transform_2(%arg0: i32, %arg1: memref<3x3xi32, #tpu.memory_space<smem>>, %arg2: memref<3xi32, #tpu.memory_space<smem>>) -> (i32, i32) {
    %c0_i32 = arith.constant 0 : i32
    %c0_i32_0 = arith.constant 0 : i32
    %c0_i32_1 = arith.constant 0 : i32
    return %c0_i32, %c0_i32_0 : i32, i32
  }
  func.func @transform_3(%arg0: i32, %arg1: memref<3x3xi32, #tpu.memory_space<smem>>, %arg2: memref<3xi32, #tpu.memory_space<smem>>) -> (i32, i32) {
    %c0_i32 = arith.constant 0 : i32
    %c0_i32_0 = arith.constant 0 : i32
    %c0_i32_1 = arith.constant 0 : i32
    return %c0_i32, %c0_i32_0 : i32, i32
  }
  func.func @transform_4(%arg0: i32, %arg1: memref<3x3xi32, #tpu.memory_space<smem>>, %arg2: memref<3xi32, #tpu.memory_space<smem>>) -> (i32, i32) {
    %c0_i32 = arith.constant 0 : i32
    %c0_i32_0 = arith.constant 0 : i32
    %c0_i32_1 = arith.constant 0 : i32
    return %c0_i32, %c0_i32_0 : i32, i32
  }
  func.func @transform_5(%arg0: i32, %arg1: memref<3x3xi32, #tpu.memory_space<smem>>, %arg2: memref<3xi32, #tpu.memory_space<smem>>) -> (i32, i32) {
    %c0_i32 = arith.constant 0 : i32
    %c0_i32_0 = arith.constant 0 : i32
    %c0_i32_1 = arith.constant 0 : i32
    return %c0_i32, %c0_i32_0 : i32, i32
  }
  func.func @transform_6(%arg0: i32, %arg1: memref<3x3xi32, #tpu.memory_space<smem>>, %arg2: memref<3xi32, #tpu.memory_space<smem>>) -> (i32, i32) {
    %c0_i32 = arith.constant 0 : i32
    %c0_i32_0 = arith.constant 0 : i32
    %c0_i32_1 = arith.constant 0 : i32
    return %c0_i32, %c0_i32_0 : i32, i32
  }
}

</mosaic_0001>

<llo_original>
// kernel: multi_attention_fcn_forward.1
$region0: #{multi_attention_fcn_forward.1}
  #allocation0 [shape = 'u32[]', space=smem, size = 0x4, offset = 0x4, fixed_abs, tag = 'smem constant byte address 0x4 - core index']
  #allocation1 [shape = 'u32[144,128]{1,0:T(1,128)}', space=vmem, size = 0x12000, scoped, tag = 'internal scratch']
  #allocation2 [shape = 'f32[8,128]{1,0:T(8,128)}', space=vmem, size = 0x1000, scoped, tag = 'scratch operand']
  #allocation3 [shape = 'f32[3,128]{1,0:T(4,128)}', space=vmem, size = 0x800, scoped, tag = 'scratch operand']
  #allocation4 [shape = 's32[1]{0}', space=sflag, size = 0x4, scoped, tag = 'scoped memory for multi_attention_fcn_forward.1']
  #allocation5 [shape = 'u8[2048]{0}', space=smem, size = 0x800, scoped, tag = 'prefetched SMEM operand 0']
  #allocation6 [shape = 'u8[512]{0}', space=smem, size = 0x200, scoped, tag = 'prefetched SMEM operand 1']
  %s0 = inlined_call_operand.vmem [shape: s32[3,3], index: 0, kind: input, shape index: {}]
  %s1 = inlined_call_operand.vmem [shape: s32[3], index: 1, kind: input, shape index: {}]
  %s2 = inlined_call_operand.vmem [shape: f32[3,384], index: 2, kind: input, shape index: {}]
  %s3 = inlined_call_operand.vmem [shape: f32[128,768], index: 3, kind: input, shape index: {}]
  %s4 = inlined_call_operand.vmem [shape: f32[384,256], index: 4, kind: input, shape index: {}]
  %s5 = inlined_call_operand.vmem [shape: f32[256,128], index: 5, kind: input, shape index: {}]
  %s6 = inlined_call_operand.vmem [shape: f32[128,128], index: 6, kind: input, shape index: {}]
  %s7 = inlined_call_operand.vmem [shape: f32[1,128], index: 7, kind: input, shape index: {}]
  %s8 = inlined_call_operand.vmem [shape: f32[1,128], index: 8, kind: output, shape index: {}]
  %s9 = sld [smem:[#allocation0]]
  $region34: #{multi_attention_fcn_forward.1} parent=0
    _
  %s11 = ssub.s32 1, %s9
  %s12 = scalar_select 0, %s11, %s9
  %s13 = sshll.u32 %s0, 4
  %s14 = int_to_ptr.vmem [resolvable:$true] %s13
  %16 = dma.vmem_to_smem %s14, 64, [#allocation5], [#allocation4]
  %s17 = sshll.u32 %s1, 4
  %s18 = int_to_ptr.vmem [resolvable:$true] %s17
  %20 = dma.vmem_to_smem %s18, 16, [#allocation6], [#allocation4]
  %21 = dma.done [#allocation4], 80
  %22 = sfence
  // Predicated region
  $region2: #{multi_attention_fcn_forward.1} parent=0 // pred_check
    _
  $region3: #{multi_attention_fcn_forward.1} parent=0 // pred_check_branch
    %24 = sbr.rel (0) target = $region5
  $region4: #{multi_attention_fcn_forward.1} parent=0 // pred_region
    _
  $region5: #{multi_attention_fcn_forward.1} parent=0 // pred_fallthru
    _
  // Predicated region
  $region6: #{multi_attention_fcn_forward.1} parent=0 // pred_check
    _
  $region7: #{multi_attention_fcn_forward.1} parent=0 // pred_check_branch
    %26 = sbr.rel (0) target = $region9
  $region8: #{multi_attention_fcn_forward.1} parent=0 // pred_region
    _
  $region9: #{multi_attention_fcn_forward.1} parent=0 // pred_fallthru
    _
  // Predicated region
  $region10: #{multi_attention_fcn_forward.1} parent=0 // pred_check
    _
  $region11: #{multi_attention_fcn_forward.1} parent=0 // pred_check_branch
    %28 = sbr.rel (0) target = $region13
  $region12: #{multi_attention_fcn_forward.1} parent=0 // pred_region
    _
  $region13: #{multi_attention_fcn_forward.1} parent=0 // pred_fallthru
    _
  // Predicated region
  $region14: #{multi_attention_fcn_forward.1} parent=0 // pred_check
    _
  $region15: #{multi_attention_fcn_forward.1} parent=0 // pred_check_branch
    %30 = sbr.rel (0) target = $region17
  $region16: #{multi_attention_fcn_forward.1} parent=0 // pred_region
    _
  $region17: #{multi_attention_fcn_forward.1} parent=0 // pred_fallthru
    _
  // Predicated region
  $region18: #{multi_attention_fcn_forward.1} parent=0 // pred_check
    _
  $region19: #{multi_attention_fcn_forward.1} parent=0 // pred_check_branch
    %32 = sbr.rel (0) target = $region21
  $region20: #{multi_attention_fcn_forward.1} parent=0 // pred_region
    _
  $region21: #{multi_attention_fcn_forward.1} parent=0 // pred_fallthru
    _
  // Predicated region
  $region22: #{multi_attention_fcn_forward.1} parent=0 // pred_check
    _
  $region23: #{multi_attention_fcn_forward.1} parent=0 // pred_check_branch
    %34 = sbr.rel (0) target = $region25
  $region24: #{multi_attention_fcn_forward.1} parent=0 // pred_region
    _
  $region25: #{multi_attention_fcn_forward.1} parent=0 // pred_fallthru
    _
  %v35 = vld [vmem:[%s4] sm:$0xff]
  %v36 = vld [vmem:[%s4 + $0x8] sm:$0xff]
  %v37 = vld [vmem:[%s4 + $0x10] sm:$0xff]
  %v38 = vld [vmem:[%s4 + $0x18] sm:$0xff]
  %v39 = vld [vmem:[%s4 + $0x20] sm:$0xff]
  %v40 = vld [vmem:[%s4 + $0x28] sm:$0xff]
  %v41 = vld [vmem:[%s4 + $0x30] sm:$0xff]
  %v42 = vld [vmem:[%s4 + $0x38] sm:$0xff]
  %v43 = vld [vmem:[%s4 + $0x40] sm:$0xff]
  %v44 = vld [vmem:[%s4 + $0x48] sm:$0xff]
  %v45 = vld [vmem:[%s4 + $0x50] sm:$0xff]
  %v46 = vld [vmem:[%s4 + $0x58] sm:$0xff]
  %v47 = vld [vmem:[%s4 + $0x60] sm:$0xff]
  %v48 = vld [vmem:[%s4 + $0x68] sm:$0xff]
  %v49 = vld [vmem:[%s4 + $0x70] sm:$0xff]
  %v50 = vld [vmem:[%s4 + $0x78] sm:$0xff]
  %v51 = vld [vmem:[%s4 + $0x80] sm:$0xff]
  %v52 = vld [vmem:[%s4 + $0x88] sm:$0xff]
  %v53 = vld [vmem:[%s4 + $0x90] sm:$0xff]
  %v54 = vld [vmem:[%s4 + $0x98] sm:$0xff]
  %v55 = vld [vmem:[%s4 + $0xa0] sm:$0xff]
  %v56 = vld [vmem:[%s4 + $0xa8] sm:$0xff]
  %v57 = vld [vmem:[%s4 + $0xb0] sm:$0xff]
  %v58 = vld [vmem:[%s4 + $0xb8] sm:$0xff]
  %v59 = vld [vmem:[%s4 + $0xc0] sm:$0xff]
  %v60 = vld [vmem:[%s4 + $0xc8] sm:$0xff]
  %v61 = vld [vmem:[%s4 + $0xd0] sm:$0xff]
  %v62 = vld [vmem:[%s4 + $0xd8] sm:$0xff]
  %v63 = vld [vmem:[%s4 + $0xe0] sm:$0xff]
  %v64 = vld [vmem:[%s4 + $0xe8] sm:$0xff]
  %v65 = vld [vmem:[%s4 + $0xf0] sm:$0xff]
  %v66 = vld [vmem:[%s4 + $0xf8] sm:$0xff]
  %v67 = vld [vmem:[%s4 + $0x100] sm:$0xff]
  %v68 = vld [vmem:[%s4 + $0x108] sm:$0xff]
  %v69 = vld [vmem:[%s4 + $0x110] sm:$0xff]
  %v70 = vld [vmem:[%s4 + $0x118] sm:$0xff]
  %v71 = vld [vmem:[%s4 + $0x120] sm:$0xff]
  %v72 = vld [vmem:[%s4 + $0x128] sm:$0xff]
  %v73 = vld [vmem:[%s4 + $0x130] sm:$0xff]
  %v74 = vld [vmem:[%s4 + $0x138] sm:$0xff]
  %v75 = vld [vmem:[%s4 + $0x140] sm:$0xff]
  %v76 = vld [vmem:[%s4 + $0x148] sm:$0xff]
  %v77 = vld [vmem:[%s4 + $0x150] sm:$0xff]
  %v78 = vld [vmem:[%s4 + $0x158] sm:$0xff]
  %v79 = vld [vmem:[%s4 + $0x160] sm:$0xff]
  %v80 = vld [vmem:[%s4 + $0x168] sm:$0xff]
  %v81 = vld [vmem:[%s4 + $0x170] sm:$0xff]
  %v82 = vld [vmem:[%s4 + $0x178] sm:$0xff]
  %v83 = vld [vmem:[%s4 + $0x180] sm:$0xff]
  %v84 = vld [vmem:[%s4 + $0x188] sm:$0xff]
  %v85 = vld [vmem:[%s4 + $0x190] sm:$0xff]
  %v86 = vld [vmem:[%s4 + $0x198] sm:$0xff]
  %v87 = vld [vmem:[%s4 + $0x1a0] sm:$0xff]
  %v88 = vld [vmem:[%s4 + $0x1a8] sm:$0xff]
  %v89 = vld [vmem:[%s4 + $0x1b0] sm:$0xff]
  %v90 = vld [vmem:[%s4 + $0x1b8] sm:$0xff]
  %v91 = vld [vmem:[%s4 + $0x1c0] sm:$0xff]
  %v92 = vld [vmem:[%s4 + $0x1c8] sm:$0xff]
  %v93 = vld [vmem:[%s4 + $0x1d0] sm:$0xff]
  %v94 = vld [vmem:[%s4 + $0x1d8] sm:$0xff]
  %v95 = vld [vmem:[%s4 + $0x1e0] sm:$0xff]
  %v96 = vld [vmem:[%s4 + $0x1e8] sm:$0xff]
  %v97 = vld [vmem:[%s4 + $0x1f0] sm:$0xff]
  %v98 = vld [vmem:[%s4 + $0x1f8] sm:$0xff]
  %v99 = vld [vmem:[%s4 + $0x200] sm:$0xff]
  %v100 = vld [vmem:[%s4 + $0x208] sm:$0xff]
  %v101 = vld [vmem:[%s4 + $0x210] sm:$0xff]
  %v102 = vld [vmem:[%s4 + $0x218] sm:$0xff]
  %v103 = vld [vmem:[%s4 + $0x220] sm:$0xff]
  %v104 = vld [vmem:[%s4 + $0x228] sm:$0xff]
  %v105 = vld [vmem:[%s4 + $0x230] sm:$0xff]
  %v106 = vld [vmem:[%s4 + $0x238] sm:$0xff]
  %v107 = vld [vmem:[%s4 + $0x240] sm:$0xff]
  %v108 = vld [vmem:[%s4 + $0x248] sm:$0xff]
  %v109 = vld [vmem:[%s4 + $0x250] sm:$0xff]
  %v110 = vld [vmem:[%s4 + $0x258] sm:$0xff]
  %v111 = vld [vmem:[%s4 + $0x260] sm:$0xff]
  %v112 = vld [vmem:[%s4 + $0x268] sm:$0xff]
  %v113 = vld [vmem:[%s4 + $0x270] sm:$0xff]
  %v114 = vld [vmem:[%s4 + $0x278] sm:$0xff]
  %v115 = vld [vmem:[%s4 + $0x280] sm:$0xff]
  %v116 = vld [vmem:[%s4 + $0x288] sm:$0xff]
  %v117 = vld [vmem:[%s4 + $0x290] sm:$0xff]
  %v118 = vld [vmem:[%s4 + $0x298] sm:$0xff]
  %v119 = vld [vmem:[%s4 + $0x2a0] sm:$0xff]
  %v120 = vld [vmem:[%s4 + $0x2a8] sm:$0xff]
  %v121 = vld [vmem:[%s4 + $0x2b0] sm:$0xff]
  %v122 = vld [vmem:[%s4 + $0x2b8] sm:$0xff]
  %v123 = vld [vmem:[%s4 + $0x2c0] sm:$0xff]
  %v124 = vld [vmem:[%s4 + $0x2c8] sm:$0xff]
  %v125 = vld [vmem:[%s4 + $0x2d0] sm:$0xff]
  %v126 = vld [vmem:[%s4 + $0x2d8] sm:$0xff]
  %v127 = vld [vmem:[%s4 + $0x2e0] sm:$0xff]
  %v128 = vld [vmem:[%s4 + $0x2e8] sm:$0xff]
  %v129 = vld [vmem:[%s4 + $0x2f0] sm:$0xff]
  %v130 = vld [vmem:[%s4 + $0x2f8] sm:$0xff]
  %131 = vmatprep.subr.mxu0 %v66
  %132 = vmatpush1.msra.mxu0 %v65
  %133 = vmatprep.subr.mxu0 %v64
  %134 = vmatpush1.msra.mxu0 %v63
  %135 = vmatprep.subr.mxu0 %v62
  %136 = vmatpush1.msra.mxu0 %v61
  %137 = vmatprep.subr.mxu0 %v60
  %138 = vmatpush1.msra.mxu0 %v59
  %139 = vmatprep.subr.mxu0 %v58
  %140 = vmatpush1.msra.mxu0 %v57
  %141 = vmatprep.subr.mxu0 %v56
  %142 = vmatpush1.msra.mxu0 %v55
  %143 = vmatprep.subr.mxu0 %v54
  %144 = vmatpush1.msra.mxu0 %v53
  %145 = vmatprep.subr.mxu0 %v52
  %146 = vmatpush1.msra.mxu0 %v51
  %147 = vmatprep.subr.mxu0 %v50
  %148 = vmatpush1.msra.mxu0 %v49
  %149 = vmatprep.subr.mxu0 %v48
  %150 = vmatpush1.msra.mxu0 %v47
  %151 = vmatprep.subr.mxu0 %v46
  %152 = vmatpush1.msra.mxu0 %v45
  %153 = vmatprep.subr.mxu0 %v44
  %154 = vmatpush1.msra.mxu0 %v43
  %155 = vmatprep.subr.mxu0 %v42
  %156 = vmatpush1.msra.mxu0 %v41
  %157 = vmatprep.subr.mxu0 %v40
  %158 = vmatpush1.msra.mxu0 %v39
  %159 = vmatprep.subr.mxu0 %v38
  %160 = vmatpush1.msra.mxu0 %v37
  %161 = vmatprep.subr.mxu0 %v36
  %162 = vmatpush1.msra.mxu0 %v35
  %163 = vmatprep.subr.mxu0 %v98
  %164 = vmatpush2.msra.mxu0 %v97
  %165 = vmatprep.subr.mxu0 %v96
  %166 = vmatpush2.msra.mxu0 %v95
  %167 = vmatprep.subr.mxu0 %v94
  %168 = vmatpush2.msra.mxu0 %v93
  %169 = vmatprep.subr.mxu0 %v92
  %170 = vmatpush2.msra.mxu0 %v91
  %171 = vmatprep.subr.mxu0 %v90
  %172 = vmatpush2.msra.mxu0 %v89
  %173 = vmatprep.subr.mxu0 %v88
  %174 = vmatpush2.msra.mxu0 %v87
  %175 = vmatprep.subr.mxu0 %v86
  %176 = vmatpush2.msra.mxu0 %v85
  %177 = vmatprep.subr.mxu0 %v84
  %178 = vmatpush2.msra.mxu0 %v83
  %179 = vmatprep.subr.mxu0 %v82
  %180 = vmatpush2.msra.mxu0 %v81
  %181 = vmatprep.subr.mxu0 %v80
  %182 = vmatpush2.msra.mxu0 %v79
  %183 = vmatprep.subr.mxu0 %v78
  %184 = vmatpush2.msra.mxu0 %v77
  %185 = vmatprep.subr.mxu0 %v76
  %186 = vmatpush2.msra.mxu0 %v75
  %187 = vmatprep.subr.mxu0 %v74
  %188 = vmatpush2.msra.mxu0 %v73
  %189 = vmatprep.subr.mxu0 %v72
  %190 = vmatpush2.msra.mxu0 %v71
  %191 = vmatprep.subr.mxu0 %v70
  %192 = vmatpush2.msra.mxu0 %v69
  %193 = vmatprep.subr.mxu0 %v68
  %194 = vmatpush2.msra.mxu0 %v67
  %195 = vmatprep.mubr.f32.mxu0 0.0
  %196 = vmatmul.mubr.f32.gmra.mxu0 0.0
  %v197 = vpop.f32.mrf.mxu0
  %v198 = vadd.f32 0.0, %v197
  %v199 = vpop.f32.mrf.mxu0
  %v200 = vadd.f32 0.0, %v199
  %201 = vdwg.mxu0
  %202 = vmatprep.subr.mxu0 %v130
  %203 = vmatpush1.msra.mxu0 %v129
  %204 = vmatprep.subr.mxu0 %v128
  %205 = vmatpush1.msra.mxu0 %v127
  %206 = vmatprep.subr.mxu0 %v126
  %207 = vmatpush1.msra.mxu0 %v125
  %208 = vmatprep.subr.mxu0 %v124
  %209 = vmatpush1.msra.mxu0 %v123
  %210 = vmatprep.subr.mxu0 %v122
  %211 = vmatpush1.msra.mxu0 %v121
  %212 = vmatprep.subr.mxu0 %v120
  %213 = vmatpush1.msra.mxu0 %v119
  %214 = vmatprep.subr.mxu0 %v118
  %215 = vmatpush1.msra.mxu0 %v117
  %216 = vmatprep.subr.mxu0 %v116
  %217 = vmatpush1.msra.mxu0 %v115
  %218 = vmatprep.subr.mxu0 %v114
  %219 = vmatpush1.msra.mxu0 %v113
  %220 = vmatprep.subr.mxu0 %v112
  %221 = vmatpush1.msra.mxu0 %v111
  %222 = vmatprep.subr.mxu0 %v110
  %223 = vmatpush1.msra.mxu0 %v109
  %224 = vmatprep.subr.mxu0 %v108
  %225 = vmatpush1.msra.mxu0 %v107
  %226 = vmatprep.subr.mxu0 %v106
  %227 = vmatpush1.msra.mxu0 %v105
  %228 = vmatprep.subr.mxu0 %v104
  %229 = vmatpush1.msra.mxu0 %v103
  %230 = vmatprep.subr.mxu0 %v102
  %231 = vmatpush1.msra.mxu0 %v101
  %232 = vmatprep.subr.mxu0 %v100
  %233 = vmatpush1.msra.mxu0 %v99
  %234 = vmatprep.subr.mxu0 0.0
  %235 = vmatpush2.msra.mxu0 0.0
  %236 = vmatprep.subr.mxu0 0.0
  %237 = vmatpush2.msra.mxu0 0.0
  %238 = vmatprep.subr.mxu0 0.0
  %239 = vmatpush2.msra.mxu0 0.0
  %240 = vmatprep.subr.mxu0 0.0
  %241 = vmatpush2.msra.mxu0 0.0
  %242 = vmatprep.subr.mxu0 0.0
  %243 = vmatpush2.msra.mxu0 0.0
  %244 = vmatprep.subr.mxu0 0.0
  %245 = vmatpush2.msra.mxu0 0.0
  %246 = vmatprep.subr.mxu0 0.0
  %247 = vmatpush2.msra.mxu0 0.0
  %248 = vmatprep.subr.mxu0 0.0
  %249 = vmatpush2.msra.mxu0 0.0
  %250 = vmatprep.subr.mxu0 0.0
  %251 = vmatpush2.msra.mxu0 0.0
  %252 = vmatprep.subr.mxu0 0.0
  %253 = vmatpush2.msra.mxu0 0.0
  %254 = vmatprep.subr.mxu0 0.0
  %255 = vmatpush2.msra.mxu0 0.0
  %256 = vmatprep.subr.mxu0 0.0
  %257 = vmatpush2.msra.mxu0 0.0
  %258 = vmatprep.subr.mxu0 0.0
  %259 = vmatpush2.msra.mxu0 0.0
  %260 = vmatprep.subr.mxu0 0.0
  %261 = vmatpush2.msra.mxu0 0.0
  %262 = vmatprep.subr.mxu0 0.0
  %263 = vmatpush2.msra.mxu0 0.0
  %264 = vmatprep.subr.mxu0 0.0
  %265 = vmatpush2.msra.mxu0 0.0
  %266 = vmatprep.mubr.f32.mxu0 0.0
  %267 = vmatmul.mubr.f32.gmra.mxu0 0.0
  %v268 = vpop.f32.mrf.mxu0
  %v269 = vadd.f32 %v198, %v268
  %v270 = vpop.f32.mrf.mxu0
  %v271 = vadd.f32 %v200, %v270
  %272 = vdwg.mxu0
  %v273 = vxor.u32 %v269, 2147483648
  %v274 = vxor.u32 %v271, 2147483648
  %v275 = vmul.f32 %v273, 1.442695
  %v276 = vpow.pop %v275
  %v277 = vmul.f32 %v274, 1.442695
  %v278 = vpow.pop %v277
  %v279 = vadd.f32 %v276, 1.0
  %v280 = vadd.f32 %v278, 1.0
  %v281 = vrcp.pop %v279
  %v282 = vmul.f32 1.0, %v281
  %v283 = vrcp.pop %v280
  %v284 = vmul.f32 1.0, %v283
  %v285 = vld [vmem:[%s5] sm:$0xff]
  %v286 = vld [vmem:[%s5 + $0x8] sm:$0xff]
  %v287 = vld [vmem:[%s5 + $0x10] sm:$0xff]
  %v288 = vld [vmem:[%s5 + $0x18] sm:$0xff]
  %v289 = vld [vmem:[%s5 + $0x20] sm:$0xff]
  %v290 = vld [vmem:[%s5 + $0x28] sm:$0xff]
  %v291 = vld [vmem:[%s5 + $0x30] sm:$0xff]
  %v292 = vld [vmem:[%s5 + $0x38] sm:$0xff]
  %v293 = vld [vmem:[%s5 + $0x40] sm:$0xff]
  %v294 = vld [vmem:[%s5 + $0x48] sm:$0xff]
  %v295 = vld [vmem:[%s5 + $0x50] sm:$0xff]
  %v296 = vld [vmem:[%s5 + $0x58] sm:$0xff]
  %v297 = vld [vmem:[%s5 + $0x60] sm:$0xff]
  %v298 = vld [vmem:[%s5 + $0x68] sm:$0xff]
  %v299 = vld [vmem:[%s5 + $0x70] sm:$0xff]
  %v300 = vld [vmem:[%s5 + $0x78] sm:$0xff]
  %v301 = vld [vmem:[%s5 + $0x80] sm:$0xff]
  %v302 = vld [vmem:[%s5 + $0x88] sm:$0xff]
  %v303 = vld [vmem:[%s5 + $0x90] sm:$0xff]
  %v304 = vld [vmem:[%s5 + $0x98] sm:$0xff]
  %v305 = vld [vmem:[%s5 + $0xa0] sm:$0xff]
  %v306 = vld [vmem:[%s5 + $0xa8] sm:$0xff]
  %v307 = vld [vmem:[%s5 + $0xb0] sm:$0xff]
  %v308 = vld [vmem:[%s5 + $0xb8] sm:$0xff]
  %v309 = vld [vmem:[%s5 + $0xc0] sm:$0xff]
  %v310 = vld [vmem:[%s5 + $0xc8] sm:$0xff]
  %v311 = vld [vmem:[%s5 + $0xd0] sm:$0xff]
  %v312 = vld [vmem:[%s5 + $0xd8] sm:$0xff]
  %v313 = vld [vmem:[%s5 + $0xe0] sm:$0xff]
  %v314 = vld [vmem:[%s5 + $0xe8] sm:$0xff]
  %v315 = vld [vmem:[%s5 + $0xf0] sm:$0xff]
  %v316 = vld [vmem:[%s5 + $0xf8] sm:$0xff]
  %317 = vmatprep.subr.mxu0 0.0
  %318 = vmatpush1.msra.mxu0 %v300
  %319 = vmatprep.subr.mxu0 0.0
  %320 = vmatpush1.msra.mxu0 %v299
  %321 = vmatprep.subr.mxu0 0.0
  %322 = vmatpush1.msra.mxu0 %v298
  %323 = vmatprep.subr.mxu0 0.0
  %324 = vmatpush1.msra.mxu0 %v297
  %325 = vmatprep.subr.mxu0 0.0
  %326 = vmatpush1.msra.mxu0 %v296
  %327 = vmatprep.subr.mxu0 0.0
  %328 = vmatpush1.msra.mxu0 %v295
  %329 = vmatprep.subr.mxu0 0.0
  %330 = vmatpush1.msra.mxu0 %v294
  %331 = vmatprep.subr.mxu0 0.0
  %332 = vmatpush1.msra.mxu0 %v293
  %333 = vmatprep.subr.mxu0 0.0
  %334 = vmatpush1.msra.mxu0 %v292
  %335 = vmatprep.subr.mxu0 0.0
  %336 = vmatpush1.msra.mxu0 %v291
  %337 = vmatprep.subr.mxu0 0.0
  %338 = vmatpush1.msra.mxu0 %v290
  %339 = vmatprep.subr.mxu0 0.0
  %340 = vmatpush1.msra.mxu0 %v289
  %341 = vmatprep.subr.mxu0 0.0
  %342 = vmatpush1.msra.mxu0 %v288
  %343 = vmatprep.subr.mxu0 0.0
  %344 = vmatpush1.msra.mxu0 %v287
  %345 = vmatprep.subr.mxu0 0.0
  %346 = vmatpush1.msra.mxu0 %v286
  %347 = vmatprep.subr.mxu0 0.0
  %348 = vmatpush1.msra.mxu0 %v285
  %349 = vmatprep.subr.mxu0 0.0
  %350 = vmatpush2.msra.mxu0 %v316
  %351 = vmatprep.subr.mxu0 0.0
  %352 = vmatpush2.msra.mxu0 %v315
  %353 = vmatprep.subr.mxu0 0.0
  %354 = vmatpush2.msra.mxu0 %v314
  %355 = vmatprep.subr.mxu0 0.0
  %356 = vmatpush2.msra.mxu0 %v313
  %357 = vmatprep.subr.mxu0 0.0
  %358 = vmatpush2.msra.mxu0 %v312
  %359 = vmatprep.subr.mxu0 0.0
  %360 = vmatpush2.msra.mxu0 %v311
  %361 = vmatprep.subr.mxu0 0.0
  %362 = vmatpush2.msra.mxu0 %v310
  %363 = vmatprep.subr.mxu0 0.0
  %364 = vmatpush2.msra.mxu0 %v309
  %365 = vmatprep.subr.mxu0 0.0
  %366 = vmatpush2.msra.mxu0 %v308
  %367 = vmatprep.subr.mxu0 0.0
  %368 = vmatpush2.msra.mxu0 %v307
  %369 = vmatprep.subr.mxu0 0.0
  %370 = vmatpush2.msra.mxu0 %v306
  %371 = vmatprep.subr.mxu0 0.0
  %372 = vmatpush2.msra.mxu0 %v305
  %373 = vmatprep.subr.mxu0 0.0
  %374 = vmatpush2.msra.mxu0 %v304
  %375 = vmatprep.subr.mxu0 0.0
  %376 = vmatpush2.msra.mxu0 %v303
  %377 = vmatprep.subr.mxu0 0.0
  %378 = vmatpush2.msra.mxu0 %v302
  %379 = vmatprep.subr.mxu0 0.0
  %380 = vmatpush2.msra.mxu0 %v301
  %381 = vmatprep.mubr.f32.mxu0 %v284
  %382 = vmatmul.mubr.f32.gmra.mxu0 %v282
  %v383 = vpop.f32.mrf.mxu0
  %v384 = vadd.f32 0.0, %v383
  %v385 = vpop.f32.mrf.mxu0
  %386 = vdwg.mxu0
  %v387 = vxor.u32 %v384, 2147483648
  %v388 = vmul.f32 %v387, 1.442695
  %v389 = vpow.pop %v388
  %v390 = vadd.f32 %v389, 1.0
  %v391 = vrcp.pop %v390
  %v392 = vmul.f32 1.0, %v391
  %393 = vst [vmem:[#allocation2] sm:$0x1] %v392
  %v394 = vlaneseq
  %v395 = vand.u32 %v394, 127
  %s396 = sld [smem:[#allocation5]]
  %s397 = scalar_lea.vmem [#allocation2], %s396
  %v398 = vld [vmem:[%s397] sm:$0x1]
  %399 = vst [vmem:[#allocation3] sm:$0x1] %v398
  %s400 = sld [smem:[#allocation5 + $0x1]]
  %s401 = scalar_lea.vmem [#allocation2], %s400
  %v402 = vld [vmem:[%s401] sm:$0x1]
  %403 = vst [vmem:[#allocation3 + $0x1] sm:$0x1] %v402
  %s404 = sld [smem:[#allocation5 + $0x2]]
  %s405 = scalar_lea.vmem [#allocation2], %s404
  %v406 = vld [vmem:[%s405] sm:$0x1]
  %407 = vst [vmem:[#allocation3 + $0x2] sm:$0x1] %v406
  %v408 = vld [vmem:[#allocation3] sm:$0x7]
  %s409 = sld [smem:[#allocation6]]
  %v410 = vstv %s409
  %vm411 = vcmp.lt.s32.totalorder %v395, %v410
  %v412 = vld [vmem:[%s3] sm:$0xff]
  %v413 = vld [vmem:[%s3 + $0x8] sm:$0xff]
  %v414 = vld [vmem:[%s3 + $0x10] sm:$0xff]
  %v415 = vld [vmem:[%s3 + $0x18] sm:$0xff]
  %v416 = vld [vmem:[%s3 + $0x20] sm:$0xff]
  %v417 = vld [vmem:[%s3 + $0x28] sm:$0xff]
  %v418 = vld [vmem:[%s3 + $0x30] sm:$0xff]
  %v419 = vld [vmem:[%s3 + $0x38] sm:$0xff]
  %v420 = vld [vmem:[%s3 + $0x40] sm:$0xff]
  %v421 = vld [vmem:[%s3 + $0x48] sm:$0xff]
  %v422 = vld [vmem:[%s3 + $0x50] sm:$0xff]
  %v423 = vld [vmem:[%s3 + $0x58] sm:$0xff]
  %v424 = vld [vmem:[%s3 + $0x60] sm:$0xff]
  %v425 = vld [vmem:[%s3 + $0x68] sm:$0xff]
  %v426 = vld [vmem:[%s3 + $0x70] sm:$0xff]
  %v427 = vld [vmem:[%s3 + $0x78] sm:$0xff]
  %v428 = vld [vmem:[%s3 + $0x80] sm:$0xff]
  %v429 = vld [vmem:[%s3 + $0x88] sm:$0xff]
  %v430 = vld [vmem:[%s3 + $0x90] sm:$0xff]
  %v431 = vld [vmem:[%s3 + $0x98] sm:$0xff]
  %v432 = vld [vmem:[%s3 + $0xa0] sm:$0xff]
  %v433 = vld [vmem:[%s3 + $0xa8] sm:$0xff]
  %v434 = vld [vmem:[%s3 + $0xb0] sm:$0xff]
  %v435 = vld [vmem:[%s3 + $0xb8] sm:$0xff]
  %v436 = vld [vmem:[%s3 + $0xc0] sm:$0xff]
  %v437 = vld [vmem:[%s3 + $0xc8] sm:$0xff]
  %v438 = vld [vmem:[%s3 + $0xd0] sm:$0xff]
  %v439 = vld [vmem:[%s3 + $0xd8] sm:$0xff]
  %v440 = vld [vmem:[%s3 + $0xe0] sm:$0xff]
  %v441 = vld [vmem:[%s3 + $0xe8] sm:$0xff]
  %v442 = vld [vmem:[%s3 + $0xf0] sm:$0xff]
  %v443 = vld [vmem:[%s3 + $0xf8] sm:$0xff]
  %v444 = vld [vmem:[%s3 + $0x100] sm:$0xff]
  %v445 = vld [vmem:[%s3 + $0x108] sm:$0xff]
  %v446 = vld [vmem:[%s3 + $0x110] sm:$0xff]
  %v447 = vld [vmem:[%s3 + $0x118] sm:$0xff]
  %v448 = vld [vmem:[%s3 + $0x120] sm:$0xff]
  %v449 = vld [vmem:[%s3 + $0x128] sm:$0xff]
  %v450 = vld [vmem:[%s3 + $0x130] sm:$0xff]
  %v451 = vld [vmem:[%s3 + $0x138] sm:$0xff]
  %v452 = vld [vmem:[%s3 + $0x140] sm:$0xff]
  %v453 = vld [vmem:[%s3 + $0x148] sm:$0xff]
  %v454 = vld [vmem:[%s3 + $0x150] sm:$0xff]
  %v455 = vld [vmem:[%s3 + $0x158] sm:$0xff]
  %v456 = vld [vmem:[%s3 + $0x160] sm:$0xff]
  %v457 = vld [vmem:[%s3 + $0x168] sm:$0xff]
  %v458 = vld [vmem:[%s3 + $0x170] sm:$0xff]
  %v459 = vld [vmem:[%s3 + $0x178] sm:$0xff]
  %v460 = vld [vmem:[%s3 + $0x180] sm:$0xff]
  %v461 = vld [vmem:[%s3 + $0x188] sm:$0xff]
  %v462 = vld [vmem:[%s3 + $0x190] sm:$0xff]
  %v463 = vld [vmem:[%s3 + $0x198] sm:$0xff]
  %v464 = vld [vmem:[%s3 + $0x1a0] sm:$0xff]
  %v465 = vld [vmem:[%s3 + $0x1a8] sm:$0xff]
  %v466 = vld [vmem:[%s3 + $0x1b0] sm:$0xff]
  %v467 = vld [vmem:[%s3 + $0x1b8] sm:$0xff]
  %v468 = vld [vmem:[%s3 + $0x1c0] sm:$0xff]
  %v469 = vld [vmem:[%s3 + $0x1c8] sm:$0xff]
  %v470 = vld [vmem:[%s3 + $0x1d0] sm:$0xff]
  %v471 = vld [vmem:[%s3 + $0x1d8] sm:$0xff]
  %v472 = vld [vmem:[%s3 + $0x1e0] sm:$0xff]
  %v473 = vld [vmem:[%s3 + $0x1e8] sm:$0xff]
  %v474 = vld [vmem:[%s3 + $0x1f0] sm:$0xff]
  %v475 = vld [vmem:[%s3 + $0x1f8] sm:$0xff]
  %v476 = vld [vmem:[%s3 + $0x200] sm:$0xff]
  %v477 = vld [vmem:[%s3 + $0x208] sm:$0xff]
  %v478 = vld [vmem:[%s3 + $0x210] sm:$0xff]
  %v479 = vld [vmem:[%s3 + $0x218] sm:$0xff]
  %v480 = vld [vmem:[%s3 + $0x220] sm:$0xff]
  %v481 = vld [vmem:[%s3 + $0x228] sm:$0xff]
  %v482 = vld [vmem:[%s3 + $0x230] sm:$0xff]
  %v483 = vld [vmem:[%s3 + $0x238] sm:$0xff]
  %v484 = vld [vmem:[%s3 + $0x240] sm:$0xff]
  %v485 = vld [vmem:[%s3 + $0x248] sm:$0xff]
  %v486 = vld [vmem:[%s3 + $0x250] sm:$0xff]
  %v487 = vld [vmem:[%s3 + $0x258] sm:$0xff]
  %v488 = vld [vmem:[%s3 + $0x260] sm:$0xff]
  %v489 = vld [vmem:[%s3 + $0x268] sm:$0xff]
  %v490 = vld [vmem:[%s3 + $0x270] sm:$0xff]
  %v491 = vld [vmem:[%s3 + $0x278] sm:$0xff]
  %v492 = vld [vmem:[%s3 + $0x280] sm:$0xff]
  %v493 = vld [vmem:[%s3 + $0x288] sm:$0xff]
  %v494 = vld [vmem:[%s3 + $0x290] sm:$0xff]
  %v495 = vld [vmem:[%s3 + $0x298] sm:$0xff]
  %v496 = vld [vmem:[%s3 + $0x2a0] sm:$0xff]
  %v497 = vld [vmem:[%s3 + $0x2a8] sm:$0xff]
  %v498 = vld [vmem:[%s3 + $0x2b0] sm:$0xff]
  %v499 = vld [vmem:[%s3 + $0x2b8] sm:$0xff]
  %v500 = vld [vmem:[%s3 + $0x2c0] sm:$0xff]
  %v501 = vld [vmem:[%s3 + $0x2c8] sm:$0xff]
  %v502 = vld [vmem:[%s3 + $0x2d0] sm:$0xff]
  %v503 = vld [vmem:[%s3 + $0x2d8] sm:$0xff]
  %v504 = vld [vmem:[%s3 + $0x2e0] sm:$0xff]
  %v505 = vld [vmem:[%s3 + $0x2e8] sm:$0xff]
  %v506 = vld [vmem:[%s3 + $0x2f0] sm:$0xff]
  %v507 = vld [vmem:[%s3 + $0x2f8] sm:$0xff]
  %508 = vmatprep.subr.mxu0 %v503
  %509 = vmatpush1.msra.mxu0 %v502
  %510 = vmatprep.subr.mxu0 %v497
  %511 = vmatpush1.msra.mxu0 %v496
  %512 = vmatprep.subr.mxu0 %v491
  %513 = vmatpush1.msra.mxu0 %v490
  %514 = vmatprep.subr.mxu0 %v485
  %515 = vmatpush1.msra.mxu0 %v484
  %516 = vmatprep.subr.mxu0 %v479
  %517 = vmatpush1.msra.mxu0 %v478
  %518 = vmatprep.subr.mxu0 %v473
  %519 = vmatpush1.msra.mxu0 %v472
  %520 = vmatprep.subr.mxu0 %v467
  %521 = vmatpush1.msra.mxu0 %v466
  %522 = vmatprep.subr.mxu0 %v461
  %523 = vmatpush1.msra.mxu0 %v460
  %524 = vmatprep.subr.mxu0 %v455
  %525 = vmatpush1.msra.mxu0 %v454
  %526 = vmatprep.subr.mxu0 %v449
  %527 = vmatpush1.msra.mxu0 %v448
  %528 = vmatprep.subr.mxu0 %v443
  %529 = vmatpush1.msra.mxu0 %v442
  %530 = vmatprep.subr.mxu0 %v437
  %531 = vmatpush1.msra.mxu0 %v436
  %532 = vmatprep.subr.mxu0 %v431
  %533 = vmatpush1.msra.mxu0 %v430
  %534 = vmatprep.subr.mxu0 %v425
  %535 = vmatpush1.msra.mxu0 %v424
  %536 = vmatprep.subr.mxu0 %v419
  %537 = vmatpush1.msra.mxu0 %v418
  %538 = vmatprep.subr.mxu0 %v413
  %539 = vmatpush1.msra.mxu0 %v412
  %540 = vmatprep.subr.mxu0 0.0
  %541 = vmatpush2.msra.mxu0 0.0
  %542 = vmatprep.subr.mxu0 0.0
  %543 = vmatpush2.msra.mxu0 0.0
  %544 = vmatprep.subr.mxu0 0.0
  %545 = vmatpush2.msra.mxu0 0.0
  %546 = vmatprep.subr.mxu0 0.0
  %547 = vmatpush2.msra.mxu0 0.0
  %548 = vmatprep.subr.mxu0 0.0
  %549 = vmatpush2.msra.mxu0 0.0
  %550 = vmatprep.subr.mxu0 0.0
  %551 = vmatpush2.msra.mxu0 0.0
  %552 = vmatprep.subr.mxu0 0.0
  %553 = vmatpush2.msra.mxu0 0.0
  %554 = vmatprep.subr.mxu0 0.0
  %555 = vmatpush2.msra.mxu0 0.0
  %556 = vmatprep.subr.mxu0 0.0
  %557 = vmatpush2.msra.mxu0 0.0
  %558 = vmatprep.subr.mxu0 0.0
  %559 = vmatpush2.msra.mxu0 0.0
  %560 = vmatprep.subr.mxu0 0.0
  %561 = vmatpush2.msra.mxu0 0.0
  %562 = vmatprep.subr.mxu0 0.0
  %563 = vmatpush2.msra.mxu0 0.0
  %564 = vmatprep.subr.mxu0 0.0
  %565 = vmatpush2.msra.mxu0 0.0
  %566 = vmatprep.subr.mxu0 0.0
  %567 = vmatpush2.msra.mxu0 0.0
  %568 = vmatprep.subr.mxu0 0.0
  %569 = vmatpush2.msra.mxu0 0.0
  %570 = vmatprep.subr.mxu0 0.0
  %571 = vmatpush2.msra.mxu0 0.0
  %572 = vmatprep.mubr.f32.mxu0 0.0
  %573 = vmatmul.mubr.f32.gmra.mxu0 %v408
  %v574 = vpop.f32.mrf.mxu0
  %v575 = vadd.f32 0.0, %v574
  %v576 = vpop.f32.mrf.mxu0
  %v577 = vadd.f32 0.0, %v576
  %578 = vdwg.mxu0
  %579 = vmatprep.subr.mxu0 %v505
  %580 = vmatpush1.msra.mxu0 %v504
  %581 = vmatprep.subr.mxu0 %v499
  %582 = vmatpush1.msra.mxu0 %v498
  %583 = vmatprep.subr.mxu0 %v493
  %584 = vmatpush1.msra.mxu0 %v492
  %585 = vmatprep.subr.mxu0 %v487
  %586 = vmatpush1.msra.mxu0 %v486
  %587 = vmatprep.subr.mxu0 %v481
  %588 = vmatpush1.msra.mxu0 %v480
  %589 = vmatprep.subr.mxu0 %v475
  %590 = vmatpush1.msra.mxu0 %v474
  %591 = vmatprep.subr.mxu0 %v469
  %592 = vmatpush1.msra.mxu0 %v468
  %593 = vmatprep.subr.mxu0 %v463
  %594 = vmatpush1.msra.mxu0 %v462
  %595 = vmatprep.subr.mxu0 %v457
  %596 = vmatpush1.msra.mxu0 %v456
  %597 = vmatprep.subr.mxu0 %v451
  %598 = vmatpush1.msra.mxu0 %v450
  %599 = vmatprep.subr.mxu0 %v445
  %600 = vmatpush1.msra.mxu0 %v444
  %601 = vmatprep.subr.mxu0 %v439
  %602 = vmatpush1.msra.mxu0 %v438
  %603 = vmatprep.subr.mxu0 %v433
  %604 = vmatpush1.msra.mxu0 %v432
  %605 = vmatprep.subr.mxu0 %v427
  %606 = vmatpush1.msra.mxu0 %v426
  %607 = vmatprep.subr.mxu0 %v421
  %608 = vmatpush1.msra.mxu0 %v420
  %609 = vmatprep.subr.mxu0 %v415
  %610 = vmatpush1.msra.mxu0 %v414
  %611 = vmatprep.subr.mxu0 0.0
  %612 = vmatpush2.msra.mxu0 0.0
  %613 = vmatprep.subr.mxu0 0.0
  %614 = vmatpush2.msra.mxu0 0.0
  %615 = vmatprep.subr.mxu0 0.0
  %616 = vmatpush2.msra.mxu0 0.0
  %617 = vmatprep.subr.mxu0 0.0
  %618 = vmatpush2.msra.mxu0 0.0
  %619 = vmatprep.subr.mxu0 0.0
  %620 = vmatpush2.msra.mxu0 0.0
  %621 = vmatprep.subr.mxu0 0.0
  %622 = vmatpush2.msra.mxu0 0.0
  %623 = vmatprep.subr.mxu0 0.0
  %624 = vmatpush2.msra.mxu0 0.0
  %625 = vmatprep.subr.mxu0 0.0
  %626 = vmatpush2.msra.mxu0 0.0
  %627 = vmatprep.subr.mxu0 0.0
  %628 = vmatpush2.msra.mxu0 0.0
  %629 = vmatprep.subr.mxu0 0.0
  %630 = vmatpush2.msra.mxu0 0.0
  %631 = vmatprep.subr.mxu0 0.0
  %632 = vmatpush2.msra.mxu0 0.0
  %633 = vmatprep.subr.mxu0 0.0
  %634 = vmatpush2.msra.mxu0 0.0
  %635 = vmatprep.subr.mxu0 0.0
  %636 = vmatpush2.msra.mxu0 0.0
  %637 = vmatprep.subr.mxu0 0.0
  %638 = vmatpush2.msra.mxu0 0.0
  %639 = vmatprep.subr.mxu0 0.0
  %640 = vmatpush2.msra.mxu0 0.0
  %641 = vmatprep.subr.mxu0 0.0
  %642 = vmatpush2.msra.mxu0 0.0
  %643 = vmatprep.mubr.f32.mxu0 0.0
  %644 = vmatmul.mubr.f32.gmra.mxu0 %v408
  %v645 = vpop.f32.mrf.mxu0
  %v646 = vadd.f32 0.0, %v645
  %v647 = vpop.f32.mrf.mxu0
  %v648 = vadd.f32 0.0, %v647
  %649 = vdwg.mxu0
  %650 = vmatprep.subr.mxu0 %v507
  %651 = vmatpush1.msra.mxu0 %v506
  %652 = vmatprep.subr.mxu0 %v501
  %653 = vmatpush1.msra.mxu0 %v500
  %654 = vmatprep.subr.mxu0 %v495
  %655 = vmatpush1.msra.mxu0 %v494
  %656 = vmatprep.subr.mxu0 %v489
  %657 = vmatpush1.msra.mxu0 %v488
  %658 = vmatprep.subr.mxu0 %v483
  %659 = vmatpush1.msra.mxu0 %v482
  %660 = vmatprep.subr.mxu0 %v477
  %661 = vmatpush1.msra.mxu0 %v476
  %662 = vmatprep.subr.mxu0 %v471
  %663 = vmatpush1.msra.mxu0 %v470
  %664 = vmatprep.subr.mxu0 %v465
  %665 = vmatpush1.msra.mxu0 %v464
  %666 = vmatprep.subr.mxu0 %v459
  %667 = vmatpush1.msra.mxu0 %v458
  %668 = vmatprep.subr.mxu0 %v453
  %669 = vmatpush1.msra.mxu0 %v452
  %670 = vmatprep.subr.mxu0 %v447
  %671 = vmatpush1.msra.mxu0 %v446
  %672 = vmatprep.subr.mxu0 %v441
  %673 = vmatpush1.msra.mxu0 %v440
  %674 = vmatprep.subr.mxu0 %v435
  %675 = vmatpush1.msra.mxu0 %v434
  %676 = vmatprep.subr.mxu0 %v429
  %677 = vmatpush1.msra.mxu0 %v428
  %678 = vmatprep.subr.mxu0 %v423
  %679 = vmatpush1.msra.mxu0 %v422
  %680 = vmatprep.subr.mxu0 %v417
  %681 = vmatpush1.msra.mxu0 %v416
  %682 = vmatprep.subr.mxu0 0.0
  %683 = vmatpush2.msra.mxu0 0.0
  %684 = vmatprep.subr.mxu0 0.0
  %685 = vmatpush2.msra.mxu0 0.0
  %686 = vmatprep.subr.mxu0 0.0
  %687 = vmatpush2.msra.mxu0 0.0
  %688 = vmatprep.subr.mxu0 0.0
  %689 = vmatpush2.msra.mxu0 0.0
  %690 = vmatprep.subr.mxu0 0.0
  %691 = vmatpush2.msra.mxu0 0.0
  %692 = vmatprep.subr.mxu0 0.0
  %693 = vmatpush2.msra.mxu0 0.0
  %694 = vmatprep.subr.mxu0 0.0
  %695 = vmatpush2.msra.mxu0 0.0
  %696 = vmatprep.subr.mxu0 0.0
  %697 = vmatpush2.msra.mxu0 0.0
  %698 = vmatprep.subr.mxu0 0.0
  %699 = vmatpush2.msra.mxu0 0.0
  %700 = vmatprep.subr.mxu0 0.0
  %701 = vmatpush2.msra.mxu0 0.0
  %702 = vmatprep.subr.mxu0 0.0
  %703 = vmatpush2.msra.mxu0 0.0
  %704 = vmatprep.subr.mxu0 0.0
  %705 = vmatpush2.msra.mxu0 0.0
  %706 = vmatprep.subr.mxu0 0.0
  %707 = vmatpush2.msra.mxu0 0.0
  %708 = vmatprep.subr.mxu0 0.0
  %709 = vmatpush2.msra.mxu0 0.0
  %710 = vmatprep.subr.mxu0 0.0
  %711 = vmatpush2.msra.mxu0 0.0
  %712 = vmatprep.subr.mxu0 0.0
  %713 = vmatpush2.msra.mxu0 0.0
  %714 = vmatprep.mubr.f32.mxu0 0.0
  %715 = vmatmul.mubr.f32.gmra.mxu0 %v408
  %v716 = vpop.f32.mrf.mxu0
  %v717 = vadd.f32 0.0, %v716
  %v718 = vpop.f32.mrf.mxu0
  %v719 = vadd.f32 0.0, %v718
  %720 = vdwg.mxu0
  %v721 = vld [vmem:[%s2] ss:$4 sm:$0x7]
  %722 = vmatprep.subr.mxu0 0.0
  %723 = vmatpush1.xpose.msra.mxu0 0.0
  %724 = vmatprep.subr.mxu0 0.0
  %725 = vmatpush1.xpose.msra.mxu0 0.0
  %726 = vmatprep.subr.mxu0 0.0
  %727 = vmatpush1.xpose.msra.mxu0 0.0
  %728 = vmatprep.subr.mxu0 0.0
  %729 = vmatpush1.xpose.msra.mxu0 0.0
  %730 = vmatprep.subr.mxu0 0.0
  %731 = vmatpush1.xpose.msra.mxu0 0.0
  %732 = vmatprep.subr.mxu0 0.0
  %733 = vmatpush1.xpose.msra.mxu0 0.0
  %734 = vmatprep.subr.mxu0 0.0
  %735 = vmatpush1.xpose.msra.mxu0 0.0
  %736 = vmatprep.subr.mxu0 0.0
  %737 = vmatpush1.xpose.msra.mxu0 0.0
  %738 = vmatprep.subr.mxu0 0.0
  %739 = vmatpush1.xpose.msra.mxu0 0.0
  %740 = vmatprep.subr.mxu0 0.0
  %741 = vmatpush1.xpose.msra.mxu0 0.0
  %742 = vmatprep.subr.mxu0 0.0
  %743 = vmatpush1.xpose.msra.mxu0 0.0
  %744 = vmatprep.subr.mxu0 0.0
  %745 = vmatpush1.xpose.msra.mxu0 0.0
  %746 = vmatprep.subr.mxu0 0.0
  %747 = vmatpush1.xpose.msra.mxu0 0.0
  %748 = vmatprep.subr.mxu0 0.0
  %749 = vmatpush1.xpose.msra.mxu0 0.0
  %750 = vmatprep.subr.mxu0 0.0
  %751 = vmatpush1.xpose.msra.mxu0 0.0
  %752 = vmatprep.subr.mxu0 0.0
  %753 = vmatpush1.xpose.msra.mxu0 %v575
  %754 = vmatprep.subr.mxu0 0.0
  %755 = vmatpush2.xpose.msra.mxu0 0.0
  %756 = vmatprep.subr.mxu0 0.0
  %757 = vmatpush2.xpose.msra.mxu0 0.0
  %758 = vmatprep.subr.mxu0 0.0
  %759 = vmatpush2.xpose.msra.mxu0 0.0
  %760 = vmatprep.subr.mxu0 0.0
  %761 = vmatpush2.xpose.msra.mxu0 0.0
  %762 = vmatprep.subr.mxu0 0.0
  %763 = vmatpush2.xpose.msra.mxu0 0.0
  %764 = vmatprep.subr.mxu0 0.0
  %765 = vmatpush2.xpose.msra.mxu0 0.0
  %766 = vmatprep.subr.mxu0 0.0
  %767 = vmatpush2.xpose.msra.mxu0 0.0
  %768 = vmatprep.subr.mxu0 0.0
  %769 = vmatpush2.xpose.msra.mxu0 0.0
  %770 = vmatprep.subr.mxu0 0.0
  %771 = vmatpush2.xpose.msra.mxu0 0.0
  %772 = vmatprep.subr.mxu0 0.0
  %773 = vmatpush2.xpose.msra.mxu0 0.0
  %774 = vmatprep.subr.mxu0 0.0
  %775 = vmatpush2.xpose.msra.mxu0 0.0
  %776 = vmatprep.subr.mxu0 0.0
  %777 = vmatpush2.xpose.msra.mxu0 0.0
  %778 = vmatprep.subr.mxu0 0.0
  %779 = vmatpush2.xpose.msra.mxu0 0.0
  %780 = vmatprep.subr.mxu0 0.0
  %781 = vmatpush2.xpose.msra.mxu0 0.0
  %782 = vmatprep.subr.mxu0 0.0
  %783 = vmatpush2.xpose.msra.mxu0 0.0
  %784 = vmatprep.subr.mxu0 0.0
  %785 = vmatpush2.xpose.msra.mxu0 0.0
  %786 = vmatprep.mubr.f32.mxu0 0.0
  %787 = vmatmul.mubr.f32.gmra.mxu0 %v721
  %v788 = vpop.f32.mrf.mxu0
  %v789 = vadd.f32 0.0, %v788
  %v790 = vpop.f32.mrf.mxu0
  %791 = vdwg.mxu0
  %v792 = vsel %vm411, %v789, -1e+30
  %vm793 = vcmask 16384
  %v794 = vsel %vm793, %v792, -inf
  %795 = vmax.xlane.f32.xlu0 %v794
  %v796 = vpop.xlane.xlu0 %795
  %v797 = vsub.f32 %v792, %v796
  %v798 = vmul.f32 %v797, 1.442695
  %v799 = vpow.pop %v798
  %v800 = vsel %vm793, %v799, 0.0
  %801 = vadd.xlane.f32.xlu0 %v800
  %v802 = vpop.xlane.xlu0 %801
  %v803 = vrcp.pop %v802
  %v804 = vmul.f32 %v799, %v803
  %vm805 = vcmask 23552
  %v807 = vsel %vm805, %v804, 0
  %vm809 = vcmask 1042432
  %v811 = vsel %vm809, %v648, 0
  %813 = vmatprep.subr.mxu0 0.0
  %814 = vmatpush1.msra.mxu0 0.0
  %815 = vmatprep.subr.mxu0 0.0
  %816 = vmatpush1.msra.mxu0 0.0
  %817 = vmatprep.subr.mxu0 0.0
  %818 = vmatpush1.msra.mxu0 0.0
  %819 = vmatprep.subr.mxu0 0.0
  %820 = vmatpush1.msra.mxu0 0.0
  %821 = vmatprep.subr.mxu0 0.0
  %822 = vmatpush1.msra.mxu0 0.0
  %823 = vmatprep.subr.mxu0 0.0
  %824 = vmatpush1.msra.mxu0 0.0
  %825 = vmatprep.subr.mxu0 0.0
  %826 = vmatpush1.msra.mxu0 0.0
  %827 = vmatprep.subr.mxu0 0.0
  %828 = vmatpush1.msra.mxu0 0.0
  %829 = vmatprep.subr.mxu0 0.0
  %830 = vmatpush1.msra.mxu0 0.0
  %831 = vmatprep.subr.mxu0 0.0
  %832 = vmatpush1.msra.mxu0 0.0
  %833 = vmatprep.subr.mxu0 0.0
  %834 = vmatpush1.msra.mxu0 0.0
  %835 = vmatprep.subr.mxu0 0.0
  %836 = vmatpush1.msra.mxu0 0.0
  %837 = vmatprep.subr.mxu0 0.0
  %838 = vmatpush1.msra.mxu0 0.0
  %839 = vmatprep.subr.mxu0 0.0
  %840 = vmatpush1.msra.mxu0 0.0
  %841 = vmatprep.subr.mxu0 0.0
  %842 = vmatpush1.msra.mxu0 0.0
  %843 = vmatprep.subr.mxu0 0.0
  %844 = vmatpush1.msra.mxu0 %v811
  %845 = vmatprep.subr.mxu0 0.0
  %846 = vmatpush2.msra.mxu0 0.0
  %847 = vmatprep.subr.mxu0 0.0
  %848 = vmatpush2.msra.mxu0 0.0
  %849 = vmatprep.subr.mxu0 0.0
  %850 = vmatpush2.msra.mxu0 0.0
  %851 = vmatprep.subr.mxu0 0.0
  %852 = vmatpush2.msra.mxu0 0.0
  %853 = vmatprep.subr.mxu0 0.0
  %854 = vmatpush2.msra.mxu0 0.0
  %855 = vmatprep.subr.mxu0 0.0
  %856 = vmatpush2.msra.mxu0 0.0
  %857 = vmatprep.subr.mxu0 0.0
  %858 = vmatpush2.msra.mxu0 0.0
  %859 = vmatprep.subr.mxu0 0.0
  %860 = vmatpush2.msra.mxu0 0.0
  %861 = vmatprep.subr.mxu0 0.0
  %862 = vmatpush2.msra.mxu0 0.0
  %863 = vmatprep.subr.mxu0 0.0
  %864 = vmatpush2.msra.mxu0 0.0
  %865 = vmatprep.subr.mxu0 0.0
  %866 = vmatpush2.msra.mxu0 0.0
  %867 = vmatprep.subr.mxu0 0.0
  %868 = vmatpush2.msra.mxu0 0.0
  %869 = vmatprep.subr.mxu0 0.0
  %870 = vmatpush2.msra.mxu0 0.0
  %871 = vmatprep.subr.mxu0 0.0
  %872 = vmatpush2.msra.mxu0 0.0
  %873 = vmatprep.subr.mxu0 0.0
  %874 = vmatpush2.msra.mxu0 0.0
  %875 = vmatprep.subr.mxu0 0.0
  %876 = vmatpush2.msra.mxu0 0.0
  %877 = vmatprep.mubr.f32.mxu0 0.0
  %878 = vmatmul.mubr.f32.gmra.mxu0 %v807
  %v879 = vpop.f32.mrf.mxu0
  %v880 = vadd.f32 0.0, %v879
  %v881 = vpop.f32.mrf.mxu0
  %882 = vdwg.mxu0
  %v884 = vlaneseq
  %v885 = vshrl.u32 %v884, 7
  %v886 = vsub.s32 1, %v885
  %v887 = vrot.slane %v721, %v886
  %889 = vmatprep.subr.mxu0 0.0
  %890 = vmatpush1.xpose.msra.mxu0 0.0
  %891 = vmatprep.subr.mxu0 0.0
  %892 = vmatpush1.xpose.msra.mxu0 0.0
  %893 = vmatprep.subr.mxu0 0.0
  %894 = vmatpush1.xpose.msra.mxu0 0.0
  %895 = vmatprep.subr.mxu0 0.0
  %896 = vmatpush1.xpose.msra.mxu0 0.0
  %897 = vmatprep.subr.mxu0 0.0
  %898 = vmatpush1.xpose.msra.mxu0 0.0
  %899 = vmatprep.subr.mxu0 0.0
  %900 = vmatpush1.xpose.msra.mxu0 0.0
  %901 = vmatprep.subr.mxu0 0.0
  %902 = vmatpush1.xpose.msra.mxu0 0.0
  %903 = vmatprep.subr.mxu0 0.0
  %904 = vmatpush1.xpose.msra.mxu0 0.0
  %905 = vmatprep.subr.mxu0 0.0
  %906 = vmatpush1.xpose.msra.mxu0 0.0
  %907 = vmatprep.subr.mxu0 0.0
  %908 = vmatpush1.xpose.msra.mxu0 0.0
  %909 = vmatprep.subr.mxu0 0.0
  %910 = vmatpush1.xpose.msra.mxu0 0.0
  %911 = vmatprep.subr.mxu0 0.0
  %912 = vmatpush1.xpose.msra.mxu0 0.0
  %913 = vmatprep.subr.mxu0 0.0
  %914 = vmatpush1.xpose.msra.mxu0 0.0
  %915 = vmatprep.subr.mxu0 0.0
  %916 = vmatpush1.xpose.msra.mxu0 0.0
  %917 = vmatprep.subr.mxu0 0.0
  %918 = vmatpush1.xpose.msra.mxu0 0.0
  %919 = vmatprep.subr.mxu0 0.0
  %920 = vmatpush1.xpose.msra.mxu0 %v577
  %921 = vmatprep.subr.mxu0 0.0
  %922 = vmatpush2.xpose.msra.mxu0 0.0
  %923 = vmatprep.subr.mxu0 0.0
  %924 = vmatpush2.xpose.msra.mxu0 0.0
  %925 = vmatprep.subr.mxu0 0.0
  %926 = vmatpush2.xpose.msra.mxu0 0.0
  %927 = vmatprep.subr.mxu0 0.0
  %928 = vmatpush2.xpose.msra.mxu0 0.0
  %929 = vmatprep.subr.mxu0 0.0
  %930 = vmatpush2.xpose.msra.mxu0 0.0
  %931 = vmatprep.subr.mxu0 0.0
  %932 = vmatpush2.xpose.msra.mxu0 0.0
  %933 = vmatprep.subr.mxu0 0.0
  %934 = vmatpush2.xpose.msra.mxu0 0.0
  %935 = vmatprep.subr.mxu0 0.0
  %936 = vmatpush2.xpose.msra.mxu0 0.0
  %937 = vmatprep.subr.mxu0 0.0
  %938 = vmatpush2.xpose.msra.mxu0 0.0
  %939 = vmatprep.subr.mxu0 0.0
  %940 = vmatpush2.xpose.msra.mxu0 0.0
  %941 = vmatprep.subr.mxu0 0.0
  %942 = vmatpush2.xpose.msra.mxu0 0.0
  %943 = vmatprep.subr.mxu0 0.0
  %944 = vmatpush2.xpose.msra.mxu0 0.0
  %945 = vmatprep.subr.mxu0 0.0
  %946 = vmatpush2.xpose.msra.mxu0 0.0
  %947 = vmatprep.subr.mxu0 0.0
  %948 = vmatpush2.xpose.msra.mxu0 0.0
  %949 = vmatprep.subr.mxu0 0.0
  %950 = vmatpush2.xpose.msra.mxu0 0.0
  %951 = vmatprep.subr.mxu0 0.0
  %952 = vmatpush2.xpose.msra.mxu0 0.0
  %953 = vmatprep.mubr.f32.mxu0 0.0
  %954 = vmatmul.mubr.f32.gmra.mxu0 %v887
  %v955 = vpop.f32.mrf.mxu0
  %v956 = vadd.f32 0.0, %v955
  %v957 = vpop.f32.mrf.mxu0
  %958 = vdwg.mxu0
  %v959 = vsel %vm411, %v956, -1e+30
  %v960 = vsel %vm793, %v959, -inf
  %961 = vmax.xlane.f32.xlu0 %v960
  %v962 = vpop.xlane.xlu0 %961
  %v963 = vsub.f32 %v959, %v962
  %v964 = vmul.f32 %v963, 1.442695
  %v965 = vpow.pop %v964
  %v966 = vsel %vm793, %v965, 0.0
  %967 = vadd.xlane.f32.xlu0 %v966
  %v968 = vpop.xlane.xlu0 %967
  %v969 = vrcp.pop %v968
  %v970 = vmul.f32 %v965, %v969
  %v972 = vsel %vm805, %v970, 0
  %v975 = vsel %vm809, %v717, 0
  %977 = vmatprep.subr.mxu0 0.0
  %978 = vmatpush1.msra.mxu0 0.0
  %979 = vmatprep.subr.mxu0 0.0
  %980 = vmatpush1.msra.mxu0 0.0
  %981 = vmatprep.subr.mxu0 0.0
  %982 = vmatpush1.msra.mxu0 0.0
  %983 = vmatprep.subr.mxu0 0.0
  %984 = vmatpush1.msra.mxu0 0.0
  %985 = vmatprep.subr.mxu0 0.0
  %986 = vmatpush1.msra.mxu0 0.0
  %987 = vmatprep.subr.mxu0 0.0
  %988 = vmatpush1.msra.mxu0 0.0
  %989 = vmatprep.subr.mxu0 0.0
  %990 = vmatpush1.msra.mxu0 0.0
  %991 = vmatprep.subr.mxu0 0.0
  %992 = vmatpush1.msra.mxu0 0.0
  %993 = vmatprep.subr.mxu0 0.0
  %994 = vmatpush1.msra.mxu0 0.0
  %995 = vmatprep.subr.mxu0 0.0
  %996 = vmatpush1.msra.mxu0 0.0
  %997 = vmatprep.subr.mxu0 0.0
  %998 = vmatpush1.msra.mxu0 0.0
  %999 = vmatprep.subr.mxu0 0.0
  %1000 = vmatpush1.msra.mxu0 0.0
  %1001 = vmatprep.subr.mxu0 0.0
  %1002 = vmatpush1.msra.mxu0 0.0
  %1003 = vmatprep.subr.mxu0 0.0
  %1004 = vmatpush1.msra.mxu0 0.0
  %1005 = vmatprep.subr.mxu0 0.0
  %1006 = vmatpush1.msra.mxu0 0.0
  %1007 = vmatprep.subr.mxu0 0.0
  %1008 = vmatpush1.msra.mxu0 %v975
  %1009 = vmatprep.subr.mxu0 0.0
  %1010 = vmatpush2.msra.mxu0 0.0
  %1011 = vmatprep.subr.mxu0 0.0
  %1012 = vmatpush2.msra.mxu0 0.0
  %1013 = vmatprep.subr.mxu0 0.0
  %1014 = vmatpush2.msra.mxu0 0.0
  %1015 = vmatprep.subr.mxu0 0.0
  %1016 = vmatpush2.msra.mxu0 0.0
  %1017 = vmatprep.subr.mxu0 0.0
  %1018 = vmatpush2.msra.mxu0 0.0
  %1019 = vmatprep.subr.mxu0 0.0
  %1020 = vmatpush2.msra.mxu0 0.0
  %1021 = vmatprep.subr.mxu0 0.0
  %1022 = vmatpush2.msra.mxu0 0.0
  %1023 = vmatprep.subr.mxu0 0.0
  %1024 = vmatpush2.msra.mxu0 0.0
  %1025 = vmatprep.subr.mxu0 0.0
  %1026 = vmatpush2.msra.mxu0 0.0
  %1027 = vmatprep.subr.mxu0 0.0
  %1028 = vmatpush2.msra.mxu0 0.0
  %1029 = vmatprep.subr.mxu0 0.0
  %1030 = vmatpush2.msra.mxu0 0.0
  %1031 = vmatprep.subr.mxu0 0.0
  %1032 = vmatpush2.msra.mxu0 0.0
  %1033 = vmatprep.subr.mxu0 0.0
  %1034 = vmatpush2.msra.mxu0 0.0
  %1035 = vmatprep.subr.mxu0 0.0
  %1036 = vmatpush2.msra.mxu0 0.0
  %1037 = vmatprep.subr.mxu0 0.0
  %1038 = vmatpush2.msra.mxu0 0.0
  %1039 = vmatprep.subr.mxu0 0.0
  %1040 = vmatpush2.msra.mxu0 0.0
  %1041 = vmatprep.mubr.f32.mxu0 0.0
  %1042 = vmatmul.mubr.f32.gmra.mxu0 %v972
  %v1043 = vpop.f32.mrf.mxu0
  %v1044 = vadd.f32 0.0, %v1043
  %v1045 = vpop.f32.mrf.mxu0
  %1046 = vdwg.mxu0
  %v1047 = vlaneseq
  %v1048 = vshrl.u32 %v1047, 7
  %v1049 = vsub.s32 2, %v1048
  %v1050 = vrot.slane %v721, %v1049
  %1052 = vmatprep.subr.mxu0 0.0
  %1053 = vmatpush1.xpose.msra.mxu0 0.0
  %1054 = vmatprep.subr.mxu0 0.0
  %1055 = vmatpush1.xpose.msra.mxu0 0.0
  %1056 = vmatprep.subr.mxu0 0.0
  %1057 = vmatpush1.xpose.msra.mxu0 0.0
  %1058 = vmatprep.subr.mxu0 0.0
  %1059 = vmatpush1.xpose.msra.mxu0 0.0
  %1060 = vmatprep.subr.mxu0 0.0
  %1061 = vmatpush1.xpose.msra.mxu0 0.0
  %1062 = vmatprep.subr.mxu0 0.0
  %1063 = vmatpush1.xpose.msra.mxu0 0.0
  %1064 = vmatprep.subr.mxu0 0.0
  %1065 = vmatpush1.xpose.msra.mxu0 0.0
  %1066 = vmatprep.subr.mxu0 0.0
  %1067 = vmatpush1.xpose.msra.mxu0 0.0
  %1068 = vmatprep.subr.mxu0 0.0
  %1069 = vmatpush1.xpose.msra.mxu0 0.0
  %1070 = vmatprep.subr.mxu0 0.0
  %1071 = vmatpush1.xpose.msra.mxu0 0.0
  %1072 = vmatprep.subr.mxu0 0.0
  %1073 = vmatpush1.xpose.msra.mxu0 0.0
  %1074 = vmatprep.subr.mxu0 0.0
  %1075 = vmatpush1.xpose.msra.mxu0 0.0
  %1076 = vmatprep.subr.mxu0 0.0
  %1077 = vmatpush1.xpose.msra.mxu0 0.0
  %1078 = vmatprep.subr.mxu0 0.0
  %1079 = vmatpush1.xpose.msra.mxu0 0.0
  %1080 = vmatprep.subr.mxu0 0.0
  %1081 = vmatpush1.xpose.msra.mxu0 0.0
  %1082 = vmatprep.subr.mxu0 0.0
  %1083 = vmatpush1.xpose.msra.mxu0 %v646
  %1084 = vmatprep.subr.mxu0 0.0
  %1085 = vmatpush2.xpose.msra.mxu0 0.0
  %1086 = vmatprep.subr.mxu0 0.0
  %1087 = vmatpush2.xpose.msra.mxu0 0.0
  %1088 = vmatprep.subr.mxu0 0.0
  %1089 = vmatpush2.xpose.msra.mxu0 0.0
  %1090 = vmatprep.subr.mxu0 0.0
  %1091 = vmatpush2.xpose.msra.mxu0 0.0
  %1092 = vmatprep.subr.mxu0 0.0
  %1093 = vmatpush2.xpose.msra.mxu0 0.0
  %1094 = vmatprep.subr.mxu0 0.0
  %1095 = vmatpush2.xpose.msra.mxu0 0.0
  %1096 = vmatprep.subr.mxu0 0.0
  %1097 = vmatpush2.xpose.msra.mxu0 0.0
  %1098 = vmatprep.subr.mxu0 0.0
  %1099 = vmatpush2.xpose.msra.mxu0 0.0
  %1100 = vmatprep.subr.mxu0 0.0
  %1101 = vmatpush2.xpose.msra.mxu0 0.0
  %1102 = vmatprep.subr.mxu0 0.0
  %1103 = vmatpush2.xpose.msra.mxu0 0.0
  %1104 = vmatprep.subr.mxu0 0.0
  %1105 = vmatpush2.xpose.msra.mxu0 0.0
  %1106 = vmatprep.subr.mxu0 0.0
  %1107 = vmatpush2.xpose.msra.mxu0 0.0
  %1108 = vmatprep.subr.mxu0 0.0
  %1109 = vmatpush2.xpose.msra.mxu0 0.0
  %1110 = vmatprep.subr.mxu0 0.0
  %1111 = vmatpush2.xpose.msra.mxu0 0.0
  %1112 = vmatprep.subr.mxu0 0.0
  %1113 = vmatpush2.xpose.msra.mxu0 0.0
  %1114 = vmatprep.subr.mxu0 0.0
  %1115 = vmatpush2.xpose.msra.mxu0 0.0
  %1116 = vmatprep.mubr.f32.mxu0 0.0
  %1117 = vmatmul.mubr.f32.gmra.mxu0 %v1050
  %v1118 = vpop.f32.mrf.mxu0
  %v1119 = vadd.f32 0.0, %v1118
  %v1120 = vpop.f32.mrf.mxu0
  %1121 = vdwg.mxu0
  %v1122 = vsel %vm411, %v1119, -1e+30
  %v1123 = vsel %vm793, %v1122, -inf
  %1124 = vmax.xlane.f32.xlu0 %v1123
  %v1125 = vpop.xlane.xlu0 %1124
  %v1126 = vsub.f32 %v1122, %v1125
  %v1127 = vmul.f32 %v1126, 1.442695
  %v1128 = vpow.pop %v1127
  %v1129 = vsel %vm793, %v1128, 0.0
  %1130 = vadd.xlane.f32.xlu0 %v1129
  %v1131 = vpop.xlane.xlu0 %1130
  %v1132 = vrcp.pop %v1131
  %v1133 = vmul.f32 %v1128, %v1132
  %v1135 = vsel %vm805, %v1133, 0
  %v1138 = vsel %vm809, %v719, 0
  %1140 = vmatprep.subr.mxu0 0.0
  %1141 = vmatpush1.msra.mxu0 0.0
  %1142 = vmatprep.subr.mxu0 0.0
  %1143 = vmatpush1.msra.mxu0 0.0
  %1144 = vmatprep.subr.mxu0 0.0
  %1145 = vmatpush1.msra.mxu0 0.0
  %1146 = vmatprep.subr.mxu0 0.0
  %1147 = vmatpush1.msra.mxu0 0.0
  %1148 = vmatprep.subr.mxu0 0.0
  %1149 = vmatpush1.msra.mxu0 0.0
  %1150 = vmatprep.subr.mxu0 0.0
  %1151 = vmatpush1.msra.mxu0 0.0
  %1152 = vmatprep.subr.mxu0 0.0
  %1153 = vmatpush1.msra.mxu0 0.0
  %1154 = vmatprep.subr.mxu0 0.0
  %1155 = vmatpush1.msra.mxu0 0.0
  %1156 = vmatprep.subr.mxu0 0.0
  %1157 = vmatpush1.msra.mxu0 0.0
  %1158 = vmatprep.subr.mxu0 0.0
  %1159 = vmatpush1.msra.mxu0 0.0
  %1160 = vmatprep.subr.mxu0 0.0
  %1161 = vmatpush1.msra.mxu0 0.0
  %1162 = vmatprep.subr.mxu0 0.0
  %1163 = vmatpush1.msra.mxu0 0.0
  %1164 = vmatprep.subr.mxu0 0.0
  %1165 = vmatpush1.msra.mxu0 0.0
  %1166 = vmatprep.subr.mxu0 0.0
  %1167 = vmatpush1.msra.mxu0 0.0
  %1168 = vmatprep.subr.mxu0 0.0
  %1169 = vmatpush1.msra.mxu0 0.0
  %1170 = vmatprep.subr.mxu0 0.0
  %1171 = vmatpush1.msra.mxu0 %v1138
  %1172 = vmatprep.subr.mxu0 0.0
  %1173 = vmatpush2.msra.mxu0 0.0
  %1174 = vmatprep.subr.mxu0 0.0
  %1175 = vmatpush2.msra.mxu0 0.0
  %1176 = vmatprep.subr.mxu0 0.0
  %1177 = vmatpush2.msra.mxu0 0.0
  %1178 = vmatprep.subr.mxu0 0.0
  %1179 = vmatpush2.msra.mxu0 0.0
  %1180 = vmatprep.subr.mxu0 0.0
  %1181 = vmatpush2.msra.mxu0 0.0
  %1182 = vmatprep.subr.mxu0 0.0
  %1183 = vmatpush2.msra.mxu0 0.0
  %1184 = vmatprep.subr.mxu0 0.0
  %1185 = vmatpush2.msra.mxu0 0.0
  %1186 = vmatprep.subr.mxu0 0.0
  %1187 = vmatpush2.msra.mxu0 0.0
  %1188 = vmatprep.subr.mxu0 0.0
  %1189 = vmatpush2.msra.mxu0 0.0
  %1190 = vmatprep.subr.mxu0 0.0
  %1191 = vmatpush2.msra.mxu0 0.0
  %1192 = vmatprep.subr.mxu0 0.0
  %1193 = vmatpush2.msra.mxu0 0.0
  %1194 = vmatprep.subr.mxu0 0.0
  %1195 = vmatpush2.msra.mxu0 0.0
  %1196 = vmatprep.subr.mxu0 0.0
  %1197 = vmatpush2.msra.mxu0 0.0
  %1198 = vmatprep.subr.mxu0 0.0
  %1199 = vmatpush2.msra.mxu0 0.0
  %1200 = vmatprep.subr.mxu0 0.0
  %1201 = vmatpush2.msra.mxu0 0.0
  %1202 = vmatprep.subr.mxu0 0.0
  %1203 = vmatpush2.msra.mxu0 0.0
  %1204 = vmatprep.mubr.f32.mxu0 0.0
  %1205 = vmatmul.mubr.f32.gmra.mxu0 %v1135
  %v1206 = vpop.f32.mrf.mxu0
  %v1207 = vadd.f32 0.0, %v1206
  %v1208 = vpop.f32.mrf.mxu0
  %1209 = vdwg.mxu0
  %v1210 = vld [vmem:[%s4] sm:$0xff]
  %v1211 = vld [vmem:[%s4 + $0x8] sm:$0xff]
  %v1212 = vld [vmem:[%s4 + $0x10] sm:$0xff]
  %v1213 = vld [vmem:[%s4 + $0x18] sm:$0xff]
  %v1214 = vld [vmem:[%s4 + $0x20] sm:$0xff]
  %v1215 = vld [vmem:[%s4 + $0x28] sm:$0xff]
  %v1216 = vld [vmem:[%s4 + $0x30] sm:$0xff]
  %v1217 = vld [vmem:[%s4 + $0x38] sm:$0xff]
  %v1218 = vld [vmem:[%s4 + $0x40] sm:$0xff]
  %v1219 = vld [vmem:[%s4 + $0x48] sm:$0xff]
  %v1220 = vld [vmem:[%s4 + $0x50] sm:$0xff]
  %v1221 = vld [vmem:[%s4 + $0x58] sm:$0xff]
  %v1222 = vld [vmem:[%s4 + $0x60] sm:$0xff]
  %v1223 = vld [vmem:[%s4 + $0x68] sm:$0xff]
  %v1224 = vld [vmem:[%s4 + $0x70] sm:$0xff]
  %v1225 = vld [vmem:[%s4 + $0x78] sm:$0xff]
  %v1226 = vld [vmem:[%s4 + $0x80] sm:$0xff]
  %v1227 = vld [vmem:[%s4 + $0x88] sm:$0xff]
  %v1228 = vld [vmem:[%s4 + $0x90] sm:$0xff]
  %v1229 = vld [vmem:[%s4 + $0x98] sm:$0xff]
  %v1230 = vld [vmem:[%s4 + $0xa0] sm:$0xff]
  %v1231 = vld [vmem:[%s4 + $0xa8] sm:$0xff]
  %v1232 = vld [vmem:[%s4 + $0xb0] sm:$0xff]
  %v1233 = vld [vmem:[%s4 + $0xb8] sm:$0xff]
  %v1234 = vld [vmem:[%s4 + $0xc0] sm:$0xff]
  %v1235 = vld [vmem:[%s4 + $0xc8] sm:$0xff]
  %v1236 = vld [vmem:[%s4 + $0xd0] sm:$0xff]
  %v1237 = vld [vmem:[%s4 + $0xd8] sm:$0xff]
  %v1238 = vld [vmem:[%s4 + $0xe0] sm:$0xff]
  %v1239 = vld [vmem:[%s4 + $0xe8] sm:$0xff]
  %v1240 = vld [vmem:[%s4 + $0xf0] sm:$0xff]
  %v1241 = vld [vmem:[%s4 + $0xf8] sm:$0xff]
  %v1242 = vld [vmem:[%s4 + $0x100] sm:$0xff]
  %v1243 = vld [vmem:[%s4 + $0x108] sm:$0xff]
  %v1244 = vld [vmem:[%s4 + $0x110] sm:$0xff]
  %v1245 = vld [vmem:[%s4 + $0x118] sm:$0xff]
  %v1246 = vld [vmem:[%s4 + $0x120] sm:$0xff]
  %v1247 = vld [vmem:[%s4 + $0x128] sm:$0xff]
  %v1248 = vld [vmem:[%s4 + $0x130] sm:$0xff]
  %v1249 = vld [vmem:[%s4 + $0x138] sm:$0xff]
  %v1250 = vld [vmem:[%s4 + $0x140] sm:$0xff]
  %v1251 = vld [vmem:[%s4 + $0x148] sm:$0xff]
  %v1252 = vld [vmem:[%s4 + $0x150] sm:$0xff]
  %v1253 = vld [vmem:[%s4 + $0x158] sm:$0xff]
  %v1254 = vld [vmem:[%s4 + $0x160] sm:$0xff]
  %v1255 = vld [vmem:[%s4 + $0x168] sm:$0xff]
  %v1256 = vld [vmem:[%s4 + $0x170] sm:$0xff]
  %v1257 = vld [vmem:[%s4 + $0x178] sm:$0xff]
  %v1258 = vld [vmem:[%s4 + $0x180] sm:$0xff]
  %v1259 = vld [vmem:[%s4 + $0x188] sm:$0xff]
  %v1260 = vld [vmem:[%s4 + $0x190] sm:$0xff]
  %v1261 = vld [vmem:[%s4 + $0x198] sm:$0xff]
  %v1262 = vld [vmem:[%s4 + $0x1a0] sm:$0xff]
  %v1263 = vld [vmem:[%s4 + $0x1a8] sm:$0xff]
  %v1264 = vld [vmem:[%s4 + $0x1b0] sm:$0xff]
  %v1265 = vld [vmem:[%s4 + $0x1b8] sm:$0xff]
  %v1266 = vld [vmem:[%s4 + $0x1c0] sm:$0xff]
  %v1267 = vld [vmem:[%s4 + $0x1c8] sm:$0xff]
  %v1268 = vld [vmem:[%s4 + $0x1d0] sm:$0xff]
  %v1269 = vld [vmem:[%s4 + $0x1d8] sm:$0xff]
  %v1270 = vld [vmem:[%s4 + $0x1e0] sm:$0xff]
  %v1271 = vld [vmem:[%s4 + $0x1e8] sm:$0xff]
  %v1272 = vld [vmem:[%s4 + $0x1f0] sm:$0xff]
  %v1273 = vld [vmem:[%s4 + $0x1f8] sm:$0xff]
  %v1274 = vld [vmem:[%s4 + $0x200] sm:$0xff]
  %v1275 = vld [vmem:[%s4 + $0x208] sm:$0xff]
  %v1276 = vld [vmem:[%s4 + $0x210] sm:$0xff]
  %v1277 = vld [vmem:[%s4 + $0x218] sm:$0xff]
  %v1278 = vld [vmem:[%s4 + $0x220] sm:$0xff]
  %v1279 = vld [vmem:[%s4 + $0x228] sm:$0xff]
  %v1280 = vld [vmem:[%s4 + $0x230] sm:$0xff]
  %v1281 = vld [vmem:[%s4 + $0x238] sm:$0xff]
  %v1282 = vld [vmem:[%s4 + $0x240] sm:$0xff]
  %v1283 = vld [vmem:[%s4 + $0x248] sm:$0xff]
  %v1284 = vld [vmem:[%s4 + $0x250] sm:$0xff]
  %v1285 = vld [vmem:[%s4 + $0x258] sm:$0xff]
  %v1286 = vld [vmem:[%s4 + $0x260] sm:$0xff]
  %v1287 = vld [vmem:[%s4 + $0x268] sm:$0xff]
  %v1288 = vld [vmem:[%s4 + $0x270] sm:$0xff]
  %v1289 = vld [vmem:[%s4 + $0x278] sm:$0xff]
  %v1290 = vld [vmem:[%s4 + $0x280] sm:$0xff]
  %v1291 = vld [vmem:[%s4 + $0x288] sm:$0xff]
  %v1292 = vld [vmem:[%s4 + $0x290] sm:$0xff]
  %v1293 = vld [vmem:[%s4 + $0x298] sm:$0xff]
  %v1294 = vld [vmem:[%s4 + $0x2a0] sm:$0xff]
  %v1295 = vld [vmem:[%s4 + $0x2a8] sm:$0xff]
  %v1296 = vld [vmem:[%s4 + $0x2b0] sm:$0xff]
  %v1297 = vld [vmem:[%s4 + $0x2b8] sm:$0xff]
  %v1298 = vld [vmem:[%s4 + $0x2c0] sm:$0xff]
  %v1299 = vld [vmem:[%s4 + $0x2c8] sm:$0xff]
  %v1300 = vld [vmem:[%s4 + $0x2d0] sm:$0xff]
  %v1301 = vld [vmem:[%s4 + $0x2d8] sm:$0xff]
  %v1302 = vld [vmem:[%s4 + $0x2e0] sm:$0xff]
  %v1303 = vld [vmem:[%s4 + $0x2e8] sm:$0xff]
  %v1304 = vld [vmem:[%s4 + $0x2f0] sm:$0xff]
  %v1305 = vld [vmem:[%s4 + $0x2f8] sm:$0xff]
  %1306 = vmatprep.subr.mxu0 %v1241
  %1307 = vmatpush1.msra.mxu0 %v1240
  %1308 = vmatprep.subr.mxu0 %v1239
  %1309 = vmatpush1.msra.mxu0 %v1238
  %1310 = vmatprep.subr.mxu0 %v1237
  %1311 = vmatpush1.msra.mxu0 %v1236
  %1312 = vmatprep.subr.mxu0 %v1235
  %1313 = vmatpush1.msra.mxu0 %v1234
  %1314 = vmatprep.subr.mxu0 %v1233
  %1315 = vmatpush1.msra.mxu0 %v1232
  %1316 = vmatprep.subr.mxu0 %v1231
  %1317 = vmatpush1.msra.mxu0 %v1230
  %1318 = vmatprep.subr.mxu0 %v1229
  %1319 = vmatpush1.msra.mxu0 %v1228
  %1320 = vmatprep.subr.mxu0 %v1227
  %1321 = vmatpush1.msra.mxu0 %v1226
  %1322 = vmatprep.subr.mxu0 %v1225
  %1323 = vmatpush1.msra.mxu0 %v1224
  %1324 = vmatprep.subr.mxu0 %v1223
  %1325 = vmatpush1.msra.mxu0 %v1222
  %1326 = vmatprep.subr.mxu0 %v1221
  %1327 = vmatpush1.msra.mxu0 %v1220
  %1328 = vmatprep.subr.mxu0 %v1219
  %1329 = vmatpush1.msra.mxu0 %v1218
  %1330 = vmatprep.subr.mxu0 %v1217
  %1331 = vmatpush1.msra.mxu0 %v1216
  %1332 = vmatprep.subr.mxu0 %v1215
  %1333 = vmatpush1.msra.mxu0 %v1214
  %1334 = vmatprep.subr.mxu0 %v1213
  %1335 = vmatpush1.msra.mxu0 %v1212
  %1336 = vmatprep.subr.mxu0 %v1211
  %1337 = vmatpush1.msra.mxu0 %v1210
  %1338 = vmatprep.subr.mxu0 %v1273
  %1339 = vmatpush2.msra.mxu0 %v1272
  %1340 = vmatprep.subr.mxu0 %v1271
  %1341 = vmatpush2.msra.mxu0 %v1270
  %1342 = vmatprep.subr.mxu0 %v1269
  %1343 = vmatpush2.msra.mxu0 %v1268
  %1344 = vmatprep.subr.mxu0 %v1267
  %1345 = vmatpush2.msra.mxu0 %v1266
  %1346 = vmatprep.subr.mxu0 %v1265
  %1347 = vmatpush2.msra.mxu0 %v1264
  %1348 = vmatprep.subr.mxu0 %v1263
  %1349 = vmatpush2.msra.mxu0 %v1262
  %1350 = vmatprep.subr.mxu0 %v1261
  %1351 = vmatpush2.msra.mxu0 %v1260
  %1352 = vmatprep.subr.mxu0 %v1259
  %1353 = vmatpush2.msra.mxu0 %v1258
  %1354 = vmatprep.subr.mxu0 %v1257
  %1355 = vmatpush2.msra.mxu0 %v1256
  %1356 = vmatprep.subr.mxu0 %v1255
  %1357 = vmatpush2.msra.mxu0 %v1254
  %1358 = vmatprep.subr.mxu0 %v1253
  %1359 = vmatpush2.msra.mxu0 %v1252
  %1360 = vmatprep.subr.mxu0 %v1251
  %1361 = vmatpush2.msra.mxu0 %v1250
  %1362 = vmatprep.subr.mxu0 %v1249
  %1363 = vmatpush2.msra.mxu0 %v1248
  %1364 = vmatprep.subr.mxu0 %v1247
  %1365 = vmatpush2.msra.mxu0 %v1246
  %1366 = vmatprep.subr.mxu0 %v1245
  %1367 = vmatpush2.msra.mxu0 %v1244
  %1368 = vmatprep.subr.mxu0 %v1243
  %1369 = vmatpush2.msra.mxu0 %v1242
  %1370 = vmatprep.mubr.f32.mxu0 %v1044
  %1371 = vmatmul.mubr.f32.gmra.mxu0 %v880
  %v1372 = vpop.f32.mrf.mxu0
  %v1373 = vadd.f32 0.0, %v1372
  %v1374 = vpop.f32.mrf.mxu0
  %v1375 = vadd.f32 0.0, %v1374
  %1376 = vdwg.mxu0
  %1377 = vmatprep.subr.mxu0 %v1305
  %1378 = vmatpush1.msra.mxu0 %v1304
  %1379 = vmatprep.subr.mxu0 %v1303
  %1380 = vmatpush1.msra.mxu0 %v1302
  %1381 = vmatprep.subr.mxu0 %v1301
  %1382 = vmatpush1.msra.mxu0 %v1300
  %1383 = vmatprep.subr.mxu0 %v1299
  %1384 = vmatpush1.msra.mxu0 %v1298
  %1385 = vmatprep.subr.mxu0 %v1297
  %1386 = vmatpush1.msra.mxu0 %v1296
  %1387 = vmatprep.subr.mxu0 %v1295
  %1388 = vmatpush1.msra.mxu0 %v1294
  %1389 = vmatprep.subr.mxu0 %v1293
  %1390 = vmatpush1.msra.mxu0 %v1292
  %1391 = vmatprep.subr.mxu0 %v1291
  %1392 = vmatpush1.msra.mxu0 %v1290
  %1393 = vmatprep.subr.mxu0 %v1289
  %1394 = vmatpush1.msra.mxu0 %v1288
  %1395 = vmatprep.subr.mxu0 %v1287
  %1396 = vmatpush1.msra.mxu0 %v1286
  %1397 = vmatprep.subr.mxu0 %v1285
  %1398 = vmatpush1.msra.mxu0 %v1284
  %1399 = vmatprep.subr.mxu0 %v1283
  %1400 = vmatpush1.msra.mxu0 %v1282
  %1401 = vmatprep.subr.mxu0 %v1281
  %1402 = vmatpush1.msra.mxu0 %v1280
  %1403 = vmatprep.subr.mxu0 %v1279
  %1404 = vmatpush1.msra.mxu0 %v1278
  %1405 = vmatprep.subr.mxu0 %v1277
  %1406 = vmatpush1.msra.mxu0 %v1276
  %1407 = vmatprep.subr.mxu0 %v1275
  %1408 = vmatpush1.msra.mxu0 %v1274
  %1409 = vmatprep.subr.mxu0 0.0
  %1410 = vmatpush2.msra.mxu0 0.0
  %1411 = vmatprep.subr.mxu0 0.0
  %1412 = vmatpush2.msra.mxu0 0.0
  %1413 = vmatprep.subr.mxu0 0.0
  %1414 = vmatpush2.msra.mxu0 0.0
  %1415 = vmatprep.subr.mxu0 0.0
  %1416 = vmatpush2.msra.mxu0 0.0
  %1417 = vmatprep.subr.mxu0 0.0
  %1418 = vmatpush2.msra.mxu0 0.0
  %1419 = vmatprep.subr.mxu0 0.0
  %1420 = vmatpush2.msra.mxu0 0.0
  %1421 = vmatprep.subr.mxu0 0.0
  %1422 = vmatpush2.msra.mxu0 0.0
  %1423 = vmatprep.subr.mxu0 0.0
  %1424 = vmatpush2.msra.mxu0 0.0
  %1425 = vmatprep.subr.mxu0 0.0
  %1426 = vmatpush2.msra.mxu0 0.0
  %1427 = vmatprep.subr.mxu0 0.0
  %1428 = vmatpush2.msra.mxu0 0.0
  %1429 = vmatprep.subr.mxu0 0.0
  %1430 = vmatpush2.msra.mxu0 0.0
  %1431 = vmatprep.subr.mxu0 0.0
  %1432 = vmatpush2.msra.mxu0 0.0
  %1433 = vmatprep.subr.mxu0 0.0
  %1434 = vmatpush2.msra.mxu0 0.0
  %1435 = vmatprep.subr.mxu0 0.0
  %1436 = vmatpush2.msra.mxu0 0.0
  %1437 = vmatprep.subr.mxu0 0.0
  %1438 = vmatpush2.msra.mxu0 0.0
  %1439 = vmatprep.subr.mxu0 0.0
  %1440 = vmatpush2.msra.mxu0 0.0
  %1441 = vmatprep.mubr.f32.mxu0 0.0
  %1442 = vmatmul.mubr.f32.gmra.mxu0 %v1207
  %v1443 = vpop.f32.mrf.mxu0
  %v1444 = vadd.f32 %v1373, %v1443
  %v1445 = vpop.f32.mrf.mxu0
  %v1446 = vadd.f32 %v1375, %v1445
  %1447 = vdwg.mxu0
  %v1448 = vxor.u32 %v1444, 2147483648
  %v1449 = vxor.u32 %v1446, 2147483648
  %v1450 = vmul.f32 %v1448, 1.442695
  %v1451 = vpow.pop %v1450
  %v1452 = vmul.f32 %v1449, 1.442695
  %v1453 = vpow.pop %v1452
  %v1454 = vadd.f32 %v1451, 1.0
  %v1455 = vadd.f32 %v1453, 1.0
  %v1456 = vrcp.pop %v1454
  %v1457 = vmul.f32 1.0, %v1456
  %v1458 = vrcp.pop %v1455
  %v1459 = vmul.f32 1.0, %v1458
  %v1460 = vld [vmem:[%s5] sm:$0xff]
  %v1461 = vld [vmem:[%s5 + $0x8] sm:$0xff]
  %v1462 = vld [vmem:[%s5 + $0x10] sm:$0xff]
  %v1463 = vld [vmem:[%s5 + $0x18] sm:$0xff]
  %v1464 = vld [vmem:[%s5 + $0x20] sm:$0xff]
  %v1465 = vld [vmem:[%s5 + $0x28] sm:$0xff]
  %v1466 = vld [vmem:[%s5 + $0x30] sm:$0xff]
  %v1467 = vld [vmem:[%s5 + $0x38] sm:$0xff]
  %v1468 = vld [vmem:[%s5 + $0x40] sm:$0xff]
  %v1469 = vld [vmem:[%s5 + $0x48] sm:$0xff]
  %v1470 = vld [vmem:[%s5 + $0x50] sm:$0xff]
  %v1471 = vld [vmem:[%s5 + $0x58] sm:$0xff]
  %v1472 = vld [vmem:[%s5 + $0x60] sm:$0xff]
  %v1473 = vld [vmem:[%s5 + $0x68] sm:$0xff]
  %v1474 = vld [vmem:[%s5 + $0x70] sm:$0xff]
  %v1475 = vld [vmem:[%s5 + $0x78] sm:$0xff]
  %v1476 = vld [vmem:[%s5 + $0x80] sm:$0xff]
  %v1477 = vld [vmem:[%s5 + $0x88] sm:$0xff]
  %v1478 = vld [vmem:[%s5 + $0x90] sm:$0xff]
  %v1479 = vld [vmem:[%s5 + $0x98] sm:$0xff]
  %v1480 = vld [vmem:[%s5 + $0xa0] sm:$0xff]
  %v1481 = vld [vmem:[%s5 + $0xa8] sm:$0xff]
  %v1482 = vld [vmem:[%s5 + $0xb0] sm:$0xff]
  %v1483 = vld [vmem:[%s5 + $0xb8] sm:$0xff]
  %v1484 = vld [vmem:[%s5 + $0xc0] sm:$0xff]
  %v1485 = vld [vmem:[%s5 + $0xc8] sm:$0xff]
  %v1486 = vld [vmem:[%s5 + $0xd0] sm:$0xff]
  %v1487 = vld [vmem:[%s5 + $0xd8] sm:$0xff]
  %v1488 = vld [vmem:[%s5 + $0xe0] sm:$0xff]
  %v1489 = vld [vmem:[%s5 + $0xe8] sm:$0xff]
  %v1490 = vld [vmem:[%s5 + $0xf0] sm:$0xff]
  %v1491 = vld [vmem:[%s5 + $0xf8] sm:$0xff]
  %1492 = vmatprep.subr.mxu0 0.0
  %1493 = vmatpush1.msra.mxu0 %v1475
  %1494 = vmatprep.subr.mxu0 0.0
  %1495 = vmatpush1.msra.mxu0 %v1474
  %1496 = vmatprep.subr.mxu0 0.0
  %1497 = vmatpush1.msra.mxu0 %v1473
  %1498 = vmatprep.subr.mxu0 0.0
  %1499 = vmatpush1.msra.mxu0 %v1472
  %1500 = vmatprep.subr.mxu0 0.0
  %1501 = vmatpush1.msra.mxu0 %v1471
  %1502 = vmatprep.subr.mxu0 0.0
  %1503 = vmatpush1.msra.mxu0 %v1470
  %1504 = vmatprep.subr.mxu0 0.0
  %1505 = vmatpush1.msra.mxu0 %v1469
  %1506 = vmatprep.subr.mxu0 0.0
  %1507 = vmatpush1.msra.mxu0 %v1468
  %1508 = vmatprep.subr.mxu0 0.0
  %1509 = vmatpush1.msra.mxu0 %v1467
  %1510 = vmatprep.subr.mxu0 0.0
  %1511 = vmatpush1.msra.mxu0 %v1466
  %1512 = vmatprep.subr.mxu0 0.0
  %1513 = vmatpush1.msra.mxu0 %v1465
  %1514 = vmatprep.subr.mxu0 0.0
  %1515 = vmatpush1.msra.mxu0 %v1464
  %1516 = vmatprep.subr.mxu0 0.0
  %1517 = vmatpush1.msra.mxu0 %v1463
  %1518 = vmatprep.subr.mxu0 0.0
  %1519 = vmatpush1.msra.mxu0 %v1462
  %1520 = vmatprep.subr.mxu0 0.0
  %1521 = vmatpush1.msra.mxu0 %v1461
  %1522 = vmatprep.subr.mxu0 0.0
  %1523 = vmatpush1.msra.mxu0 %v1460
  %1524 = vmatprep.subr.mxu0 0.0
  %1525 = vmatpush2.msra.mxu0 %v1491
  %1526 = vmatprep.subr.mxu0 0.0
  %1527 = vmatpush2.msra.mxu0 %v1490
  %1528 = vmatprep.subr.mxu0 0.0
  %1529 = vmatpush2.msra.mxu0 %v1489
  %1530 = vmatprep.subr.mxu0 0.0
  %1531 = vmatpush2.msra.mxu0 %v1488
  %1532 = vmatprep.subr.mxu0 0.0
  %1533 = vmatpush2.msra.mxu0 %v1487
  %1534 = vmatprep.subr.mxu0 0.0
  %1535 = vmatpush2.msra.mxu0 %v1486
  %1536 = vmatprep.subr.mxu0 0.0
  %1537 = vmatpush2.msra.mxu0 %v1485
  %1538 = vmatprep.subr.mxu0 0.0
  %1539 = vmatpush2.msra.mxu0 %v1484
  %1540 = vmatprep.subr.mxu0 0.0
  %1541 = vmatpush2.msra.mxu0 %v1483
  %1542 = vmatprep.subr.mxu0 0.0
  %1543 = vmatpush2.msra.mxu0 %v1482
  %1544 = vmatprep.subr.mxu0 0.0
  %1545 = vmatpush2.msra.mxu0 %v1481
  %1546 = vmatprep.subr.mxu0 0.0
  %1547 = vmatpush2.msra.mxu0 %v1480
  %1548 = vmatprep.subr.mxu0 0.0
  %1549 = vmatpush2.msra.mxu0 %v1479
  %1550 = vmatprep.subr.mxu0 0.0
  %1551 = vmatpush2.msra.mxu0 %v1478
  %1552 = vmatprep.subr.mxu0 0.0
  %1553 = vmatpush2.msra.mxu0 %v1477
  %1554 = vmatprep.subr.mxu0 0.0
  %1555 = vmatpush2.msra.mxu0 %v1476
  %1556 = vmatprep.mubr.f32.mxu0 %v1459
  %1557 = vmatmul.mubr.f32.gmra.mxu0 %v1457
  %v1558 = vpop.f32.mrf.mxu0
  %v1559 = vadd.f32 0.0, %v1558
  %v1560 = vpop.f32.mrf.mxu0
  %1561 = vdwg.mxu0
  %v1562 = vxor.u32 %v1559, 2147483648
  %v1563 = vmul.f32 %v1562, 1.442695
  %v1564 = vpow.pop %v1563
  %v1565 = vadd.f32 %v1564, 1.0
  %v1566 = vrcp.pop %v1565
  %v1567 = vmul.f32 1.0, %v1566
  %1568 = vst [vmem:[#allocation2 + $0x1] sm:$0x1] %v1567
  %s1569 = sld [smem:[#allocation5 + $0x80]]
  %s1570 = scalar_lea.vmem [#allocation2], %s1569
  %v1571 = vld [vmem:[%s1570] sm:$0x1]
  %1572 = vst [vmem:[#allocation3] sm:$0x1] %v1571
  %s1573 = sld [smem:[#allocation5 + $0x81]]
  %s1574 = scalar_lea.vmem [#allocation2], %s1573
  %v1575 = vld [vmem:[%s1574] sm:$0x1]
  %1576 = vst [vmem:[#allocation3 + $0x1] sm:$0x1] %v1575
  %s1577 = sld [smem:[#allocation5 + $0x82]]
  %s1578 = scalar_lea.vmem [#allocation2], %s1577
  %v1579 = vld [vmem:[%s1578] sm:$0x1]
  %1580 = vst [vmem:[#allocation3 + $0x2] sm:$0x1] %v1579
  %v1581 = vld [vmem:[#allocation3] sm:$0x7]
  %s1582 = sld [smem:[#allocation6 + $0x1]]
  %v1583 = vstv %s1582
  %vm1584 = vcmp.lt.s32.totalorder %v395, %v1583
  %v1585 = vld [vmem:[%s3] sm:$0xff]
  %v1586 = vld [vmem:[%s3 + $0x8] sm:$0xff]
  %v1587 = vld [vmem:[%s3 + $0x10] sm:$0xff]
  %v1588 = vld [vmem:[%s3 + $0x18] sm:$0xff]
  %v1589 = vld [vmem:[%s3 + $0x20] sm:$0xff]
  %v1590 = vld [vmem:[%s3 + $0x28] sm:$0xff]
  %v1591 = vld [vmem:[%s3 + $0x30] sm:$0xff]
  %v1592 = vld [vmem:[%s3 + $0x38] sm:$0xff]
  %v1593 = vld [vmem:[%s3 + $0x40] sm:$0xff]
  %v1594 = vld [vmem:[%s3 + $0x48] sm:$0xff]
  %v1595 = vld [vmem:[%s3 + $0x50] sm:$0xff]
  %v1596 = vld [vmem:[%s3 + $0x58] sm:$0xff]
  %v1597 = vld [vmem:[%s3 + $0x60] sm:$0xff]
  %v1598 = vld [vmem:[%s3 + $0x68] sm:$0xff]
  %v1599 = vld [vmem:[%s3 + $0x70] sm:$0xff]
  %v1600 = vld [vmem:[%s3 + $0x78] sm:$0xff]
  %v1601 = vld [vmem:[%s3 + $0x80] sm:$0xff]
  %v1602 = vld [vmem:[%s3 + $0x88] sm:$0xff]
  %v1603 = vld [vmem:[%s3 + $0x90] sm:$0xff]
  %v1604 = vld [vmem:[%s3 + $0x98] sm:$0xff]
  %v1605 = vld [vmem:[%s3 + $0xa0] sm:$0xff]
  %v1606 = vld [vmem:[%s3 + $0xa8] sm:$0xff]
  %v1607 = vld [vmem:[%s3 + $0xb0] sm:$0xff]
  %v1608 = vld [vmem:[%s3 + $0xb8] sm:$0xff]
  %v1609 = vld [vmem:[%s3 + $0xc0] sm:$0xff]
  %v1610 = vld [vmem:[%s3 + $0xc8] sm:$0xff]
  %v1611 = vld [vmem:[%s3 + $0xd0] sm:$0xff]
  %v1612 = vld [vmem:[%s3 + $0xd8] sm:$0xff]
  %v1613 = vld [vmem:[%s3 + $0xe0] sm:$0xff]
  %v1614 = vld [vmem:[%s3 + $0xe8] sm:$0xff]
  %v1615 = vld [vmem:[%s3 + $0xf0] sm:$0xff]
  %v1616 = vld [vmem:[%s3 + $0xf8] sm:$0xff]
  %v1617 = vld [vmem:[%s3 + $0x100] sm:$0xff]
  %v1618 = vld [vmem:[%s3 + $0x108] sm:$0xff]
  %v1619 = vld [vmem:[%s3 + $0x110] sm:$0xff]
  %v1620 = vld [vmem:[%s3 + $0x118] sm:$0xff]
  %v1621 = vld [vmem:[%s3 + $0x120] sm:$0xff]
  %v1622 = vld [vmem:[%s3 + $0x128] sm:$0xff]
  %v1623 = vld [vmem:[%s3 + $0x130] sm:$0xff]
  %v1624 = vld [vmem:[%s3 + $0x138] sm:$0xff]
  %v1625 = vld [vmem:[%s3 + $0x140] sm:$0xff]
  %v1626 = vld [vmem:[%s3 + $0x148] sm:$0xff]
  %v1627 = vld [vmem:[%s3 + $0x150] sm:$0xff]
  %v1628 = vld [vmem:[%s3 + $0x158] sm:$0xff]
  %v1629 = vld [vmem:[%s3 + $0x160] sm:$0xff]
  %v1630 = vld [vmem:[%s3 + $0x168] sm:$0xff]
  %v1631 = vld [vmem:[%s3 + $0x170] sm:$0xff]
  %v1632 = vld [vmem:[%s3 + $0x178] sm:$0xff]
  %v1633 = vld [vmem:[%s3 + $0x180] sm:$0xff]
  %v1634 = vld [vmem:[%s3 + $0x188] sm:$0xff]
  %v1635 = vld [vmem:[%s3 + $0x190] sm:$0xff]
  %v1636 = vld [vmem:[%s3 + $0x198] sm:$0xff]
  %v1637 = vld [vmem:[%s3 + $0x1a0] sm:$0xff]
  %v1638 = vld [vmem:[%s3 + $0x1a8] sm:$0xff]
  %v1639 = vld [vmem:[%s3 + $0x1b0] sm:$0xff]
  %v1640 = vld [vmem:[%s3 + $0x1b8] sm:$0xff]
  %v1641 = vld [vmem:[%s3 + $0x1c0] sm:$0xff]
  %v1642 = vld [vmem:[%s3 + $0x1c8] sm:$0xff]
  %v1643 = vld [vmem:[%s3 + $0x1d0] sm:$0xff]
  %v1644 = vld [vmem:[%s3 + $0x1d8] sm:$0xff]
  %v1645 = vld [vmem:[%s3 + $0x1e0] sm:$0xff]
  %v1646 = vld [vmem:[%s3 + $0x1e8] sm:$0xff]
  %v1647 = vld [vmem:[%s3 + $0x1f0] sm:$0xff]
  %v1648 = vld [vmem:[%s3 + $0x1f8] sm:$0xff]
  %v1649 = vld [vmem:[%s3 + $0x200] sm:$0xff]
  %v1650 = vld [vmem:[%s3 + $0x208] sm:$0xff]
  %v1651 = vld [vmem:[%s3 + $0x210] sm:$0xff]
  %v1652 = vld [vmem:[%s3 + $0x218] sm:$0xff]
  %v1653 = vld [vmem:[%s3 + $0x220] sm:$0xff]
  %v1654 = vld [vmem:[%s3 + $0x228] sm:$0xff]
  %v1655 = vld [vmem:[%s3 + $0x230] sm:$0xff]
  %v1656 = vld [vmem:[%s3 + $0x238] sm:$0xff]
  %v1657 = vld [vmem:[%s3 + $0x240] sm:$0xff]
  %v1658 = vld [vmem:[%s3 + $0x248] sm:$0xff]
  %v1659 = vld [vmem:[%s3 + $0x250] sm:$0xff]
  %v1660 = vld [vmem:[%s3 + $0x258] sm:$0xff]
  %v1661 = vld [vmem:[%s3 + $0x260] sm:$0xff]
  %v1662 = vld [vmem:[%s3 + $0x268] sm:$0xff]
  %v1663 = vld [vmem:[%s3 + $0x270] sm:$0xff]
  %v1664 = vld [vmem:[%s3 + $0x278] sm:$0xff]
  %v1665 = vld [vmem:[%s3 + $0x280] sm:$0xff]
  %v1666 = vld [vmem:[%s3 + $0x288] sm:$0xff]
  %v1667 = vld [vmem:[%s3 + $0x290] sm:$0xff]
  %v1668 = vld [vmem:[%s3 + $0x298] sm:$0xff]
  %v1669 = vld [vmem:[%s3 + $0x2a0] sm:$0xff]
  %v1670 = vld [vmem:[%s3 + $0x2a8] sm:$0xff]
  %v1671 = vld [vmem:[%s3 + $0x2b0] sm:$0xff]
  %v1672 = vld [vmem:[%s3 + $0x2b8] sm:$0xff]
  %v1673 = vld [vmem:[%s3 + $0x2c0] sm:$0xff]
  %v1674 = vld [vmem:[%s3 + $0x2c8] sm:$0xff]
  %v1675 = vld [vmem:[%s3 + $0x2d0] sm:$0xff]
  %v1676 = vld [vmem:[%s3 + $0x2d8] sm:$0xff]
  %v1677 = vld [vmem:[%s3 + $0x2e0] sm:$0xff]
  %v1678 = vld [vmem:[%s3 + $0x2e8] sm:$0xff]
  %v1679 = vld [vmem:[%s3 + $0x2f0] sm:$0xff]
  %v1680 = vld [vmem:[%s3 + $0x2f8] sm:$0xff]
  %1681 = vmatprep.subr.mxu0 %v1676
  %1682 = vmatpush1.msra.mxu0 %v1675
  %1683 = vmatprep.subr.mxu0 %v1670
  %1684 = vmatpush1.msra.mxu0 %v1669
  %1685 = vmatprep.subr.mxu0 %v1664
  %1686 = vmatpush1.msra.mxu0 %v1663
  %1687 = vmatprep.subr.mxu0 %v1658
  %1688 = vmatpush1.msra.mxu0 %v1657
  %1689 = vmatprep.subr.mxu0 %v1652
  %1690 = vmatpush1.msra.mxu0 %v1651
  %1691 = vmatprep.subr.mxu0 %v1646
  %1692 = vmatpush1.msra.mxu0 %v1645
  %1693 = vmatprep.subr.mxu0 %v1640
  %1694 = vmatpush1.msra.mxu0 %v1639
  %1695 = vmatprep.subr.mxu0 %v1634
  %1696 = vmatpush1.msra.mxu0 %v1633
  %1697 = vmatprep.subr.mxu0 %v1628
  %1698 = vmatpush1.msra.mxu0 %v1627
  %1699 = vmatprep.subr.mxu0 %v1622
  %1700 = vmatpush1.msra.mxu0 %v1621
  %1701 = vmatprep.subr.mxu0 %v1616
  %1702 = vmatpush1.msra.mxu0 %v1615
  %1703 = vmatprep.subr.mxu0 %v1610
  %1704 = vmatpush1.msra.mxu0 %v1609
  %1705 = vmatprep.subr.mxu0 %v1604
  %1706 = vmatpush1.msra.mxu0 %v1603
  %1707 = vmatprep.subr.mxu0 %v1598
  %1708 = vmatpush1.msra.mxu0 %v1597
  %1709 = vmatprep.subr.mxu0 %v1592
  %1710 = vmatpush1.msra.mxu0 %v1591
  %1711 = vmatprep.subr.mxu0 %v1586
  %1712 = vmatpush1.msra.mxu0 %v1585
  %1713 = vmatprep.subr.mxu0 0.0
  %1714 = vmatpush2.msra.mxu0 0.0
  %1715 = vmatprep.subr.mxu0 0.0
  %1716 = vmatpush2.msra.mxu0 0.0
  %1717 = vmatprep.subr.mxu0 0.0
  %1718 = vmatpush2.msra.mxu0 0.0
  %1719 = vmatprep.subr.mxu0 0.0
  %1720 = vmatpush2.msra.mxu0 0.0
  %1721 = vmatprep.subr.mxu0 0.0
  %1722 = vmatpush2.msra.mxu0 0.0
  %1723 = vmatprep.subr.mxu0 0.0
  %1724 = vmatpush2.msra.mxu0 0.0
  %1725 = vmatprep.subr.mxu0 0.0
  %1726 = vmatpush2.msra.mxu0 0.0
  %1727 = vmatprep.subr.mxu0 0.0
  %1728 = vmatpush2.msra.mxu0 0.0
  %1729 = vmatprep.subr.mxu0 0.0
  %1730 = vmatpush2.msra.mxu0 0.0
  %1731 = vmatprep.subr.mxu0 0.0
  %1732 = vmatpush2.msra.mxu0 0.0
  %1733 = vmatprep.subr.mxu0 0.0
  %1734 = vmatpush2.msra.mxu0 0.0
  %1735 = vmatprep.subr.mxu0 0.0
  %1736 = vmatpush2.msra.mxu0 0.0
  %1737 = vmatprep.subr.mxu0 0.0
  %1738 = vmatpush2.msra.mxu0 0.0
  %1739 = vmatprep.subr.mxu0 0.0
  %1740 = vmatpush2.msra.mxu0 0.0
  %1741 = vmatprep.subr.mxu0 0.0
  %1742 = vmatpush2.msra.mxu0 0.0
  %1743 = vmatprep.subr.mxu0 0.0
  %1744 = vmatpush2.msra.mxu0 0.0
  %1745 = vmatprep.mubr.f32.mxu0 0.0
  %1746 = vmatmul.mubr.f32.gmra.mxu0 %v1581
  %v1747 = vpop.f32.mrf.mxu0
  %v1748 = vadd.f32 0.0, %v1747
  %v1749 = vpop.f32.mrf.mxu0
  %v1750 = vadd.f32 0.0, %v1749
  %1751 = vdwg.mxu0
  %1752 = vmatprep.subr.mxu0 %v1678
  %1753 = vmatpush1.msra.mxu0 %v1677
  %1754 = vmatprep.subr.mxu0 %v1672
  %1755 = vmatpush1.msra.mxu0 %v1671
  %1756 = vmatprep.subr.mxu0 %v1666
  %1757 = vmatpush1.msra.mxu0 %v1665
  %1758 = vmatprep.subr.mxu0 %v1660
  %1759 = vmatpush1.msra.mxu0 %v1659
  %1760 = vmatprep.subr.mxu0 %v1654
  %1761 = vmatpush1.msra.mxu0 %v1653
  %1762 = vmatprep.subr.mxu0 %v1648
  %1763 = vmatpush1.msra.mxu0 %v1647
  %1764 = vmatprep.subr.mxu0 %v1642
  %1765 = vmatpush1.msra.mxu0 %v1641
  %1766 = vmatprep.subr.mxu0 %v1636
  %1767 = vmatpush1.msra.mxu0 %v1635
  %1768 = vmatprep.subr.mxu0 %v1630
  %1769 = vmatpush1.msra.mxu0 %v1629
  %1770 = vmatprep.subr.mxu0 %v1624
  %1771 = vmatpush1.msra.mxu0 %v1623
  %1772 = vmatprep.subr.mxu0 %v1618
  %1773 = vmatpush1.msra.mxu0 %v1617
  %1774 = vmatprep.subr.mxu0 %v1612
  %1775 = vmatpush1.msra.mxu0 %v1611
  %1776 = vmatprep.subr.mxu0 %v1606
  %1777 = vmatpush1.msra.mxu0 %v1605
  %1778 = vmatprep.subr.mxu0 %v1600
  %1779 = vmatpush1.msra.mxu0 %v1599
  %1780 = vmatprep.subr.mxu0 %v1594
  %1781 = vmatpush1.msra.mxu0 %v1593
  %1782 = vmatprep.subr.mxu0 %v1588
  %1783 = vmatpush1.msra.mxu0 %v1587
  %1784 = vmatprep.subr.mxu0 0.0
  %1785 = vmatpush2.msra.mxu0 0.0
  %1786 = vmatprep.subr.mxu0 0.0
  %1787 = vmatpush2.msra.mxu0 0.0
  %1788 = vmatprep.subr.mxu0 0.0
  %1789 = vmatpush2.msra.mxu0 0.0
  %1790 = vmatprep.subr.mxu0 0.0
  %1791 = vmatpush2.msra.mxu0 0.0
  %1792 = vmatprep.subr.mxu0 0.0
  %1793 = vmatpush2.msra.mxu0 0.0
  %1794 = vmatprep.subr.mxu0 0.0
  %1795 = vmatpush2.msra.mxu0 0.0
  %1796 = vmatprep.subr.mxu0 0.0
  %1797 = vmatpush2.msra.mxu0 0.0
  %1798 = vmatprep.subr.mxu0 0.0
  %1799 = vmatpush2.msra.mxu0 0.0
  %1800 = vmatprep.subr.mxu0 0.0
  %1801 = vmatpush2.msra.mxu0 0.0
  %1802 = vmatprep.subr.mxu0 0.0
  %1803 = vmatpush2.msra.mxu0 0.0
  %1804 = vmatprep.subr.mxu0 0.0
  %1805 = vmatpush2.msra.mxu0 0.0
  %1806 = vmatprep.subr.mxu0 0.0
  %1807 = vmatpush2.msra.mxu0 0.0
  %1808 = vmatprep.subr.mxu0 0.0
  %1809 = vmatpush2.msra.mxu0 0.0
  %1810 = vmatprep.subr.mxu0 0.0
  %1811 = vmatpush2.msra.mxu0 0.0
  %1812 = vmatprep.subr.mxu0 0.0
  %1813 = vmatpush2.msra.mxu0 0.0
  %1814 = vmatprep.subr.mxu0 0.0
  %1815 = vmatpush2.msra.mxu0 0.0
  %1816 = vmatprep.mubr.f32.mxu0 0.0
  %1817 = vmatmul.mubr.f32.gmra.mxu0 %v1581
  %v1818 = vpop.f32.mrf.mxu0
  %v1819 = vadd.f32 0.0, %v1818
  %v1820 = vpop.f32.mrf.mxu0
  %v1821 = vadd.f32 0.0, %v1820
  %1822 = vdwg.mxu0
  %1823 = vmatprep.subr.mxu0 %v1680
  %1824 = vmatpush1.msra.mxu0 %v1679
  %1825 = vmatprep.subr.mxu0 %v1674
  %1826 = vmatpush1.msra.mxu0 %v1673
  %1827 = vmatprep.subr.mxu0 %v1668
  %1828 = vmatpush1.msra.mxu0 %v1667
  %1829 = vmatprep.subr.mxu0 %v1662
  %1830 = vmatpush1.msra.mxu0 %v1661
  %1831 = vmatprep.subr.mxu0 %v1656
  %1832 = vmatpush1.msra.mxu0 %v1655
  %1833 = vmatprep.subr.mxu0 %v1650
  %1834 = vmatpush1.msra.mxu0 %v1649
  %1835 = vmatprep.subr.mxu0 %v1644
  %1836 = vmatpush1.msra.mxu0 %v1643
  %1837 = vmatprep.subr.mxu0 %v1638
  %1838 = vmatpush1.msra.mxu0 %v1637
  %1839 = vmatprep.subr.mxu0 %v1632
  %1840 = vmatpush1.msra.mxu0 %v1631
  %1841 = vmatprep.subr.mxu0 %v1626
  %1842 = vmatpush1.msra.mxu0 %v1625
  %1843 = vmatprep.subr.mxu0 %v1620
  %1844 = vmatpush1.msra.mxu0 %v1619
  %1845 = vmatprep.subr.mxu0 %v1614
  %1846 = vmatpush1.msra.mxu0 %v1613
  %1847 = vmatprep.subr.mxu0 %v1608
  %1848 = vmatpush1.msra.mxu0 %v1607
  %1849 = vmatprep.subr.mxu0 %v1602
  %1850 = vmatpush1.msra.mxu0 %v1601
  %1851 = vmatprep.subr.mxu0 %v1596
  %1852 = vmatpush1.msra.mxu0 %v1595
  %1853 = vmatprep.subr.mxu0 %v1590
  %1854 = vmatpush1.msra.mxu0 %v1589
  %1855 = vmatprep.subr.mxu0 0.0
  %1856 = vmatpush2.msra.mxu0 0.0
  %1857 = vmatprep.subr.mxu0 0.0
  %1858 = vmatpush2.msra.mxu0 0.0
  %1859 = vmatprep.subr.mxu0 0.0
  %1860 = vmatpush2.msra.mxu0 0.0
  %1861 = vmatprep.subr.mxu0 0.0
  %1862 = vmatpush2.msra.mxu0 0.0
  %1863 = vmatprep.subr.mxu0 0.0
  %1864 = vmatpush2.msra.mxu0 0.0
  %1865 = vmatprep.subr.mxu0 0.0
  %1866 = vmatpush2.msra.mxu0 0.0
  %1867 = vmatprep.subr.mxu0 0.0
  %1868 = vmatpush2.msra.mxu0 0.0
  %1869 = vmatprep.subr.mxu0 0.0
  %1870 = vmatpush2.msra.mxu0 0.0
  %1871 = vmatprep.subr.mxu0 0.0
  %1872 = vmatpush2.msra.mxu0 0.0
  %1873 = vmatprep.subr.mxu0 0.0
  %1874 = vmatpush2.msra.mxu0 0.0
  %1875 = vmatprep.subr.mxu0 0.0
  %1876 = vmatpush2.msra.mxu0 0.0
  %1877 = vmatprep.subr.mxu0 0.0
  %1878 = vmatpush2.msra.mxu0 0.0
  %1879 = vmatprep.subr.mxu0 0.0
  %1880 = vmatpush2.msra.mxu0 0.0
  %1881 = vmatprep.subr.mxu0 0.0
  %1882 = vmatpush2.msra.mxu0 0.0
  %1883 = vmatprep.subr.mxu0 0.0
  %1884 = vmatpush2.msra.mxu0 0.0
  %1885 = vmatprep.subr.mxu0 0.0
  %1886 = vmatpush2.msra.mxu0 0.0
  %1887 = vmatprep.mubr.f32.mxu0 0.0
  %1888 = vmatmul.mubr.f32.gmra.mxu0 %v1581
  %v1889 = vpop.f32.mrf.mxu0
  %v1890 = vadd.f32 0.0, %v1889
  %v1891 = vpop.f32.mrf.mxu0
  %v1892 = vadd.f32 0.0, %v1891
  %1893 = vdwg.mxu0
  %s1894 = scalar_lea.vmem %s2, 1
  %v1895 = vld [vmem:[%s1894] ss:$4 sm:$0x7]
  %1896 = vmatprep.subr.mxu0 0.0
  %1897 = vmatpush1.xpose.msra.mxu0 0.0
  %1898 = vmatprep.subr.mxu0 0.0
  %1899 = vmatpush1.xpose.msra.mxu0 0.0
  %1900 = vmatprep.subr.mxu0 0.0
  %1901 = vmatpush1.xpose.msra.mxu0 0.0
  %1902 = vmatprep.subr.mxu0 0.0
  %1903 = vmatpush1.xpose.msra.mxu0 0.0
  %1904 = vmatprep.subr.mxu0 0.0
  %1905 = vmatpush1.xpose.msra.mxu0 0.0
  %1906 = vmatprep.subr.mxu0 0.0
  %1907 = vmatpush1.xpose.msra.mxu0 0.0
  %1908 = vmatprep.subr.mxu0 0.0
  %1909 = vmatpush1.xpose.msra.mxu0 0.0
  %1910 = vmatprep.subr.mxu0 0.0
  %1911 = vmatpush1.xpose.msra.mxu0 0.0
  %1912 = vmatprep.subr.mxu0 0.0
  %1913 = vmatpush1.xpose.msra.mxu0 0.0
  %1914 = vmatprep.subr.mxu0 0.0
  %1915 = vmatpush1.xpose.msra.mxu0 0.0
  %1916 = vmatprep.subr.mxu0 0.0
  %1917 = vmatpush1.xpose.msra.mxu0 0.0
  %1918 = vmatprep.subr.mxu0 0.0
  %1919 = vmatpush1.xpose.msra.mxu0 0.0
  %1920 = vmatprep.subr.mxu0 0.0
  %1921 = vmatpush1.xpose.msra.mxu0 0.0
  %1922 = vmatprep.subr.mxu0 0.0
  %1923 = vmatpush1.xpose.msra.mxu0 0.0
  %1924 = vmatprep.subr.mxu0 0.0
  %1925 = vmatpush1.xpose.msra.mxu0 0.0
  %1926 = vmatprep.subr.mxu0 0.0
  %1927 = vmatpush1.xpose.msra.mxu0 %v1748
  %1928 = vmatprep.subr.mxu0 0.0
  %1929 = vmatpush2.xpose.msra.mxu0 0.0
  %1930 = vmatprep.subr.mxu0 0.0
  %1931 = vmatpush2.xpose.msra.mxu0 0.0
  %1932 = vmatprep.subr.mxu0 0.0
  %1933 = vmatpush2.xpose.msra.mxu0 0.0
  %1934 = vmatprep.subr.mxu0 0.0
  %1935 = vmatpush2.xpose.msra.mxu0 0.0
  %1936 = vmatprep.subr.mxu0 0.0
  %1937 = vmatpush2.xpose.msra.mxu0 0.0
  %1938 = vmatprep.subr.mxu0 0.0
  %1939 = vmatpush2.xpose.msra.mxu0 0.0
  %1940 = vmatprep.subr.mxu0 0.0
  %1941 = vmatpush2.xpose.msra.mxu0 0.0
  %1942 = vmatprep.subr.mxu0 0.0
  %1943 = vmatpush2.xpose.msra.mxu0 0.0
  %1944 = vmatprep.subr.mxu0 0.0
  %1945 = vmatpush2.xpose.msra.mxu0 0.0
  %1946 = vmatprep.subr.mxu0 0.0
  %1947 = vmatpush2.xpose.msra.mxu0 0.0
  %1948 = vmatprep.subr.mxu0 0.0
  %1949 = vmatpush2.xpose.msra.mxu0 0.0
  %1950 = vmatprep.subr.mxu0 0.0
  %1951 = vmatpush2.xpose.msra.mxu0 0.0
  %1952 = vmatprep.subr.mxu0 0.0
  %1953 = vmatpush2.xpose.msra.mxu0 0.0
  %1954 = vmatprep.subr.mxu0 0.0
  %1955 = vmatpush2.xpose.msra.mxu0 0.0
  %1956 = vmatprep.subr.mxu0 0.0
  %1957 = vmatpush2.xpose.msra.mxu0 0.0
  %1958 = vmatprep.subr.mxu0 0.0
  %1959 = vmatpush2.xpose.msra.mxu0 0.0
  %1960 = vmatprep.mubr.f32.mxu0 0.0
  %1961 = vmatmul.mubr.f32.gmra.mxu0 %v1895
  %v1962 = vpop.f32.mrf.mxu0
  %v1963 = vadd.f32 0.0, %v1962
  %v1964 = vpop.f32.mrf.mxu0
  %1965 = vdwg.mxu0
  %v1966 = vsel %vm1584, %v1963, -1e+30
  %v1967 = vsel %vm793, %v1966, -inf
  %1968 = vmax.xlane.f32.xlu0 %v1967
  %v1969 = vpop.xlane.xlu0 %1968
  %v1970 = vsub.f32 %v1966, %v1969
  %v1971 = vmul.f32 %v1970, 1.442695
  %v1972 = vpow.pop %v1971
  %v1973 = vsel %vm793, %v1972, 0.0
  %1974 = vadd.xlane.f32.xlu0 %v1973
  %v1975 = vpop.xlane.xlu0 %1974
  %v1976 = vrcp.pop %v1975
  %v1977 = vmul.f32 %v1972, %v1976
  %v1979 = vsel %vm805, %v1977, 0
  %v1982 = vsel %vm809, %v1821, 0
  %1984 = vmatprep.subr.mxu0 0.0
  %1985 = vmatpush1.msra.mxu0 0.0
  %1986 = vmatprep.subr.mxu0 0.0
  %1987 = vmatpush1.msra.mxu0 0.0
  %1988 = vmatprep.subr.mxu0 0.0
  %1989 = vmatpush1.msra.mxu0 0.0
  %1990 = vmatprep.subr.mxu0 0.0
  %1991 = vmatpush1.msra.mxu0 0.0
  %1992 = vmatprep.subr.mxu0 0.0
  %1993 = vmatpush1.msra.mxu0 0.0
  %1994 = vmatprep.subr.mxu0 0.0
  %1995 = vmatpush1.msra.mxu0 0.0
  %1996 = vmatprep.subr.mxu0 0.0
  %1997 = vmatpush1.msra.mxu0 0.0
  %1998 = vmatprep.subr.mxu0 0.0
  %1999 = vmatpush1.msra.mxu0 0.0
  %2000 = vmatprep.subr.mxu0 0.0
  %2001 = vmatpush1.msra.mxu0 0.0
  %2002 = vmatprep.subr.mxu0 0.0
  %2003 = vmatpush1.msra.mxu0 0.0
  %2004 = vmatprep.subr.mxu0 0.0
  %2005 = vmatpush1.msra.mxu0 0.0
  %2006 = vmatprep.subr.mxu0 0.0
  %2007 = vmatpush1.msra.mxu0 0.0
  %2008 = vmatprep.subr.mxu0 0.0
  %2009 = vmatpush1.msra.mxu0 0.0
  %2010 = vmatprep.subr.mxu0 0.0
  %2011 = vmatpush1.msra.mxu0 0.0
  %2012 = vmatprep.subr.mxu0 0.0
  %2013 = vmatpush1.msra.mxu0 0.0
  %2014 = vmatprep.subr.mxu0 0.0
  %2015 = vmatpush1.msra.mxu0 %v1982
  %2016 = vmatprep.subr.mxu0 0.0
  %2017 = vmatpush2.msra.mxu0 0.0
  %2018 = vmatprep.subr.mxu0 0.0
  %2019 = vmatpush2.msra.mxu0 0.0
  %2020 = vmatprep.subr.mxu0 0.0
  %2021 = vmatpush2.msra.mxu0 0.0
  %2022 = vmatprep.subr.mxu0 0.0
  %2023 = vmatpush2.msra.mxu0 0.0
  %2024 = vmatprep.subr.mxu0 0.0
  %2025 = vmatpush2.msra.mxu0 0.0
  %2026 = vmatprep.subr.mxu0 0.0
  %2027 = vmatpush2.msra.mxu0 0.0
  %2028 = vmatprep.subr.mxu0 0.0
  %2029 = vmatpush2.msra.mxu0 0.0
  %2030 = vmatprep.subr.mxu0 0.0
  %2031 = vmatpush2.msra.mxu0 0.0
  %2032 = vmatprep.subr.mxu0 0.0
  %2033 = vmatpush2.msra.mxu0 0.0
  %2034 = vmatprep.subr.mxu0 0.0
  %2035 = vmatpush2.msra.mxu0 0.0
  %2036 = vmatprep.subr.mxu0 0.0
  %2037 = vmatpush2.msra.mxu0 0.0
  %2038 = vmatprep.subr.mxu0 0.0
  %2039 = vmatpush2.msra.mxu0 0.0
  %2040 = vmatprep.subr.mxu0 0.0
  %2041 = vmatpush2.msra.mxu0 0.0
  %2042 = vmatprep.subr.mxu0 0.0
  %2043 = vmatpush2.msra.mxu0 0.0
  %2044 = vmatprep.subr.mxu0 0.0
  %2045 = vmatpush2.msra.mxu0 0.0
  %2046 = vmatprep.subr.mxu0 0.0
  %2047 = vmatpush2.msra.mxu0 0.0
  %2048 = vmatprep.mubr.f32.mxu0 0.0
  %2049 = vmatmul.mubr.f32.gmra.mxu0 %v1979
  %v2050 = vpop.f32.mrf.mxu0
  %v2051 = vadd.f32 0.0, %v2050
  %v2052 = vpop.f32.mrf.mxu0
  %2053 = vdwg.mxu0
  %v2055 = vlaneseq
  %v2056 = vshrl.u32 %v2055, 7
  %v2057 = vsub.s32 1, %v2056
  %v2058 = vrot.slane %v1895, %v2057
  %2060 = vmatprep.subr.mxu0 0.0
  %2061 = vmatpush1.xpose.msra.mxu0 0.0
  %2062 = vmatprep.subr.mxu0 0.0
  %2063 = vmatpush1.xpose.msra.mxu0 0.0
  %2064 = vmatprep.subr.mxu0 0.0
  %2065 = vmatpush1.xpose.msra.mxu0 0.0
  %2066 = vmatprep.subr.mxu0 0.0
  %2067 = vmatpush1.xpose.msra.mxu0 0.0
  %2068 = vmatprep.subr.mxu0 0.0
  %2069 = vmatpush1.xpose.msra.mxu0 0.0
  %2070 = vmatprep.subr.mxu0 0.0
  %2071 = vmatpush1.xpose.msra.mxu0 0.0
  %2072 = vmatprep.subr.mxu0 0.0
  %2073 = vmatpush1.xpose.msra.mxu0 0.0
  %2074 = vmatprep.subr.mxu0 0.0
  %2075 = vmatpush1.xpose.msra.mxu0 0.0
  %2076 = vmatprep.subr.mxu0 0.0
  %2077 = vmatpush1.xpose.msra.mxu0 0.0
  %2078 = vmatprep.subr.mxu0 0.0
  %2079 = vmatpush1.xpose.msra.mxu0 0.0
  %2080 = vmatprep.subr.mxu0 0.0
  %2081 = vmatpush1.xpose.msra.mxu0 0.0
  %2082 = vmatprep.subr.mxu0 0.0
  %2083 = vmatpush1.xpose.msra.mxu0 0.0
  %2084 = vmatprep.subr.mxu0 0.0
  %2085 = vmatpush1.xpose.msra.mxu0 0.0
  %2086 = vmatprep.subr.mxu0 0.0
  %2087 = vmatpush1.xpose.msra.mxu0 0.0
  %2088 = vmatprep.subr.mxu0 0.0
  %2089 = vmatpush1.xpose.msra.mxu0 0.0
  %2090 = vmatprep.subr.mxu0 0.0
  %2091 = vmatpush1.xpose.msra.mxu0 %v1750
  %2092 = vmatprep.subr.mxu0 0.0
  %2093 = vmatpush2.xpose.msra.mxu0 0.0
  %2094 = vmatprep.subr.mxu0 0.0
  %2095 = vmatpush2.xpose.msra.mxu0 0.0
  %2096 = vmatprep.subr.mxu0 0.0
  %2097 = vmatpush2.xpose.msra.mxu0 0.0
  %2098 = vmatprep.subr.mxu0 0.0
  %2099 = vmatpush2.xpose.msra.mxu0 0.0
  %2100 = vmatprep.subr.mxu0 0.0
  %2101 = vmatpush2.xpose.msra.mxu0 0.0
  %2102 = vmatprep.subr.mxu0 0.0
  %2103 = vmatpush2.xpose.msra.mxu0 0.0
  %2104 = vmatprep.subr.mxu0 0.0
  %2105 = vmatpush2.xpose.msra.mxu0 0.0
  %2106 = vmatprep.subr.mxu0 0.0
  %2107 = vmatpush2.xpose.msra.mxu0 0.0
  %2108 = vmatprep.subr.mxu0 0.0
  %2109 = vmatpush2.xpose.msra.mxu0 0.0
  %2110 = vmatprep.subr.mxu0 0.0
  %2111 = vmatpush2.xpose.msra.mxu0 0.0
  %2112 = vmatprep.subr.mxu0 0.0
  %2113 = vmatpush2.xpose.msra.mxu0 0.0
  %2114 = vmatprep.subr.mxu0 0.0
  %2115 = vmatpush2.xpose.msra.mxu0 0.0
  %2116 = vmatprep.subr.mxu0 0.0
  %2117 = vmatpush2.xpose.msra.mxu0 0.0
  %2118 = vmatprep.subr.mxu0 0.0
  %2119 = vmatpush2.xpose.msra.mxu0 0.0
  %2120 = vmatprep.subr.mxu0 0.0
  %2121 = vmatpush2.xpose.msra.mxu0 0.0
  %2122 = vmatprep.subr.mxu0 0.0
  %2123 = vmatpush2.xpose.msra.mxu0 0.0
  %2124 = vmatprep.mubr.f32.mxu0 0.0
  %2125 = vmatmul.mubr.f32.gmra.mxu0 %v2058
  %v2126 = vpop.f32.mrf.mxu0
  %v2127 = vadd.f32 0.0, %v2126
  %v2128 = vpop.f32.mrf.mxu0
  %2129 = vdwg.mxu0
  %v2130 = vsel %vm1584, %v2127, -1e+30
  %v2131 = vsel %vm793, %v2130, -inf
  %2132 = vmax.xlane.f32.xlu0 %v2131
  %v2133 = vpop.xlane.xlu0 %2132
  %v2134 = vsub.f32 %v2130, %v2133
  %v2135 = vmul.f32 %v2134, 1.442695
  %v2136 = vpow.pop %v2135
  %v2137 = vsel %vm793, %v2136, 0.0
  %2138 = vadd.xlane.f32.xlu0 %v2137
  %v2139 = vpop.xlane.xlu0 %2138
  %v2140 = vrcp.pop %v2139
  %v2141 = vmul.f32 %v2136, %v2140
  %v2143 = vsel %vm805, %v2141, 0
  %v2146 = vsel %vm809, %v1890, 0
  %2148 = vmatprep.subr.mxu0 0.0
  %2149 = vmatpush1.msra.mxu0 0.0
  %2150 = vmatprep.subr.mxu0 0.0
  %2151 = vmatpush1.msra.mxu0 0.0
  %2152 = vmatprep.subr.mxu0 0.0
  %2153 = vmatpush1.msra.mxu0 0.0
  %2154 = vmatprep.subr.mxu0 0.0
  %2155 = vmatpush1.msra.mxu0 0.0
  %2156 = vmatprep.subr.mxu0 0.0
  %2157 = vmatpush1.msra.mxu0 0.0
  %2158 = vmatprep.subr.mxu0 0.0
  %2159 = vmatpush1.msra.mxu0 0.0
  %2160 = vmatprep.subr.mxu0 0.0
  %2161 = vmatpush1.msra.mxu0 0.0
  %2162 = vmatprep.subr.mxu0 0.0
  %2163 = vmatpush1.msra.mxu0 0.0
  %2164 = vmatprep.subr.mxu0 0.0
  %2165 = vmatpush1.msra.mxu0 0.0
  %2166 = vmatprep.subr.mxu0 0.0
  %2167 = vmatpush1.msra.mxu0 0.0
  %2168 = vmatprep.subr.mxu0 0.0
  %2169 = vmatpush1.msra.mxu0 0.0
  %2170 = vmatprep.subr.mxu0 0.0
  %2171 = vmatpush1.msra.mxu0 0.0
  %2172 = vmatprep.subr.mxu0 0.0
  %2173 = vmatpush1.msra.mxu0 0.0
  %2174 = vmatprep.subr.mxu0 0.0
  %2175 = vmatpush1.msra.mxu0 0.0
  %2176 = vmatprep.subr.mxu0 0.0
  %2177 = vmatpush1.msra.mxu0 0.0
  %2178 = vmatprep.subr.mxu0 0.0
  %2179 = vmatpush1.msra.mxu0 %v2146
  %2180 = vmatprep.subr.mxu0 0.0
  %2181 = vmatpush2.msra.mxu0 0.0
  %2182 = vmatprep.subr.mxu0 0.0
  %2183 = vmatpush2.msra.mxu0 0.0
  %2184 = vmatprep.subr.mxu0 0.0
  %2185 = vmatpush2.msra.mxu0 0.0
  %2186 = vmatprep.subr.mxu0 0.0
  %2187 = vmatpush2.msra.mxu0 0.0
  %2188 = vmatprep.subr.mxu0 0.0
  %2189 = vmatpush2.msra.mxu0 0.0
  %2190 = vmatprep.subr.mxu0 0.0
  %2191 = vmatpush2.msra.mxu0 0.0
  %2192 = vmatprep.subr.mxu0 0.0
  %2193 = vmatpush2.msra.mxu0 0.0
  %2194 = vmatprep.subr.mxu0 0.0
  %2195 = vmatpush2.msra.mxu0 0.0
  %2196 = vmatprep.subr.mxu0 0.0
  %2197 = vmatpush2.msra.mxu0 0.0
  %2198 = vmatprep.subr.mxu0 0.0
  %2199 = vmatpush2.msra.mxu0 0.0
  %2200 = vmatprep.subr.mxu0 0.0
  %2201 = vmatpush2.msra.mxu0 0.0
  %2202 = vmatprep.subr.mxu0 0.0
  %2203 = vmatpush2.msra.mxu0 0.0
  %2204 = vmatprep.subr.mxu0 0.0
  %2205 = vmatpush2.msra.mxu0 0.0
  %2206 = vmatprep.subr.mxu0 0.0
  %2207 = vmatpush2.msra.mxu0 0.0
  %2208 = vmatprep.subr.mxu0 0.0
  %2209 = vmatpush2.msra.mxu0 0.0
  %2210 = vmatprep.subr.mxu0 0.0
  %2211 = vmatpush2.msra.mxu0 0.0
  %2212 = vmatprep.mubr.f32.mxu0 0.0
  %2213 = vmatmul.mubr.f32.gmra.mxu0 %v2143
  %v2214 = vpop.f32.mrf.mxu0
  %v2215 = vadd.f32 0.0, %v2214
  %v2216 = vpop.f32.mrf.mxu0
  %2217 = vdwg.mxu0
  %v2218 = vlaneseq
  %v2219 = vshrl.u32 %v2218, 7
  %v2220 = vsub.s32 2, %v2219
  %v2221 = vrot.slane %v1895, %v2220
  %2223 = vmatprep.subr.mxu0 0.0
  %2224 = vmatpush1.xpose.msra.mxu0 0.0
  %2225 = vmatprep.subr.mxu0 0.0
  %2226 = vmatpush1.xpose.msra.mxu0 0.0
  %2227 = vmatprep.subr.mxu0 0.0
  %2228 = vmatpush1.xpose.msra.mxu0 0.0
  %2229 = vmatprep.subr.mxu0 0.0
  %2230 = vmatpush1.xpose.msra.mxu0 0.0
  %2231 = vmatprep.subr.mxu0 0.0
  %2232 = vmatpush1.xpose.msra.mxu0 0.0
  %2233 = vmatprep.subr.mxu0 0.0
  %2234 = vmatpush1.xpose.msra.mxu0 0.0
  %2235 = vmatprep.subr.mxu0 0.0
  %2236 = vmatpush1.xpose.msra.mxu0 0.0
  %2237 = vmatprep.subr.mxu0 0.0
  %2238 = vmatpush1.xpose.msra.mxu0 0.0
  %2239 = vmatprep.subr.mxu0 0.0
  %2240 = vmatpush1.xpose.msra.mxu0 0.0
  %2241 = vmatprep.subr.mxu0 0.0
  %2242 = vmatpush1.xpose.msra.mxu0 0.0
  %2243 = vmatprep.subr.mxu0 0.0
  %2244 = vmatpush1.xpose.msra.mxu0 0.0
  %2245 = vmatprep.subr.mxu0 0.0
  %2246 = vmatpush1.xpose.msra.mxu0 0.0
  %2247 = vmatprep.subr.mxu0 0.0
  %2248 = vmatpush1.xpose.msra.mxu0 0.0
  %2249 = vmatprep.subr.mxu0 0.0
  %2250 = vmatpush1.xpose.msra.mxu0 0.0
  %2251 = vmatprep.subr.mxu0 0.0
  %2252 = vmatpush1.xpose.msra.mxu0 0.0
  %2253 = vmatprep.subr.mxu0 0.0
  %2254 = vmatpush1.xpose.msra.mxu0 %v1819
  %2255 = vmatprep.subr.mxu0 0.0
  %2256 = vmatpush2.xpose.msra.mxu0 0.0
  %2257 = vmatprep.subr.mxu0 0.0
  %2258 = vmatpush2.xpose.msra.mxu0 0.0
  %2259 = vmatprep.subr.mxu0 0.0
  %2260 = vmatpush2.xpose.msra.mxu0 0.0
  %2261 = vmatprep.subr.mxu0 0.0
  %2262 = vmatpush2.xpose.msra.mxu0 0.0
  %2263 = vmatprep.subr.mxu0 0.0
  %2264 = vmatpush2.xpose.msra.mxu0 0.0
  %2265 = vmatprep.subr.mxu0 0.0
  %2266 = vmatpush2.xpose.msra.mxu0 0.0
  %2267 = vmatprep.subr.mxu0 0.0
  %2268 = vmatpush2.xpose.msra.mxu0 0.0
  %2269 = vmatprep.subr.mxu0 0.0
  %2270 = vmatpush2.xpose.msra.mxu0 0.0
  %2271 = vmatprep.subr.mxu0 0.0
  %2272 = vmatpush2.xpose.msra.mxu0 0.0
  %2273 = vmatprep.subr.mxu0 0.0
  %2274 = vmatpush2.xpose.msra.mxu0 0.0
  %2275 = vmatprep.subr.mxu0 0.0
  %2276 = vmatpush2.xpose.msra.mxu0 0.0
  %2277 = vmatprep.subr.mxu0 0.0
  %2278 = vmatpush2.xpose.msra.mxu0 0.0
  %2279 = vmatprep.subr.mxu0 0.0
  %2280 = vmatpush2.xpose.msra.mxu0 0.0
  %2281 = vmatprep.subr.mxu0 0.0
  %2282 = vmatpush2.xpose.msra.mxu0 0.0
  %2283 = vmatprep.subr.mxu0 0.0
  %2284 = vmatpush2.xpose.msra.mxu0 0.0
  %2285 = vmatprep.subr.mxu0 0.0
  %2286 = vmatpush2.xpose.msra.mxu0 0.0
  %2287 = vmatprep.mubr.f32.mxu0 0.0
  %2288 = vmatmul.mubr.f32.gmra.mxu0 %v2221
  %v2289 = vpop.f32.mrf.mxu0
  %v2290 = vadd.f32 0.0, %v2289
  %v2291 = vpop.f32.mrf.mxu0
  %2292 = vdwg.mxu0
  %v2293 = vsel %vm1584, %v2290, -1e+30
  %v2294 = vsel %vm793, %v2293, -inf
  %2295 = vmax.xlane.f32.xlu0 %v2294
  %v2296 = vpop.xlane.xlu0 %2295
  %v2297 = vsub.f32 %v2293, %v2296
  %v2298 = vmul.f32 %v2297, 1.442695
  %v2299 = vpow.pop %v2298
  %v2300 = vsel %vm793, %v2299, 0.0
  %2301 = vadd.xlane.f32.xlu0 %v2300
  %v2302 = vpop.xlane.xlu0 %2301
  %v2303 = vrcp.pop %v2302
  %v2304 = vmul.f32 %v2299, %v2303
  %v2306 = vsel %vm805, %v2304, 0
  %v2309 = vsel %vm809, %v1892, 0
  %2311 = vmatprep.subr.mxu0 0.0
  %2312 = vmatpush1.msra.mxu0 0.0
  %2313 = vmatprep.subr.mxu0 0.0
  %2314 = vmatpush1.msra.mxu0 0.0
  %2315 = vmatprep.subr.mxu0 0.0
  %2316 = vmatpush1.msra.mxu0 0.0
  %2317 = vmatprep.subr.mxu0 0.0
  %2318 = vmatpush1.msra.mxu0 0.0
  %2319 = vmatprep.subr.mxu0 0.0
  %2320 = vmatpush1.msra.mxu0 0.0
  %2321 = vmatprep.subr.mxu0 0.0
  %2322 = vmatpush1.msra.mxu0 0.0
  %2323 = vmatprep.subr.mxu0 0.0
  %2324 = vmatpush1.msra.mxu0 0.0
  %2325 = vmatprep.subr.mxu0 0.0
  %2326 = vmatpush1.msra.mxu0 0.0
  %2327 = vmatprep.subr.mxu0 0.0
  %2328 = vmatpush1.msra.mxu0 0.0
  %2329 = vmatprep.subr.mxu0 0.0
  %2330 = vmatpush1.msra.mxu0 0.0
  %2331 = vmatprep.subr.mxu0 0.0
  %2332 = vmatpush1.msra.mxu0 0.0
  %2333 = vmatprep.subr.mxu0 0.0
  %2334 = vmatpush1.msra.mxu0 0.0
  %2335 = vmatprep.subr.mxu0 0.0
  %2336 = vmatpush1.msra.mxu0 0.0
  %2337 = vmatprep.subr.mxu0 0.0
  %2338 = vmatpush1.msra.mxu0 0.0
  %2339 = vmatprep.subr.mxu0 0.0
  %2340 = vmatpush1.msra.mxu0 0.0
  %2341 = vmatprep.subr.mxu0 0.0
  %2342 = vmatpush1.msra.mxu0 %v2309
  %2343 = vmatprep.subr.mxu0 0.0
  %2344 = vmatpush2.msra.mxu0 0.0
  %2345 = vmatprep.subr.mxu0 0.0
  %2346 = vmatpush2.msra.mxu0 0.0
  %2347 = vmatprep.subr.mxu0 0.0
  %2348 = vmatpush2.msra.mxu0 0.0
  %2349 = vmatprep.subr.mxu0 0.0
  %2350 = vmatpush2.msra.mxu0 0.0
  %2351 = vmatprep.subr.mxu0 0.0
  %2352 = vmatpush2.msra.mxu0 0.0
  %2353 = vmatprep.subr.mxu0 0.0
  %2354 = vmatpush2.msra.mxu0 0.0
  %2355 = vmatprep.subr.mxu0 0.0
  %2356 = vmatpush2.msra.mxu0 0.0
  %2357 = vmatprep.subr.mxu0 0.0
  %2358 = vmatpush2.msra.mxu0 0.0
  %2359 = vmatprep.subr.mxu0 0.0
  %2360 = vmatpush2.msra.mxu0 0.0
  %2361 = vmatprep.subr.mxu0 0.0
  %2362 = vmatpush2.msra.mxu0 0.0
  %2363 = vmatprep.subr.mxu0 0.0
  %2364 = vmatpush2.msra.mxu0 0.0
  %2365 = vmatprep.subr.mxu0 0.0
  %2366 = vmatpush2.msra.mxu0 0.0
  %2367 = vmatprep.subr.mxu0 0.0
  %2368 = vmatpush2.msra.mxu0 0.0
  %2369 = vmatprep.subr.mxu0 0.0
  %2370 = vmatpush2.msra.mxu0 0.0
  %2371 = vmatprep.subr.mxu0 0.0
  %2372 = vmatpush2.msra.mxu0 0.0
  %2373 = vmatprep.subr.mxu0 0.0
  %2374 = vmatpush2.msra.mxu0 0.0
  %2375 = vmatprep.mubr.f32.mxu0 0.0
  %2376 = vmatmul.mubr.f32.gmra.mxu0 %v2306
  %v2377 = vpop.f32.mrf.mxu0
  %v2378 = vadd.f32 0.0, %v2377
  %v2379 = vpop.f32.mrf.mxu0
  %2380 = vdwg.mxu0
  %v2381 = vld [vmem:[%s4] sm:$0xff]
  %v2382 = vld [vmem:[%s4 + $0x8] sm:$0xff]
  %v2383 = vld [vmem:[%s4 + $0x10] sm:$0xff]
  %v2384 = vld [vmem:[%s4 + $0x18] sm:$0xff]
  %v2385 = vld [vmem:[%s4 + $0x20] sm:$0xff]
  %v2386 = vld [vmem:[%s4 + $0x28] sm:$0xff]
  %v2387 = vld [vmem:[%s4 + $0x30] sm:$0xff]
  %v2388 = vld [vmem:[%s4 + $0x38] sm:$0xff]
  %v2389 = vld [vmem:[%s4 + $0x40] sm:$0xff]
  %v2390 = vld [vmem:[%s4 + $0x48] sm:$0xff]
  %v2391 = vld [vmem:[%s4 + $0x50] sm:$0xff]
  %v2392 = vld [vmem:[%s4 + $0x58] sm:$0xff]
  %v2393 = vld [vmem:[%s4 + $0x60] sm:$0xff]
  %v2394 = vld [vmem:[%s4 + $0x68] sm:$0xff]
  %v2395 = vld [vmem:[%s4 + $0x70] sm:$0xff]
  %v2396 = vld [vmem:[%s4 + $0x78] sm:$0xff]
  %v2397 = vld [vmem:[%s4 + $0x80] sm:$0xff]
  %v2398 = vld [vmem:[%s4 + $0x88] sm:$0xff]
  %v2399 = vld [vmem:[%s4 + $0x90] sm:$0xff]
  %v2400 = vld [vmem:[%s4 + $0x98] sm:$0xff]
  %v2401 = vld [vmem:[%s4 + $0xa0] sm:$0xff]
  %v2402 = vld [vmem:[%s4 + $0xa8] sm:$0xff]
  %v2403 = vld [vmem:[%s4 + $0xb0] sm:$0xff]
  %v2404 = vld [vmem:[%s4 + $0xb8] sm:$0xff]
  %v2405 = vld [vmem:[%s4 + $0xc0] sm:$0xff]
  %v2406 = vld [vmem:[%s4 + $0xc8] sm:$0xff]
  %v2407 = vld [vmem:[%s4 + $0xd0] sm:$0xff]
  %v2408 = vld [vmem:[%s4 + $0xd8] sm:$0xff]
  %v2409 = vld [vmem:[%s4 + $0xe0] sm:$0xff]
  %v2410 = vld [vmem:[%s4 + $0xe8] sm:$0xff]
  %v2411 = vld [vmem:[%s4 + $0xf0] sm:$0xff]
  %v2412 = vld [vmem:[%s4 + $0xf8] sm:$0xff]
  %v2413 = vld [vmem:[%s4 + $0x100] sm:$0xff]
  %v2414 = vld [vmem:[%s4 + $0x108] sm:$0xff]
  %v2415 = vld [vmem:[%s4 + $0x110] sm:$0xff]
  %v2416 = vld [vmem:[%s4 + $0x118] sm:$0xff]
  %v2417 = vld [vmem:[%s4 + $0x120] sm:$0xff]
  %v2418 = vld [vmem:[%s4 + $0x128] sm:$0xff]
  %v2419 = vld [vmem:[%s4 + $0x130] sm:$0xff]
  %v2420 = vld [vmem:[%s4 + $0x138] sm:$0xff]
  %v2421 = vld [vmem:[%s4 + $0x140] sm:$0xff]
  %v2422 = vld [vmem:[%s4 + $0x148] sm:$0xff]
  %v2423 = vld [vmem:[%s4 + $0x150] sm:$0xff]
  %v2424 = vld [vmem:[%s4 + $0x158] sm:$0xff]
  %v2425 = vld [vmem:[%s4 + $0x160] sm:$0xff]
  %v2426 = vld [vmem:[%s4 + $0x168] sm:$0xff]
  %v2427 = vld [vmem:[%s4 + $0x170] sm:$0xff]
  %v2428 = vld [vmem:[%s4 + $0x178] sm:$0xff]
  %v2429 = vld [vmem:[%s4 + $0x180] sm:$0xff]
  %v2430 = vld [vmem:[%s4 + $0x188] sm:$0xff]
  %v2431 = vld [vmem:[%s4 + $0x190] sm:$0xff]
  %v2432 = vld [vmem:[%s4 + $0x198] sm:$0xff]
  %v2433 = vld [vmem:[%s4 + $0x1a0] sm:$0xff]
  %v2434 = vld [vmem:[%s4 + $0x1a8] sm:$0xff]
  %v2435 = vld [vmem:[%s4 + $0x1b0] sm:$0xff]
  %v2436 = vld [vmem:[%s4 + $0x1b8] sm:$0xff]
  %v2437 = vld [vmem:[%s4 + $0x1c0] sm:$0xff]
  %v2438 = vld [vmem:[%s4 + $0x1c8] sm:$0xff]
  %v2439 = vld [vmem:[%s4 + $0x1d0] sm:$0xff]
  %v2440 = vld [vmem:[%s4 + $0x1d8] sm:$0xff]
  %v2441 = vld [vmem:[%s4 + $0x1e0] sm:$0xff]
  %v2442 = vld [vmem:[%s4 + $0x1e8] sm:$0xff]
  %v2443 = vld [vmem:[%s4 + $0x1f0] sm:$0xff]
  %v2444 = vld [vmem:[%s4 + $0x1f8] sm:$0xff]
  %v2445 = vld [vmem:[%s4 + $0x200] sm:$0xff]
  %v2446 = vld [vmem:[%s4 + $0x208] sm:$0xff]
  %v2447 = vld [vmem:[%s4 + $0x210] sm:$0xff]
  %v2448 = vld [vmem:[%s4 + $0x218] sm:$0xff]
  %v2449 = vld [vmem:[%s4 + $0x220] sm:$0xff]
  %v2450 = vld [vmem:[%s4 + $0x228] sm:$0xff]
  %v2451 = vld [vmem:[%s4 + $0x230] sm:$0xff]
  %v2452 = vld [vmem:[%s4 + $0x238] sm:$0xff]
  %v2453 = vld [vmem:[%s4 + $0x240] sm:$0xff]
  %v2454 = vld [vmem:[%s4 + $0x248] sm:$0xff]
  %v2455 = vld [vmem:[%s4 + $0x250] sm:$0xff]
  %v2456 = vld [vmem:[%s4 + $0x258] sm:$0xff]
  %v2457 = vld [vmem:[%s4 + $0x260] sm:$0xff]
  %v2458 = vld [vmem:[%s4 + $0x268] sm:$0xff]
  %v2459 = vld [vmem:[%s4 + $0x270] sm:$0xff]
  %v2460 = vld [vmem:[%s4 + $0x278] sm:$0xff]
  %v2461 = vld [vmem:[%s4 + $0x280] sm:$0xff]
  %v2462 = vld [vmem:[%s4 + $0x288] sm:$0xff]
  %v2463 = vld [vmem:[%s4 + $0x290] sm:$0xff]
  %v2464 = vld [vmem:[%s4 + $0x298] sm:$0xff]
  %v2465 = vld [vmem:[%s4 + $0x2a0] sm:$0xff]
  %v2466 = vld [vmem:[%s4 + $0x2a8] sm:$0xff]
  %v2467 = vld [vmem:[%s4 + $0x2b0] sm:$0xff]
  %v2468 = vld [vmem:[%s4 + $0x2b8] sm:$0xff]
  %v2469 = vld [vmem:[%s4 + $0x2c0] sm:$0xff]
  %v2470 = vld [vmem:[%s4 + $0x2c8] sm:$0xff]
  %v2471 = vld [vmem:[%s4 + $0x2d0] sm:$0xff]
  %v2472 = vld [vmem:[%s4 + $0x2d8] sm:$0xff]
  %v2473 = vld [vmem:[%s4 + $0x2e0] sm:$0xff]
  %v2474 = vld [vmem:[%s4 + $0x2e8] sm:$0xff]
  %v2475 = vld [vmem:[%s4 + $0x2f0] sm:$0xff]
  %v2476 = vld [vmem:[%s4 + $0x2f8] sm:$0xff]
  %2477 = vmatprep.subr.mxu0 %v2412
  %2478 = vmatpush1.msra.mxu0 %v2411
  %2479 = vmatprep.subr.mxu0 %v2410
  %2480 = vmatpush1.msra.mxu0 %v2409
  %2481 = vmatprep.subr.mxu0 %v2408
  %2482 = vmatpush1.msra.mxu0 %v2407
  %2483 = vmatprep.subr.mxu0 %v2406
  %2484 = vmatpush1.msra.mxu0 %v2405
  %2485 = vmatprep.subr.mxu0 %v2404
  %2486 = vmatpush1.msra.mxu0 %v2403
  %2487 = vmatprep.subr.mxu0 %v2402
  %2488 = vmatpush1.msra.mxu0 %v2401
  %2489 = vmatprep.subr.mxu0 %v2400
  %2490 = vmatpush1.msra.mxu0 %v2399
  %2491 = vmatprep.subr.mxu0 %v2398
  %2492 = vmatpush1.msra.mxu0 %v2397
  %2493 = vmatprep.subr.mxu0 %v2396
  %2494 = vmatpush1.msra.mxu0 %v2395
  %2495 = vmatprep.subr.mxu0 %v2394
  %2496 = vmatpush1.msra.mxu0 %v2393
  %2497 = vmatprep.subr.mxu0 %v2392
  %2498 = vmatpush1.msra.mxu0 %v2391
  %2499 = vmatprep.subr.mxu0 %v2390
  %2500 = vmatpush1.msra.mxu0 %v2389
  %2501 = vmatprep.subr.mxu0 %v2388
  %2502 = vmatpush1.msra.mxu0 %v2387
  %2503 = vmatprep.subr.mxu0 %v2386
  %2504 = vmatpush1.msra.mxu0 %v2385
  %2505 = vmatprep.subr.mxu0 %v2384
  %2506 = vmatpush1.msra.mxu0 %v2383
  %2507 = vmatprep.subr.mxu0 %v2382
  %2508 = vmatpush1.msra.mxu0 %v2381
  %2509 = vmatprep.subr.mxu0 %v2444
  %2510 = vmatpush2.msra.mxu0 %v2443
  %2511 = vmatprep.subr.mxu0 %v2442
  %2512 = vmatpush2.msra.mxu0 %v2441
  %2513 = vmatprep.subr.mxu0 %v2440
  %2514 = vmatpush2.msra.mxu0 %v2439
  %2515 = vmatprep.subr.mxu0 %v2438
  %2516 = vmatpush2.msra.mxu0 %v2437
  %2517 = vmatprep.subr.mxu0 %v2436
  %2518 = vmatpush2.msra.mxu0 %v2435
  %2519 = vmatprep.subr.mxu0 %v2434
  %2520 = vmatpush2.msra.mxu0 %v2433
  %2521 = vmatprep.subr.mxu0 %v2432
  %2522 = vmatpush2.msra.mxu0 %v2431
  %2523 = vmatprep.subr.mxu0 %v2430
  %2524 = vmatpush2.msra.mxu0 %v2429
  %2525 = vmatprep.subr.mxu0 %v2428
  %2526 = vmatpush2.msra.mxu0 %v2427
  %2527 = vmatprep.subr.mxu0 %v2426
  %2528 = vmatpush2.msra.mxu0 %v2425
  %2529 = vmatprep.subr.mxu0 %v2424
  %2530 = vmatpush2.msra.mxu0 %v2423
  %2531 = vmatprep.subr.mxu0 %v2422
  %2532 = vmatpush2.msra.mxu0 %v2421
  %2533 = vmatprep.subr.mxu0 %v2420
  %2534 = vmatpush2.msra.mxu0 %v2419
  %2535 = vmatprep.subr.mxu0 %v2418
  %2536 = vmatpush2.msra.mxu0 %v2417
  %2537 = vmatprep.subr.mxu0 %v2416
  %2538 = vmatpush2.msra.mxu0 %v2415
  %2539 = vmatprep.subr.mxu0 %v2414
  %2540 = vmatpush2.msra.mxu0 %v2413
  %2541 = vmatprep.mubr.f32.mxu0 %v2215
  %2542 = vmatmul.mubr.f32.gmra.mxu0 %v2051
  %v2543 = vpop.f32.mrf.mxu0
  %v2544 = vadd.f32 0.0, %v2543
  %v2545 = vpop.f32.mrf.mxu0
  %v2546 = vadd.f32 0.0, %v2545
  %2547 = vdwg.mxu0
  %2548 = vmatprep.subr.mxu0 %v2476
  %2549 = vmatpush1.msra.mxu0 %v2475
  %2550 = vmatprep.subr.mxu0 %v2474
  %2551 = vmatpush1.msra.mxu0 %v2473
  %2552 = vmatprep.subr.mxu0 %v2472
  %2553 = vmatpush1.msra.mxu0 %v2471
  %2554 = vmatprep.subr.mxu0 %v2470
  %2555 = vmatpush1.msra.mxu0 %v2469
  %2556 = vmatprep.subr.mxu0 %v2468
  %2557 = vmatpush1.msra.mxu0 %v2467
  %2558 = vmatprep.subr.mxu0 %v2466
  %2559 = vmatpush1.msra.mxu0 %v2465
  %2560 = vmatprep.subr.mxu0 %v2464
  %2561 = vmatpush1.msra.mxu0 %v2463
  %2562 = vmatprep.subr.mxu0 %v2462
  %2563 = vmatpush1.msra.mxu0 %v2461
  %2564 = vmatprep.subr.mxu0 %v2460
  %2565 = vmatpush1.msra.mxu0 %v2459
  %2566 = vmatprep.subr.mxu0 %v2458
  %2567 = vmatpush1.msra.mxu0 %v2457
  %2568 = vmatprep.subr.mxu0 %v2456
  %2569 = vmatpush1.msra.mxu0 %v2455
  %2570 = vmatprep.subr.mxu0 %v2454
  %2571 = vmatpush1.msra.mxu0 %v2453
  %2572 = vmatprep.subr.mxu0 %v2452
  %2573 = vmatpush1.msra.mxu0 %v2451
  %2574 = vmatprep.subr.mxu0 %v2450
  %2575 = vmatpush1.msra.mxu0 %v2449
  %2576 = vmatprep.subr.mxu0 %v2448
  %2577 = vmatpush1.msra.mxu0 %v2447
  %2578 = vmatprep.subr.mxu0 %v2446
  %2579 = vmatpush1.msra.mxu0 %v2445
  %2580 = vmatprep.subr.mxu0 0.0
  %2581 = vmatpush2.msra.mxu0 0.0
  %2582 = vmatprep.subr.mxu0 0.0
  %2583 = vmatpush2.msra.mxu0 0.0
  %2584 = vmatprep.subr.mxu0 0.0
  %2585 = vmatpush2.msra.mxu0 0.0
  %2586 = vmatprep.subr.mxu0 0.0
  %2587 = vmatpush2.msra.mxu0 0.0
  %2588 = vmatprep.subr.mxu0 0.0
  %2589 = vmatpush2.msra.mxu0 0.0
  %2590 = vmatprep.subr.mxu0 0.0
  %2591 = vmatpush2.msra.mxu0 0.0
  %2592 = vmatprep.subr.mxu0 0.0
  %2593 = vmatpush2.msra.mxu0 0.0
  %2594 = vmatprep.subr.mxu0 0.0
  %2595 = vmatpush2.msra.mxu0 0.0
  %2596 = vmatprep.subr.mxu0 0.0
  %2597 = vmatpush2.msra.mxu0 0.0
  %2598 = vmatprep.subr.mxu0 0.0
  %2599 = vmatpush2.msra.mxu0 0.0
  %2600 = vmatprep.subr.mxu0 0.0
  %2601 = vmatpush2.msra.mxu0 0.0
  %2602 = vmatprep.subr.mxu0 0.0
  %2603 = vmatpush2.msra.mxu0 0.0
  %2604 = vmatprep.subr.mxu0 0.0
  %2605 = vmatpush2.msra.mxu0 0.0
  %2606 = vmatprep.subr.mxu0 0.0
  %2607 = vmatpush2.msra.mxu0 0.0
  %2608 = vmatprep.subr.mxu0 0.0
  %2609 = vmatpush2.msra.mxu0 0.0
  %2610 = vmatprep.subr.mxu0 0.0
  %2611 = vmatpush2.msra.mxu0 0.0
  %2612 = vmatprep.mubr.f32.mxu0 0.0
  %2613 = vmatmul.mubr.f32.gmra.mxu0 %v2378
  %v2614 = vpop.f32.mrf.mxu0
  %v2615 = vadd.f32 %v2544, %v2614
  %v2616 = vpop.f32.mrf.mxu0
  %v2617 = vadd.f32 %v2546, %v2616
  %2618 = vdwg.mxu0
  %v2619 = vxor.u32 %v2615, 2147483648
  %v2620 = vxor.u32 %v2617, 2147483648
  %v2621 = vmul.f32 %v2619, 1.442695
  %v2622 = vpow.pop %v2621
  %v2623 = vmul.f32 %v2620, 1.442695
  %v2624 = vpow.pop %v2623
  %v2625 = vadd.f32 %v2622, 1.0
  %v2626 = vadd.f32 %v2624, 1.0
  %v2627 = vrcp.pop %v2625
  %v2628 = vmul.f32 1.0, %v2627
  %v2629 = vrcp.pop %v2626
  %v2630 = vmul.f32 1.0, %v2629
  %v2631 = vld [vmem:[%s5] sm:$0xff]
  %v2632 = vld [vmem:[%s5 + $0x8] sm:$0xff]
  %v2633 = vld [vmem:[%s5 + $0x10] sm:$0xff]
  %v2634 = vld [vmem:[%s5 + $0x18] sm:$0xff]
  %v2635 = vld [vmem:[%s5 + $0x20] sm:$0xff]
  %v2636 = vld [vmem:[%s5 + $0x28] sm:$0xff]
  %v2637 = vld [vmem:[%s5 + $0x30] sm:$0xff]
  %v2638 = vld [vmem:[%s5 + $0x38] sm:$0xff]
  %v2639 = vld [vmem:[%s5 + $0x40] sm:$0xff]
  %v2640 = vld [vmem:[%s5 + $0x48] sm:$0xff]
  %v2641 = vld [vmem:[%s5 + $0x50] sm:$0xff]
  %v2642 = vld [vmem:[%s5 + $0x58] sm:$0xff]
  %v2643 = vld [vmem:[%s5 + $0x60] sm:$0xff]
  %v2644 = vld [vmem:[%s5 + $0x68] sm:$0xff]
  %v2645 = vld [vmem:[%s5 + $0x70] sm:$0xff]
  %v2646 = vld [vmem:[%s5 + $0x78] sm:$0xff]
  %v2647 = vld [vmem:[%s5 + $0x80] sm:$0xff]
  %v2648 = vld [vmem:[%s5 + $0x88] sm:$0xff]
  %v2649 = vld [vmem:[%s5 + $0x90] sm:$0xff]
  %v2650 = vld [vmem:[%s5 + $0x98] sm:$0xff]
  %v2651 = vld [vmem:[%s5 + $0xa0] sm:$0xff]
  %v2652 = vld [vmem:[%s5 + $0xa8] sm:$0xff]
  %v2653 = vld [vmem:[%s5 + $0xb0] sm:$0xff]
  %v2654 = vld [vmem:[%s5 + $0xb8] sm:$0xff]
  %v2655 = vld [vmem:[%s5 + $0xc0] sm:$0xff]
  %v2656 = vld [vmem:[%s5 + $0xc8] sm:$0xff]
  %v2657 = vld [vmem:[%s5 + $0xd0] sm:$0xff]
  %v2658 = vld [vmem:[%s5 + $0xd8] sm:$0xff]
  %v2659 = vld [vmem:[%s5 + $0xe0] sm:$0xff]
  %v2660 = vld [vmem:[%s5 + $0xe8] sm:$0xff]
  %v2661 = vld [vmem:[%s5 + $0xf0] sm:$0xff]
  %v2662 = vld [vmem:[%s5 + $0xf8] sm:$0xff]
  %2663 = vmatprep.subr.mxu0 0.0
  %2664 = vmatpush1.msra.mxu0 %v2646
  %2665 = vmatprep.subr.mxu0 0.0
  %2666 = vmatpush1.msra.mxu0 %v2645
  %2667 = vmatprep.subr.mxu0 0.0
  %2668 = vmatpush1.msra.mxu0 %v2644
  %2669 = vmatprep.subr.mxu0 0.0
  %2670 = vmatpush1.msra.mxu0 %v2643
  %2671 = vmatprep.subr.mxu0 0.0
  %2672 = vmatpush1.msra.mxu0 %v2642
  %2673 = vmatprep.subr.mxu0 0.0
  %2674 = vmatpush1.msra.mxu0 %v2641
  %2675 = vmatprep.subr.mxu0 0.0
  %2676 = vmatpush1.msra.mxu0 %v2640
  %2677 = vmatprep.subr.mxu0 0.0
  %2678 = vmatpush1.msra.mxu0 %v2639
  %2679 = vmatprep.subr.mxu0 0.0
  %2680 = vmatpush1.msra.mxu0 %v2638
  %2681 = vmatprep.subr.mxu0 0.0
  %2682 = vmatpush1.msra.mxu0 %v2637
  %2683 = vmatprep.subr.mxu0 0.0
  %2684 = vmatpush1.msra.mxu0 %v2636
  %2685 = vmatprep.subr.mxu0 0.0
  %2686 = vmatpush1.msra.mxu0 %v2635
  %2687 = vmatprep.subr.mxu0 0.0
  %2688 = vmatpush1.msra.mxu0 %v2634
  %2689 = vmatprep.subr.mxu0 0.0
  %2690 = vmatpush1.msra.mxu0 %v2633
  %2691 = vmatprep.subr.mxu0 0.0
  %2692 = vmatpush1.msra.mxu0 %v2632
  %2693 = vmatprep.subr.mxu0 0.0
  %2694 = vmatpush1.msra.mxu0 %v2631
  %2695 = vmatprep.subr.mxu0 0.0
  %2696 = vmatpush2.msra.mxu0 %v2662
  %2697 = vmatprep.subr.mxu0 0.0
  %2698 = vmatpush2.msra.mxu0 %v2661
  %2699 = vmatprep.subr.mxu0 0.0
  %2700 = vmatpush2.msra.mxu0 %v2660
  %2701 = vmatprep.subr.mxu0 0.0
  %2702 = vmatpush2.msra.mxu0 %v2659
  %2703 = vmatprep.subr.mxu0 0.0
  %2704 = vmatpush2.msra.mxu0 %v2658
  %2705 = vmatprep.subr.mxu0 0.0
  %2706 = vmatpush2.msra.mxu0 %v2657
  %2707 = vmatprep.subr.mxu0 0.0
  %2708 = vmatpush2.msra.mxu0 %v2656
  %2709 = vmatprep.subr.mxu0 0.0
  %2710 = vmatpush2.msra.mxu0 %v2655
  %2711 = vmatprep.subr.mxu0 0.0
  %2712 = vmatpush2.msra.mxu0 %v2654
  %2713 = vmatprep.subr.mxu0 0.0
  %2714 = vmatpush2.msra.mxu0 %v2653
  %2715 = vmatprep.subr.mxu0 0.0
  %2716 = vmatpush2.msra.mxu0 %v2652
  %2717 = vmatprep.subr.mxu0 0.0
  %2718 = vmatpush2.msra.mxu0 %v2651
  %2719 = vmatprep.subr.mxu0 0.0
  %2720 = vmatpush2.msra.mxu0 %v2650
  %2721 = vmatprep.subr.mxu0 0.0
  %2722 = vmatpush2.msra.mxu0 %v2649
  %2723 = vmatprep.subr.mxu0 0.0
  %2724 = vmatpush2.msra.mxu0 %v2648
  %2725 = vmatprep.subr.mxu0 0.0
  %2726 = vmatpush2.msra.mxu0 %v2647
  %2727 = vmatprep.mubr.f32.mxu0 %v2630
  %2728 = vmatmul.mubr.f32.gmra.mxu0 %v2628
  %v2729 = vpop.f32.mrf.mxu0
  %v2730 = vadd.f32 0.0, %v2729
  %v2731 = vpop.f32.mrf.mxu0
  %2732 = vdwg.mxu0
  %v2733 = vxor.u32 %v2730, 2147483648
  %v2734 = vmul.f32 %v2733, 1.442695
  %v2735 = vpow.pop %v2734
  %v2736 = vadd.f32 %v2735, 1.0
  %v2737 = vrcp.pop %v2736
  %v2738 = vmul.f32 1.0, %v2737
  %2739 = vst [vmem:[#allocation2 + $0x2] sm:$0x1] %v2738
  %s2740 = sld [smem:[#allocation5 + $0x100]]
  %s2741 = scalar_lea.vmem [#allocation2], %s2740
  %v2742 = vld [vmem:[%s2741] sm:$0x1]
  %2743 = vst [vmem:[#allocation3] sm:$0x1] %v2742
  %s2744 = sld [smem:[#allocation5 + $0x101]]
  %s2745 = scalar_lea.vmem [#allocation2], %s2744
  %v2746 = vld [vmem:[%s2745] sm:$0x1]
  %2747 = vst [vmem:[#allocation3 + $0x1] sm:$0x1] %v2746
  %s2748 = sld [smem:[#allocation5 + $0x102]]
  %s2749 = scalar_lea.vmem [#allocation2], %s2748
  %v2750 = vld [vmem:[%s2749] sm:$0x1]
  %2751 = vst [vmem:[#allocation3 + $0x2] sm:$0x1] %v2750
  %v2752 = vld [vmem:[#allocation3] sm:$0x7]
  %s2753 = sld [smem:[#allocation6 + $0x2]]
  %v2754 = vstv %s2753
  %vm2755 = vcmp.lt.s32.totalorder %v395, %v2754
  %v2756 = vld [vmem:[%s3] sm:$0xff]
  %v2757 = vld [vmem:[%s3 + $0x8] sm:$0xff]
  %v2758 = vld [vmem:[%s3 + $0x10] sm:$0xff]
  %v2759 = vld [vmem:[%s3 + $0x18] sm:$0xff]
  %v2760 = vld [vmem:[%s3 + $0x20] sm:$0xff]
  %v2761 = vld [vmem:[%s3 + $0x28] sm:$0xff]
  %v2762 = vld [vmem:[%s3 + $0x30] sm:$0xff]
  %v2763 = vld [vmem:[%s3 + $0x38] sm:$0xff]
  %v2764 = vld [vmem:[%s3 + $0x40] sm:$0xff]
  %v2765 = vld [vmem:[%s3 + $0x48] sm:$0xff]
  %v2766 = vld [vmem:[%s3 + $0x50] sm:$0xff]
  %v2767 = vld [vmem:[%s3 + $0x58] sm:$0xff]
  %v2768 = vld [vmem:[%s3 + $0x60] sm:$0xff]
  %v2769 = vld [vmem:[%s3 + $0x68] sm:$0xff]
  %v2770 = vld [vmem:[%s3 + $0x70] sm:$0xff]
  %v2771 = vld [vmem:[%s3 + $0x78] sm:$0xff]
  %v2772 = vld [vmem:[%s3 + $0x80] sm:$0xff]
  %v2773 = vld [vmem:[%s3 + $0x88] sm:$0xff]
  %v2774 = vld [vmem:[%s3 + $0x90] sm:$0xff]
  %v2775 = vld [vmem:[%s3 + $0x98] sm:$0xff]
  %v2776 = vld [vmem:[%s3 + $0xa0] sm:$0xff]
  %v2777 = vld [vmem:[%s3 + $0xa8] sm:$0xff]
  %v2778 = vld [vmem:[%s3 + $0xb0] sm:$0xff]
  %v2779 = vld [vmem:[%s3 + $0xb8] sm:$0xff]
  %v2780 = vld [vmem:[%s3 + $0xc0] sm:$0xff]
  %v2781 = vld [vmem:[%s3 + $0xc8] sm:$0xff]
  %v2782 = vld [vmem:[%s3 + $0xd0] sm:$0xff]
  %v2783 = vld [vmem:[%s3 + $0xd8] sm:$0xff]
  %v2784 = vld [vmem:[%s3 + $0xe0] sm:$0xff]
  %v2785 = vld [vmem:[%s3 + $0xe8] sm:$0xff]
  %v2786 = vld [vmem:[%s3 + $0xf0] sm:$0xff]
  %v2787 = vld [vmem:[%s3 + $0xf8] sm:$0xff]
  %v2788 = vld [vmem:[%s3 + $0x100] sm:$0xff]
  %v2789 = vld [vmem:[%s3 + $0x108] sm:$0xff]
  %v2790 = vld [vmem:[%s3 + $0x110] sm:$0xff]
  %v2791 = vld [vmem:[%s3 + $0x118] sm:$0xff]
  %v2792 = vld [vmem:[%s3 + $0x120] sm:$0xff]
  %v2793 = vld [vmem:[%s3 + $0x128] sm:$0xff]
  %v2794 = vld [vmem:[%s3 + $0x130] sm:$0xff]
  %v2795 = vld [vmem:[%s3 + $0x138] sm:$0xff]
  %v2796 = vld [vmem:[%s3 + $0x140] sm:$0xff]
  %v2797 = vld [vmem:[%s3 + $0x148] sm:$0xff]
  %v2798 = vld [vmem:[%s3 + $0x150] sm:$0xff]
  %v2799 = vld [vmem:[%s3 + $0x158] sm:$0xff]
  %v2800 = vld [vmem:[%s3 + $0x160] sm:$0xff]
  %v2801 = vld [vmem:[%s3 + $0x168] sm:$0xff]
  %v2802 = vld [vmem:[%s3 + $0x170] sm:$0xff]
  %v2803 = vld [vmem:[%s3 + $0x178] sm:$0xff]
  %v2804 = vld [vmem:[%s3 + $0x180] sm:$0xff]
  %v2805 = vld [vmem:[%s3 + $0x188] sm:$0xff]
  %v2806 = vld [vmem:[%s3 + $0x190] sm:$0xff]
  %v2807 = vld [vmem:[%s3 + $0x198] sm:$0xff]
  %v2808 = vld [vmem:[%s3 + $0x1a0] sm:$0xff]
  %v2809 = vld [vmem:[%s3 + $0x1a8] sm:$0xff]
  %v2810 = vld [vmem:[%s3 + $0x1b0] sm:$0xff]
  %v2811 = vld [vmem:[%s3 + $0x1b8] sm:$0xff]
  %v2812 = vld [vmem:[%s3 + $0x1c0] sm:$0xff]
  %v2813 = vld [vmem:[%s3 + $0x1c8] sm:$0xff]
  %v2814 = vld [vmem:[%s3 + $0x1d0] sm:$0xff]
  %v2815 = vld [vmem:[%s3 + $0x1d8] sm:$0xff]
  %v2816 = vld [vmem:[%s3 + $0x1e0] sm:$0xff]
  %v2817 = vld [vmem:[%s3 + $0x1e8] sm:$0xff]
  %v2818 = vld [vmem:[%s3 + $0x1f0] sm:$0xff]
  %v2819 = vld [vmem:[%s3 + $0x1f8] sm:$0xff]
  %v2820 = vld [vmem:[%s3 + $0x200] sm:$0xff]
  %v2821 = vld [vmem:[%s3 + $0x208] sm:$0xff]
  %v2822 = vld [vmem:[%s3 + $0x210] sm:$0xff]
  %v2823 = vld [vmem:[%s3 + $0x218] sm:$0xff]
  %v2824 = vld [vmem:[%s3 + $0x220] sm:$0xff]
  %v2825 = vld [vmem:[%s3 + $0x228] sm:$0xff]
  %v2826 = vld [vmem:[%s3 + $0x230] sm:$0xff]
  %v2827 = vld [vmem:[%s3 + $0x238] sm:$0xff]
  %v2828 = vld [vmem:[%s3 + $0x240] sm:$0xff]
  %v2829 = vld [vmem:[%s3 + $0x248] sm:$0xff]
  %v2830 = vld [vmem:[%s3 + $0x250] sm:$0xff]
  %v2831 = vld [vmem:[%s3 + $0x258] sm:$0xff]
  %v2832 = vld [vmem:[%s3 + $0x260] sm:$0xff]
  %v2833 = vld [vmem:[%s3 + $0x268] sm:$0xff]
  %v2834 = vld [vmem:[%s3 + $0x270] sm:$0xff]
  %v2835 = vld [vmem:[%s3 + $0x278] sm:$0xff]
  %v2836 = vld [vmem:[%s3 + $0x280] sm:$0xff]
  %v2837 = vld [vmem:[%s3 + $0x288] sm:$0xff]
  %v2838 = vld [vmem:[%s3 + $0x290] sm:$0xff]
  %v2839 = vld [vmem:[%s3 + $0x298] sm:$0xff]
  %v2840 = vld [vmem:[%s3 + $0x2a0] sm:$0xff]
  %v2841 = vld [vmem:[%s3 + $0x2a8] sm:$0xff]
  %v2842 = vld [vmem:[%s3 + $0x2b0] sm:$0xff]
  %v2843 = vld [vmem:[%s3 + $0x2b8] sm:$0xff]
  %v2844 = vld [vmem:[%s3 + $0x2c0] sm:$0xff]
  %v2845 = vld [vmem:[%s3 + $0x2c8] sm:$0xff]
  %v2846 = vld [vmem:[%s3 + $0x2d0] sm:$0xff]
  %v2847 = vld [vmem:[%s3 + $0x2d8] sm:$0xff]
  %v2848 = vld [vmem:[%s3 + $0x2e0] sm:$0xff]
  %v2849 = vld [vmem:[%s3 + $0x2e8] sm:$0xff]
  %v2850 = vld [vmem:[%s3 + $0x2f0] sm:$0xff]
  %v2851 = vld [vmem:[%s3 + $0x2f8] sm:$0xff]
  %2852 = vmatprep.subr.mxu0 %v2847
  %2853 = vmatpush1.msra.mxu0 %v2846
  %2854 = vmatprep.subr.mxu0 %v2841
  %2855 = vmatpush1.msra.mxu0 %v2840
  %2856 = vmatprep.subr.mxu0 %v2835
  %2857 = vmatpush1.msra.mxu0 %v2834
  %2858 = vmatprep.subr.mxu0 %v2829
  %2859 = vmatpush1.msra.mxu0 %v2828
  %2860 = vmatprep.subr.mxu0 %v2823
  %2861 = vmatpush1.msra.mxu0 %v2822
  %2862 = vmatprep.subr.mxu0 %v2817
  %2863 = vmatpush1.msra.mxu0 %v2816
  %2864 = vmatprep.subr.mxu0 %v2811
  %2865 = vmatpush1.msra.mxu0 %v2810
  %2866 = vmatprep.subr.mxu0 %v2805
  %2867 = vmatpush1.msra.mxu0 %v2804
  %2868 = vmatprep.subr.mxu0 %v2799
  %2869 = vmatpush1.msra.mxu0 %v2798
  %2870 = vmatprep.subr.mxu0 %v2793
  %2871 = vmatpush1.msra.mxu0 %v2792
  %2872 = vmatprep.subr.mxu0 %v2787
  %2873 = vmatpush1.msra.mxu0 %v2786
  %2874 = vmatprep.subr.mxu0 %v2781
  %2875 = vmatpush1.msra.mxu0 %v2780
  %2876 = vmatprep.subr.mxu0 %v2775
  %2877 = vmatpush1.msra.mxu0 %v2774
  %2878 = vmatprep.subr.mxu0 %v2769
  %2879 = vmatpush1.msra.mxu0 %v2768
  %2880 = vmatprep.subr.mxu0 %v2763
  %2881 = vmatpush1.msra.mxu0 %v2762
  %2882 = vmatprep.subr.mxu0 %v2757
  %2883 = vmatpush1.msra.mxu0 %v2756
  %2884 = vmatprep.subr.mxu0 0.0
  %2885 = vmatpush2.msra.mxu0 0.0
  %2886 = vmatprep.subr.mxu0 0.0
  %2887 = vmatpush2.msra.mxu0 0.0
  %2888 = vmatprep.subr.mxu0 0.0
  %2889 = vmatpush2.msra.mxu0 0.0
  %2890 = vmatprep.subr.mxu0 0.0
  %2891 = vmatpush2.msra.mxu0 0.0
  %2892 = vmatprep.subr.mxu0 0.0
  %2893 = vmatpush2.msra.mxu0 0.0
  %2894 = vmatprep.subr.mxu0 0.0
  %2895 = vmatpush2.msra.mxu0 0.0
  %2896 = vmatprep.subr.mxu0 0.0
  %2897 = vmatpush2.msra.mxu0 0.0
  %2898 = vmatprep.subr.mxu0 0.0
  %2899 = vmatpush2.msra.mxu0 0.0
  %2900 = vmatprep.subr.mxu0 0.0
  %2901 = vmatpush2.msra.mxu0 0.0
  %2902 = vmatprep.subr.mxu0 0.0
  %2903 = vmatpush2.msra.mxu0 0.0
  %2904 = vmatprep.subr.mxu0 0.0
  %2905 = vmatpush2.msra.mxu0 0.0
  %2906 = vmatprep.subr.mxu0 0.0
  %2907 = vmatpush2.msra.mxu0 0.0
  %2908 = vmatprep.subr.mxu0 0.0
  %2909 = vmatpush2.msra.mxu0 0.0
  %2910 = vmatprep.subr.mxu0 0.0
  %2911 = vmatpush2.msra.mxu0 0.0
  %2912 = vmatprep.subr.mxu0 0.0
  %2913 = vmatpush2.msra.mxu0 0.0
  %2914 = vmatprep.subr.mxu0 0.0
  %2915 = vmatpush2.msra.mxu0 0.0
  %2916 = vmatprep.mubr.f32.mxu0 0.0
  %2917 = vmatmul.mubr.f32.gmra.mxu0 %v2752
  %v2918 = vpop.f32.mrf.mxu0
  %v2919 = vadd.f32 0.0, %v2918
  %v2920 = vpop.f32.mrf.mxu0
  %v2921 = vadd.f32 0.0, %v2920
  %2922 = vdwg.mxu0
  %2923 = vmatprep.subr.mxu0 %v2849
  %2924 = vmatpush1.msra.mxu0 %v2848
  %2925 = vmatprep.subr.mxu0 %v2843
  %2926 = vmatpush1.msra.mxu0 %v2842
  %2927 = vmatprep.subr.mxu0 %v2837
  %2928 = vmatpush1.msra.mxu0 %v2836
  %2929 = vmatprep.subr.mxu0 %v2831
  %2930 = vmatpush1.msra.mxu0 %v2830
  %2931 = vmatprep.subr.mxu0 %v2825
  %2932 = vmatpush1.msra.mxu0 %v2824
  %2933 = vmatprep.subr.mxu0 %v2819
  %2934 = vmatpush1.msra.mxu0 %v2818
  %2935 = vmatprep.subr.mxu0 %v2813
  %2936 = vmatpush1.msra.mxu0 %v2812
  %2937 = vmatprep.subr.mxu0 %v2807
  %2938 = vmatpush1.msra.mxu0 %v2806
  %2939 = vmatprep.subr.mxu0 %v2801
  %2940 = vmatpush1.msra.mxu0 %v2800
  %2941 = vmatprep.subr.mxu0 %v2795
  %2942 = vmatpush1.msra.mxu0 %v2794
  %2943 = vmatprep.subr.mxu0 %v2789
  %2944 = vmatpush1.msra.mxu0 %v2788
  %2945 = vmatprep.subr.mxu0 %v2783
  %2946 = vmatpush1.msra.mxu0 %v2782
  %2947 = vmatprep.subr.mxu0 %v2777
  %2948 = vmatpush1.msra.mxu0 %v2776
  %2949 = vmatprep.subr.mxu0 %v2771
  %2950 = vmatpush1.msra.mxu0 %v2770
  %2951 = vmatprep.subr.mxu0 %v2765
  %2952 = vmatpush1.msra.mxu0 %v2764
  %2953 = vmatprep.subr.mxu0 %v2759
  %2954 = vmatpush1.msra.mxu0 %v2758
  %2955 = vmatprep.subr.mxu0 0.0
  %2956 = vmatpush2.msra.mxu0 0.0
  %2957 = vmatprep.subr.mxu0 0.0
  %2958 = vmatpush2.msra.mxu0 0.0
  %2959 = vmatprep.subr.mxu0 0.0
  %2960 = vmatpush2.msra.mxu0 0.0
  %2961 = vmatprep.subr.mxu0 0.0
  %2962 = vmatpush2.msra.mxu0 0.0
  %2963 = vmatprep.subr.mxu0 0.0
  %2964 = vmatpush2.msra.mxu0 0.0
  %2965 = vmatprep.subr.mxu0 0.0
  %2966 = vmatpush2.msra.mxu0 0.0
  %2967 = vmatprep.subr.mxu0 0.0
  %2968 = vmatpush2.msra.mxu0 0.0
  %2969 = vmatprep.subr.mxu0 0.0
  %2970 = vmatpush2.msra.mxu0 0.0
  %2971 = vmatprep.subr.mxu0 0.0
  %2972 = vmatpush2.msra.mxu0 0.0
  %2973 = vmatprep.subr.mxu0 0.0
  %2974 = vmatpush2.msra.mxu0 0.0
  %2975 = vmatprep.subr.mxu0 0.0
  %2976 = vmatpush2.msra.mxu0 0.0
  %2977 = vmatprep.subr.mxu0 0.0
  %2978 = vmatpush2.msra.mxu0 0.0
  %2979 = vmatprep.subr.mxu0 0.0
  %2980 = vmatpush2.msra.mxu0 0.0
  %2981 = vmatprep.subr.mxu0 0.0
  %2982 = vmatpush2.msra.mxu0 0.0
  %2983 = vmatprep.subr.mxu0 0.0
  %2984 = vmatpush2.msra.mxu0 0.0
  %2985 = vmatprep.subr.mxu0 0.0
  %2986 = vmatpush2.msra.mxu0 0.0
  %2987 = vmatprep.mubr.f32.mxu0 0.0
  %2988 = vmatmul.mubr.f32.gmra.mxu0 %v2752
  %v2989 = vpop.f32.mrf.mxu0
  %v2990 = vadd.f32 0.0, %v2989
  %v2991 = vpop.f32.mrf.mxu0
  %v2992 = vadd.f32 0.0, %v2991
  %2993 = vdwg.mxu0
  %2994 = vmatprep.subr.mxu0 %v2851
  %2995 = vmatpush1.msra.mxu0 %v2850
  %2996 = vmatprep.subr.mxu0 %v2845
  %2997 = vmatpush1.msra.mxu0 %v2844
  %2998 = vmatprep.subr.mxu0 %v2839
  %2999 = vmatpush1.msra.mxu0 %v2838
  %3000 = vmatprep.subr.mxu0 %v2833
  %3001 = vmatpush1.msra.mxu0 %v2832
  %3002 = vmatprep.subr.mxu0 %v2827
  %3003 = vmatpush1.msra.mxu0 %v2826
  %3004 = vmatprep.subr.mxu0 %v2821
  %3005 = vmatpush1.msra.mxu0 %v2820
  %3006 = vmatprep.subr.mxu0 %v2815
  %3007 = vmatpush1.msra.mxu0 %v2814
  %3008 = vmatprep.subr.mxu0 %v2809
  %3009 = vmatpush1.msra.mxu0 %v2808
  %3010 = vmatprep.subr.mxu0 %v2803
  %3011 = vmatpush1.msra.mxu0 %v2802
  %3012 = vmatprep.subr.mxu0 %v2797
  %3013 = vmatpush1.msra.mxu0 %v2796
  %3014 = vmatprep.subr.mxu0 %v2791
  %3015 = vmatpush1.msra.mxu0 %v2790
  %3016 = vmatprep.subr.mxu0 %v2785
  %3017 = vmatpush1.msra.mxu0 %v2784
  %3018 = vmatprep.subr.mxu0 %v2779
  %3019 = vmatpush1.msra.mxu0 %v2778
  %3020 = vmatprep.subr.mxu0 %v2773
  %3021 = vmatpush1.msra.mxu0 %v2772
  %3022 = vmatprep.subr.mxu0 %v2767
  %3023 = vmatpush1.msra.mxu0 %v2766
  %3024 = vmatprep.subr.mxu0 %v2761
  %3025 = vmatpush1.msra.mxu0 %v2760
  %3026 = vmatprep.subr.mxu0 0.0
  %3027 = vmatpush2.msra.mxu0 0.0
  %3028 = vmatprep.subr.mxu0 0.0
  %3029 = vmatpush2.msra.mxu0 0.0
  %3030 = vmatprep.subr.mxu0 0.0
  %3031 = vmatpush2.msra.mxu0 0.0
  %3032 = vmatprep.subr.mxu0 0.0
  %3033 = vmatpush2.msra.mxu0 0.0
  %3034 = vmatprep.subr.mxu0 0.0
  %3035 = vmatpush2.msra.mxu0 0.0
  %3036 = vmatprep.subr.mxu0 0.0
  %3037 = vmatpush2.msra.mxu0 0.0
  %3038 = vmatprep.subr.mxu0 0.0
  %3039 = vmatpush2.msra.mxu0 0.0
  %3040 = vmatprep.subr.mxu0 0.0
  %3041 = vmatpush2.msra.mxu0 0.0
  %3042 = vmatprep.subr.mxu0 0.0
  %3043 = vmatpush2.msra.mxu0 0.0
  %3044 = vmatprep.subr.mxu0 0.0
  %3045 = vmatpush2.msra.mxu0 0.0
  %3046 = vmatprep.subr.mxu0 0.0
  %3047 = vmatpush2.msra.mxu0 0.0
  %3048 = vmatprep.subr.mxu0 0.0
  %3049 = vmatpush2.msra.mxu0 0.0
  %3050 = vmatprep.subr.mxu0 0.0
  %3051 = vmatpush2.msra.mxu0 0.0
  %3052 = vmatprep.subr.mxu0 0.0
  %3053 = vmatpush2.msra.mxu0 0.0
  %3054 = vmatprep.subr.mxu0 0.0
  %3055 = vmatpush2.msra.mxu0 0.0
  %3056 = vmatprep.subr.mxu0 0.0
  %3057 = vmatpush2.msra.mxu0 0.0
  %3058 = vmatprep.mubr.f32.mxu0 0.0
  %3059 = vmatmul.mubr.f32.gmra.mxu0 %v2752
  %v3060 = vpop.f32.mrf.mxu0
  %v3061 = vadd.f32 0.0, %v3060
  %v3062 = vpop.f32.mrf.mxu0
  %v3063 = vadd.f32 0.0, %v3062
  %3064 = vdwg.mxu0
  %s3065 = scalar_lea.vmem %s2, 2
  %v3066 = vld [vmem:[%s3065] ss:$4 sm:$0x7]
  %3067 = vmatprep.subr.mxu0 0.0
  %3068 = vmatpush1.xpose.msra.mxu0 0.0
  %3069 = vmatprep.subr.mxu0 0.0
  %3070 = vmatpush1.xpose.msra.mxu0 0.0
  %3071 = vmatprep.subr.mxu0 0.0
  %3072 = vmatpush1.xpose.msra.mxu0 0.0
  %3073 = vmatprep.subr.mxu0 0.0
  %3074 = vmatpush1.xpose.msra.mxu0 0.0
  %3075 = vmatprep.subr.mxu0 0.0
  %3076 = vmatpush1.xpose.msra.mxu0 0.0
  %3077 = vmatprep.subr.mxu0 0.0
  %3078 = vmatpush1.xpose.msra.mxu0 0.0
  %3079 = vmatprep.subr.mxu0 0.0
  %3080 = vmatpush1.xpose.msra.mxu0 0.0
  %3081 = vmatprep.subr.mxu0 0.0
  %3082 = vmatpush1.xpose.msra.mxu0 0.0
  %3083 = vmatprep.subr.mxu0 0.0
  %3084 = vmatpush1.xpose.msra.mxu0 0.0
  %3085 = vmatprep.subr.mxu0 0.0
  %3086 = vmatpush1.xpose.msra.mxu0 0.0
  %3087 = vmatprep.subr.mxu0 0.0
  %3088 = vmatpush1.xpose.msra.mxu0 0.0
  %3089 = vmatprep.subr.mxu0 0.0
  %3090 = vmatpush1.xpose.msra.mxu0 0.0
  %3091 = vmatprep.subr.mxu0 0.0
  %3092 = vmatpush1.xpose.msra.mxu0 0.0
  %3093 = vmatprep.subr.mxu0 0.0
  %3094 = vmatpush1.xpose.msra.mxu0 0.0
  %3095 = vmatprep.subr.mxu0 0.0
  %3096 = vmatpush1.xpose.msra.mxu0 0.0
  %3097 = vmatprep.subr.mxu0 0.0
  %3098 = vmatpush1.xpose.msra.mxu0 %v2919
  %3099 = vmatprep.subr.mxu0 0.0
  %3100 = vmatpush2.xpose.msra.mxu0 0.0
  %3101 = vmatprep.subr.mxu0 0.0
  %3102 = vmatpush2.xpose.msra.mxu0 0.0
  %3103 = vmatprep.subr.mxu0 0.0
  %3104 = vmatpush2.xpose.msra.mxu0 0.0
  %3105 = vmatprep.subr.mxu0 0.0
  %3106 = vmatpush2.xpose.msra.mxu0 0.0
  %3107 = vmatprep.subr.mxu0 0.0
  %3108 = vmatpush2.xpose.msra.mxu0 0.0
  %3109 = vmatprep.subr.mxu0 0.0
  %3110 = vmatpush2.xpose.msra.mxu0 0.0
  %3111 = vmatprep.subr.mxu0 0.0
  %3112 = vmatpush2.xpose.msra.mxu0 0.0
  %3113 = vmatprep.subr.mxu0 0.0
  %3114 = vmatpush2.xpose.msra.mxu0 0.0
  %3115 = vmatprep.subr.mxu0 0.0
  %3116 = vmatpush2.xpose.msra.mxu0 0.0
  %3117 = vmatprep.subr.mxu0 0.0
  %3118 = vmatpush2.xpose.msra.mxu0 0.0
  %3119 = vmatprep.subr.mxu0 0.0
  %3120 = vmatpush2.xpose.msra.mxu0 0.0
  %3121 = vmatprep.subr.mxu0 0.0
  %3122 = vmatpush2.xpose.msra.mxu0 0.0
  %3123 = vmatprep.subr.mxu0 0.0
  %3124 = vmatpush2.xpose.msra.mxu0 0.0
  %3125 = vmatprep.subr.mxu0 0.0
  %3126 = vmatpush2.xpose.msra.mxu0 0.0
  %3127 = vmatprep.subr.mxu0 0.0
  %3128 = vmatpush2.xpose.msra.mxu0 0.0
  %3129 = vmatprep.subr.mxu0 0.0
  %3130 = vmatpush2.xpose.msra.mxu0 0.0
  %3131 = vmatprep.mubr.f32.mxu0 0.0
  %3132 = vmatmul.mubr.f32.gmra.mxu0 %v3066
  %v3133 = vpop.f32.mrf.mxu0
  %v3134 = vadd.f32 0.0, %v3133
  %v3135 = vpop.f32.mrf.mxu0
  %3136 = vdwg.mxu0
  %v3137 = vsel %vm2755, %v3134, -1e+30
  %v3138 = vsel %vm793, %v3137, -inf
  %3139 = vmax.xlane.f32.xlu0 %v3138
  %v3140 = vpop.xlane.xlu0 %3139
  %v3141 = vsub.f32 %v3137, %v3140
  %v3142 = vmul.f32 %v3141, 1.442695
  %v3143 = vpow.pop %v3142
  %v3144 = vsel %vm793, %v3143, 0.0
  %3145 = vadd.xlane.f32.xlu0 %v3144
  %v3146 = vpop.xlane.xlu0 %3145
  %v3147 = vrcp.pop %v3146
  %v3148 = vmul.f32 %v3143, %v3147
  %v3150 = vsel %vm805, %v3148, 0
  %v3153 = vsel %vm809, %v2992, 0
  %3155 = vmatprep.subr.mxu0 0.0
  %3156 = vmatpush1.msra.mxu0 0.0
  %3157 = vmatprep.subr.mxu0 0.0
  %3158 = vmatpush1.msra.mxu0 0.0
  %3159 = vmatprep.subr.mxu0 0.0
  %3160 = vmatpush1.msra.mxu0 0.0
  %3161 = vmatprep.subr.mxu0 0.0
  %3162 = vmatpush1.msra.mxu0 0.0
  %3163 = vmatprep.subr.mxu0 0.0
  %3164 = vmatpush1.msra.mxu0 0.0
  %3165 = vmatprep.subr.mxu0 0.0
  %3166 = vmatpush1.msra.mxu0 0.0
  %3167 = vmatprep.subr.mxu0 0.0
  %3168 = vmatpush1.msra.mxu0 0.0
  %3169 = vmatprep.subr.mxu0 0.0
  %3170 = vmatpush1.msra.mxu0 0.0
  %3171 = vmatprep.subr.mxu0 0.0
  %3172 = vmatpush1.msra.mxu0 0.0
  %3173 = vmatprep.subr.mxu0 0.0
  %3174 = vmatpush1.msra.mxu0 0.0
  %3175 = vmatprep.subr.mxu0 0.0
  %3176 = vmatpush1.msra.mxu0 0.0
  %3177 = vmatprep.subr.mxu0 0.0
  %3178 = vmatpush1.msra.mxu0 0.0
  %3179 = vmatprep.subr.mxu0 0.0
  %3180 = vmatpush1.msra.mxu0 0.0
  %3181 = vmatprep.subr.mxu0 0.0
  %3182 = vmatpush1.msra.mxu0 0.0
  %3183 = vmatprep.subr.mxu0 0.0
  %3184 = vmatpush1.msra.mxu0 0.0
  %3185 = vmatprep.subr.mxu0 0.0
  %3186 = vmatpush1.msra.mxu0 %v3153
  %3187 = vmatprep.subr.mxu0 0.0
  %3188 = vmatpush2.msra.mxu0 0.0
  %3189 = vmatprep.subr.mxu0 0.0
  %3190 = vmatpush2.msra.mxu0 0.0
  %3191 = vmatprep.subr.mxu0 0.0
  %3192 = vmatpush2.msra.mxu0 0.0
  %3193 = vmatprep.subr.mxu0 0.0
  %3194 = vmatpush2.msra.mxu0 0.0
  %3195 = vmatprep.subr.mxu0 0.0
  %3196 = vmatpush2.msra.mxu0 0.0
  %3197 = vmatprep.subr.mxu0 0.0
  %3198 = vmatpush2.msra.mxu0 0.0
  %3199 = vmatprep.subr.mxu0 0.0
  %3200 = vmatpush2.msra.mxu0 0.0
  %3201 = vmatprep.subr.mxu0 0.0
  %3202 = vmatpush2.msra.mxu0 0.0
  %3203 = vmatprep.subr.mxu0 0.0
  %3204 = vmatpush2.msra.mxu0 0.0
  %3205 = vmatprep.subr.mxu0 0.0
  %3206 = vmatpush2.msra.mxu0 0.0
  %3207 = vmatprep.subr.mxu0 0.0
  %3208 = vmatpush2.msra.mxu0 0.0
  %3209 = vmatprep.subr.mxu0 0.0
  %3210 = vmatpush2.msra.mxu0 0.0
  %3211 = vmatprep.subr.mxu0 0.0
  %3212 = vmatpush2.msra.mxu0 0.0
  %3213 = vmatprep.subr.mxu0 0.0
  %3214 = vmatpush2.msra.mxu0 0.0
  %3215 = vmatprep.subr.mxu0 0.0
  %3216 = vmatpush2.msra.mxu0 0.0
  %3217 = vmatprep.subr.mxu0 0.0
  %3218 = vmatpush2.msra.mxu0 0.0
  %3219 = vmatprep.mubr.f32.mxu0 0.0
  %3220 = vmatmul.mubr.f32.gmra.mxu0 %v3150
  %v3221 = vpop.f32.mrf.mxu0
  %v3222 = vadd.f32 0.0, %v3221
  %v3223 = vpop.f32.mrf.mxu0
  %3224 = vdwg.mxu0
  %v3226 = vlaneseq
  %v3227 = vshrl.u32 %v3226, 7
  %v3228 = vsub.s32 1, %v3227
  %v3229 = vrot.slane %v3066, %v3228
  %3231 = vmatprep.subr.mxu0 0.0
  %3232 = vmatpush1.xpose.msra.mxu0 0.0
  %3233 = vmatprep.subr.mxu0 0.0
  %3234 = vmatpush1.xpose.msra.mxu0 0.0
  %3235 = vmatprep.subr.mxu0 0.0
  %3236 = vmatpush1.xpose.msra.mxu0 0.0
  %3237 = vmatprep.subr.mxu0 0.0
  %3238 = vmatpush1.xpose.msra.mxu0 0.0
  %3239 = vmatprep.subr.mxu0 0.0
  %3240 = vmatpush1.xpose.msra.mxu0 0.0
  %3241 = vmatprep.subr.mxu0 0.0
  %3242 = vmatpush1.xpose.msra.mxu0 0.0
  %3243 = vmatprep.subr.mxu0 0.0
  %3244 = vmatpush1.xpose.msra.mxu0 0.0
  %3245 = vmatprep.subr.mxu0 0.0
  %3246 = vmatpush1.xpose.msra.mxu0 0.0
  %3247 = vmatprep.subr.mxu0 0.0
  %3248 = vmatpush1.xpose.msra.mxu0 0.0
  %3249 = vmatprep.subr.mxu0 0.0
  %3250 = vmatpush1.xpose.msra.mxu0 0.0
  %3251 = vmatprep.subr.mxu0 0.0
  %3252 = vmatpush1.xpose.msra.mxu0 0.0
  %3253 = vmatprep.subr.mxu0 0.0
  %3254 = vmatpush1.xpose.msra.mxu0 0.0
  %3255 = vmatprep.subr.mxu0 0.0
  %3256 = vmatpush1.xpose.msra.mxu0 0.0
  %3257 = vmatprep.subr.mxu0 0.0
  %3258 = vmatpush1.xpose.msra.mxu0 0.0
  %3259 = vmatprep.subr.mxu0 0.0
  %3260 = vmatpush1.xpose.msra.mxu0 0.0
  %3261 = vmatprep.subr.mxu0 0.0
  %3262 = vmatpush1.xpose.msra.mxu0 %v2921
  %3263 = vmatprep.subr.mxu0 0.0
  %3264 = vmatpush2.xpose.msra.mxu0 0.0
  %3265 = vmatprep.subr.mxu0 0.0
  %3266 = vmatpush2.xpose.msra.mxu0 0.0
  %3267 = vmatprep.subr.mxu0 0.0
  %3268 = vmatpush2.xpose.msra.mxu0 0.0
  %3269 = vmatprep.subr.mxu0 0.0
  %3270 = vmatpush2.xpose.msra.mxu0 0.0
  %3271 = vmatprep.subr.mxu0 0.0
  %3272 = vmatpush2.xpose.msra.mxu0 0.0
  %3273 = vmatprep.subr.mxu0 0.0
  %3274 = vmatpush2.xpose.msra.mxu0 0.0
  %3275 = vmatprep.subr.mxu0 0.0
  %3276 = vmatpush2.xpose.msra.mxu0 0.0
  %3277 = vmatprep.subr.mxu0 0.0
  %3278 = vmatpush2.xpose.msra.mxu0 0.0
  %3279 = vmatprep.subr.mxu0 0.0
  %3280 = vmatpush2.xpose.msra.mxu0 0.0
  %3281 = vmatprep.subr.mxu0 0.0
  %3282 = vmatpush2.xpose.msra.mxu0 0.0
  %3283 = vmatprep.subr.mxu0 0.0
  %3284 = vmatpush2.xpose.msra.mxu0 0.0
  %3285 = vmatprep.subr.mxu0 0.0
  %3286 = vmatpush2.xpose.msra.mxu0 0.0
  %3287 = vmatprep.subr.mxu0 0.0
  %3288 = vmatpush2.xpose.msra.mxu0 0.0
  %3289 = vmatprep.subr.mxu0 0.0
  %3290 = vmatpush2.xpose.msra.mxu0 0.0
  %3291 = vmatprep.subr.mxu0 0.0
  %3292 = vmatpush2.xpose.msra.mxu0 0.0
  %3293 = vmatprep.subr.mxu0 0.0
  %3294 = vmatpush2.xpose.msra.mxu0 0.0
  %3295 = vmatprep.mubr.f32.mxu0 0.0
  %3296 = vmatmul.mubr.f32.gmra.mxu0 %v3229
  %v3297 = vpop.f32.mrf.mxu0
  %v3298 = vadd.f32 0.0, %v3297
  %v3299 = vpop.f32.mrf.mxu0
  %3300 = vdwg.mxu0
  %v3301 = vsel %vm2755, %v3298, -1e+30
  %v3302 = vsel %vm793, %v3301, -inf
  %3303 = vmax.xlane.f32.xlu0 %v3302
  %v3304 = vpop.xlane.xlu0 %3303
  %v3305 = vsub.f32 %v3301, %v3304
  %v3306 = vmul.f32 %v3305, 1.442695
  %v3307 = vpow.pop %v3306
  %v3308 = vsel %vm793, %v3307, 0.0
  %3309 = vadd.xlane.f32.xlu0 %v3308
  %v3310 = vpop.xlane.xlu0 %3309
  %v3311 = vrcp.pop %v3310
  %v3312 = vmul.f32 %v3307, %v3311
  %v3314 = vsel %vm805, %v3312, 0
  %v3317 = vsel %vm809, %v3061, 0
  %3319 = vmatprep.subr.mxu0 0.0
  %3320 = vmatpush1.msra.mxu0 0.0
  %3321 = vmatprep.subr.mxu0 0.0
  %3322 = vmatpush1.msra.mxu0 0.0
  %3323 = vmatprep.subr.mxu0 0.0
  %3324 = vmatpush1.msra.mxu0 0.0
  %3325 = vmatprep.subr.mxu0 0.0
  %3326 = vmatpush1.msra.mxu0 0.0
  %3327 = vmatprep.subr.mxu0 0.0
  %3328 = vmatpush1.msra.mxu0 0.0
  %3329 = vmatprep.subr.mxu0 0.0
  %3330 = vmatpush1.msra.mxu0 0.0
  %3331 = vmatprep.subr.mxu0 0.0
  %3332 = vmatpush1.msra.mxu0 0.0
  %3333 = vmatprep.subr.mxu0 0.0
  %3334 = vmatpush1.msra.mxu0 0.0
  %3335 = vmatprep.subr.mxu0 0.0
  %3336 = vmatpush1.msra.mxu0 0.0
  %3337 = vmatprep.subr.mxu0 0.0
  %3338 = vmatpush1.msra.mxu0 0.0
  %3339 = vmatprep.subr.mxu0 0.0
  %3340 = vmatpush1.msra.mxu0 0.0
  %3341 = vmatprep.subr.mxu0 0.0
  %3342 = vmatpush1.msra.mxu0 0.0
  %3343 = vmatprep.subr.mxu0 0.0
  %3344 = vmatpush1.msra.mxu0 0.0
  %3345 = vmatprep.subr.mxu0 0.0
  %3346 = vmatpush1.msra.mxu0 0.0
  %3347 = vmatprep.subr.mxu0 0.0
  %3348 = vmatpush1.msra.mxu0 0.0
  %3349 = vmatprep.subr.mxu0 0.0
  %3350 = vmatpush1.msra.mxu0 %v3317
  %3351 = vmatprep.subr.mxu0 0.0
  %3352 = vmatpush2.msra.mxu0 0.0
  %3353 = vmatprep.subr.mxu0 0.0
  %3354 = vmatpush2.msra.mxu0 0.0
  %3355 = vmatprep.subr.mxu0 0.0
  %3356 = vmatpush2.msra.mxu0 0.0
  %3357 = vmatprep.subr.mxu0 0.0
  %3358 = vmatpush2.msra.mxu0 0.0
  %3359 = vmatprep.subr.mxu0 0.0
  %3360 = vmatpush2.msra.mxu0 0.0
  %3361 = vmatprep.subr.mxu0 0.0
  %3362 = vmatpush2.msra.mxu0 0.0
  %3363 = vmatprep.subr.mxu0 0.0
  %3364 = vmatpush2.msra.mxu0 0.0
  %3365 = vmatprep.subr.mxu0 0.0
  %3366 = vmatpush2.msra.mxu0 0.0
  %3367 = vmatprep.subr.mxu0 0.0
  %3368 = vmatpush2.msra.mxu0 0.0
  %3369 = vmatprep.subr.mxu0 0.0
  %3370 = vmatpush2.msra.mxu0 0.0
  %3371 = vmatprep.subr.mxu0 0.0
  %3372 = vmatpush2.msra.mxu0 0.0
  %3373 = vmatprep.subr.mxu0 0.0
  %3374 = vmatpush2.msra.mxu0 0.0
  %3375 = vmatprep.subr.mxu0 0.0
  %3376 = vmatpush2.msra.mxu0 0.0
  %3377 = vmatprep.subr.mxu0 0.0
  %3378 = vmatpush2.msra.mxu0 0.0
  %3379 = vmatprep.subr.mxu0 0.0
  %3380 = vmatpush2.msra.mxu0 0.0
  %3381 = vmatprep.subr.mxu0 0.0
  %3382 = vmatpush2.msra.mxu0 0.0
  %3383 = vmatprep.mubr.f32.mxu0 0.0
  %3384 = vmatmul.mubr.f32.gmra.mxu0 %v3314
  %v3385 = vpop.f32.mrf.mxu0
  %v3386 = vadd.f32 0.0, %v3385
  %v3387 = vpop.f32.mrf.mxu0
  %3388 = vdwg.mxu0
  %v3389 = vlaneseq
  %v3390 = vshrl.u32 %v3389, 7
  %v3391 = vsub.s32 2, %v3390
  %v3392 = vrot.slane %v3066, %v3391
  %3394 = vmatprep.subr.mxu0 0.0
  %3395 = vmatpush1.xpose.msra.mxu0 0.0
  %3396 = vmatprep.subr.mxu0 0.0
  %3397 = vmatpush1.xpose.msra.mxu0 0.0
  %3398 = vmatprep.subr.mxu0 0.0
  %3399 = vmatpush1.xpose.msra.mxu0 0.0
  %3400 = vmatprep.subr.mxu0 0.0
  %3401 = vmatpush1.xpose.msra.mxu0 0.0
  %3402 = vmatprep.subr.mxu0 0.0
  %3403 = vmatpush1.xpose.msra.mxu0 0.0
  %3404 = vmatprep.subr.mxu0 0.0
  %3405 = vmatpush1.xpose.msra.mxu0 0.0
  %3406 = vmatprep.subr.mxu0 0.0
  %3407 = vmatpush1.xpose.msra.mxu0 0.0
  %3408 = vmatprep.subr.mxu0 0.0
  %3409 = vmatpush1.xpose.msra.mxu0 0.0
  %3410 = vmatprep.subr.mxu0 0.0
  %3411 = vmatpush1.xpose.msra.mxu0 0.0
  %3412 = vmatprep.subr.mxu0 0.0
  %3413 = vmatpush1.xpose.msra.mxu0 0.0
  %3414 = vmatprep.subr.mxu0 0.0
  %3415 = vmatpush1.xpose.msra.mxu0 0.0
  %3416 = vmatprep.subr.mxu0 0.0
  %3417 = vmatpush1.xpose.msra.mxu0 0.0
  %3418 = vmatprep.subr.mxu0 0.0
  %3419 = vmatpush1.xpose.msra.mxu0 0.0
  %3420 = vmatprep.subr.mxu0 0.0
  %3421 = vmatpush1.xpose.msra.mxu0 0.0
  %3422 = vmatprep.subr.mxu0 0.0
  %3423 = vmatpush1.xpose.msra.mxu0 0.0
  %3424 = vmatprep.subr.mxu0 0.0
  %3425 = vmatpush1.xpose.msra.mxu0 %v2990
  %3426 = vmatprep.subr.mxu0 0.0
  %3427 = vmatpush2.xpose.msra.mxu0 0.0
  %3428 = vmatprep.subr.mxu0 0.0
  %3429 = vmatpush2.xpose.msra.mxu0 0.0
  %3430 = vmatprep.subr.mxu0 0.0
  %3431 = vmatpush2.xpose.msra.mxu0 0.0
  %3432 = vmatprep.subr.mxu0 0.0
  %3433 = vmatpush2.xpose.msra.mxu0 0.0
  %3434 = vmatprep.subr.mxu0 0.0
  %3435 = vmatpush2.xpose.msra.mxu0 0.0
  %3436 = vmatprep.subr.mxu0 0.0
  %3437 = vmatpush2.xpose.msra.mxu0 0.0
  %3438 = vmatprep.subr.mxu0 0.0
  %3439 = vmatpush2.xpose.msra.mxu0 0.0
  %3440 = vmatprep.subr.mxu0 0.0
  %3441 = vmatpush2.xpose.msra.mxu0 0.0
  %3442 = vmatprep.subr.mxu0 0.0
  %3443 = vmatpush2.xpose.msra.mxu0 0.0
  %3444 = vmatprep.subr.mxu0 0.0
  %3445 = vmatpush2.xpose.msra.mxu0 0.0
  %3446 = vmatprep.subr.mxu0 0.0
  %3447 = vmatpush2.xpose.msra.mxu0 0.0
  %3448 = vmatprep.subr.mxu0 0.0
  %3449 = vmatpush2.xpose.msra.mxu0 0.0
  %3450 = vmatprep.subr.mxu0 0.0
  %3451 = vmatpush2.xpose.msra.mxu0 0.0
  %3452 = vmatprep.subr.mxu0 0.0
  %3453 = vmatpush2.xpose.msra.mxu0 0.0
  %3454 = vmatprep.subr.mxu0 0.0
  %3455 = vmatpush2.xpose.msra.mxu0 0.0
  %3456 = vmatprep.subr.mxu0 0.0
  %3457 = vmatpush2.xpose.msra.mxu0 0.0
  %3458 = vmatprep.mubr.f32.mxu0 0.0
  %3459 = vmatmul.mubr.f32.gmra.mxu0 %v3392
  %v3460 = vpop.f32.mrf.mxu0
  %v3461 = vadd.f32 0.0, %v3460
  %v3462 = vpop.f32.mrf.mxu0
  %3463 = vdwg.mxu0
  %v3464 = vsel %vm2755, %v3461, -1e+30
  %v3465 = vsel %vm793, %v3464, -inf
  %3466 = vmax.xlane.f32.xlu0 %v3465
  %v3467 = vpop.xlane.xlu0 %3466
  %v3468 = vsub.f32 %v3464, %v3467
  %v3469 = vmul.f32 %v3468, 1.442695
  %v3470 = vpow.pop %v3469
  %v3471 = vsel %vm793, %v3470, 0.0
  %3472 = vadd.xlane.f32.xlu0 %v3471
  %v3473 = vpop.xlane.xlu0 %3472
  %v3474 = vrcp.pop %v3473
  %v3475 = vmul.f32 %v3470, %v3474
  %v3477 = vsel %vm805, %v3475, 0
  %v3480 = vsel %vm809, %v3063, 0
  %3482 = vmatprep.subr.mxu0 0.0
  %3483 = vmatpush1.msra.mxu0 0.0
  %3484 = vmatprep.subr.mxu0 0.0
  %3485 = vmatpush1.msra.mxu0 0.0
  %3486 = vmatprep.subr.mxu0 0.0
  %3487 = vmatpush1.msra.mxu0 0.0
  %3488 = vmatprep.subr.mxu0 0.0
  %3489 = vmatpush1.msra.mxu0 0.0
  %3490 = vmatprep.subr.mxu0 0.0
  %3491 = vmatpush1.msra.mxu0 0.0
  %3492 = vmatprep.subr.mxu0 0.0
  %3493 = vmatpush1.msra.mxu0 0.0
  %3494 = vmatprep.subr.mxu0 0.0
  %3495 = vmatpush1.msra.mxu0 0.0
  %3496 = vmatprep.subr.mxu0 0.0
  %3497 = vmatpush1.msra.mxu0 0.0
  %3498 = vmatprep.subr.mxu0 0.0
  %3499 = vmatpush1.msra.mxu0 0.0
  %3500 = vmatprep.subr.mxu0 0.0
  %3501 = vmatpush1.msra.mxu0 0.0
  %3502 = vmatprep.subr.mxu0 0.0
  %3503 = vmatpush1.msra.mxu0 0.0
  %3504 = vmatprep.subr.mxu0 0.0
  %3505 = vmatpush1.msra.mxu0 0.0
  %3506 = vmatprep.subr.mxu0 0.0
  %3507 = vmatpush1.msra.mxu0 0.0
  %3508 = vmatprep.subr.mxu0 0.0
  %3509 = vmatpush1.msra.mxu0 0.0
  %3510 = vmatprep.subr.mxu0 0.0
  %3511 = vmatpush1.msra.mxu0 0.0
  %3512 = vmatprep.subr.mxu0 0.0
  %3513 = vmatpush1.msra.mxu0 %v3480
  %3514 = vmatprep.subr.mxu0 0.0
  %3515 = vmatpush2.msra.mxu0 0.0
  %3516 = vmatprep.subr.mxu0 0.0
  %3517 = vmatpush2.msra.mxu0 0.0
  %3518 = vmatprep.subr.mxu0 0.0
  %3519 = vmatpush2.msra.mxu0 0.0
  %3520 = vmatprep.subr.mxu0 0.0
  %3521 = vmatpush2.msra.mxu0 0.0
  %3522 = vmatprep.subr.mxu0 0.0
  %3523 = vmatpush2.msra.mxu0 0.0
  %3524 = vmatprep.subr.mxu0 0.0
  %3525 = vmatpush2.msra.mxu0 0.0
  %3526 = vmatprep.subr.mxu0 0.0
  %3527 = vmatpush2.msra.mxu0 0.0
  %3528 = vmatprep.subr.mxu0 0.0
  %3529 = vmatpush2.msra.mxu0 0.0
  %3530 = vmatprep.subr.mxu0 0.0
  %3531 = vmatpush2.msra.mxu0 0.0
  %3532 = vmatprep.subr.mxu0 0.0
  %3533 = vmatpush2.msra.mxu0 0.0
  %3534 = vmatprep.subr.mxu0 0.0
  %3535 = vmatpush2.msra.mxu0 0.0
  %3536 = vmatprep.subr.mxu0 0.0
  %3537 = vmatpush2.msra.mxu0 0.0
  %3538 = vmatprep.subr.mxu0 0.0
  %3539 = vmatpush2.msra.mxu0 0.0
  %3540 = vmatprep.subr.mxu0 0.0
  %3541 = vmatpush2.msra.mxu0 0.0
  %3542 = vmatprep.subr.mxu0 0.0
  %3543 = vmatpush2.msra.mxu0 0.0
  %3544 = vmatprep.subr.mxu0 0.0
  %3545 = vmatpush2.msra.mxu0 0.0
  %3546 = vmatprep.mubr.f32.mxu0 0.0
  %3547 = vmatmul.mubr.f32.gmra.mxu0 %v3477
  %v3548 = vpop.f32.mrf.mxu0
  %v3549 = vadd.f32 0.0, %v3548
  %v3550 = vpop.f32.mrf.mxu0
  %3551 = vdwg.mxu0
  %v3552 = vld [vmem:[%s4] sm:$0xff]
  %v3553 = vld [vmem:[%s4 + $0x8] sm:$0xff]
  %v3554 = vld [vmem:[%s4 + $0x10] sm:$0xff]
  %v3555 = vld [vmem:[%s4 + $0x18] sm:$0xff]
  %v3556 = vld [vmem:[%s4 + $0x20] sm:$0xff]
  %v3557 = vld [vmem:[%s4 + $0x28] sm:$0xff]
  %v3558 = vld [vmem:[%s4 + $0x30] sm:$0xff]
  %v3559 = vld [vmem:[%s4 + $0x38] sm:$0xff]
  %v3560 = vld [vmem:[%s4 + $0x40] sm:$0xff]
  %v3561 = vld [vmem:[%s4 + $0x48] sm:$0xff]
  %v3562 = vld [vmem:[%s4 + $0x50] sm:$0xff]
  %v3563 = vld [vmem:[%s4 + $0x58] sm:$0xff]
  %v3564 = vld [vmem:[%s4 + $0x60] sm:$0xff]
  %v3565 = vld [vmem:[%s4 + $0x68] sm:$0xff]
  %v3566 = vld [vmem:[%s4 + $0x70] sm:$0xff]
  %v3567 = vld [vmem:[%s4 + $0x78] sm:$0xff]
  %v3568 = vld [vmem:[%s4 + $0x80] sm:$0xff]
  %v3569 = vld [vmem:[%s4 + $0x88] sm:$0xff]
  %v3570 = vld [vmem:[%s4 + $0x90] sm:$0xff]
  %v3571 = vld [vmem:[%s4 + $0x98] sm:$0xff]
  %v3572 = vld [vmem:[%s4 + $0xa0] sm:$0xff]
  %v3573 = vld [vmem:[%s4 + $0xa8] sm:$0xff]
  %v3574 = vld [vmem:[%s4 + $0xb0] sm:$0xff]
  %v3575 = vld [vmem:[%s4 + $0xb8] sm:$0xff]
  %v3576 = vld [vmem:[%s4 + $0xc0] sm:$0xff]
  %v3577 = vld [vmem:[%s4 + $0xc8] sm:$0xff]
  %v3578 = vld [vmem:[%s4 + $0xd0] sm:$0xff]
  %v3579 = vld [vmem:[%s4 + $0xd8] sm:$0xff]
  %v3580 = vld [vmem:[%s4 + $0xe0] sm:$0xff]
  %v3581 = vld [vmem:[%s4 + $0xe8] sm:$0xff]
  %v3582 = vld [vmem:[%s4 + $0xf0] sm:$0xff]
  %v3583 = vld [vmem:[%s4 + $0xf8] sm:$0xff]
  %v3584 = vld [vmem:[%s4 + $0x100] sm:$0xff]
  %v3585 = vld [vmem:[%s4 + $0x108] sm:$0xff]
  %v3586 = vld [vmem:[%s4 + $0x110] sm:$0xff]
  %v3587 = vld [vmem:[%s4 + $0x118] sm:$0xff]
  %v3588 = vld [vmem:[%s4 + $0x120] sm:$0xff]
  %v3589 = vld [vmem:[%s4 + $0x128] sm:$0xff]
  %v3590 = vld [vmem:[%s4 + $0x130] sm:$0xff]
  %v3591 = vld [vmem:[%s4 + $0x138] sm:$0xff]
  %v3592 = vld [vmem:[%s4 + $0x140] sm:$0xff]
  %v3593 = vld [vmem:[%s4 + $0x148] sm:$0xff]
  %v3594 = vld [vmem:[%s4 + $0x150] sm:$0xff]
  %v3595 = vld [vmem:[%s4 + $0x158] sm:$0xff]
  %v3596 = vld [vmem:[%s4 + $0x160] sm:$0xff]
  %v3597 = vld [vmem:[%s4 + $0x168] sm:$0xff]
  %v3598 = vld [vmem:[%s4 + $0x170] sm:$0xff]
  %v3599 = vld [vmem:[%s4 + $0x178] sm:$0xff]
  %v3600 = vld [vmem:[%s4 + $0x180] sm:$0xff]
  %v3601 = vld [vmem:[%s4 + $0x188] sm:$0xff]
  %v3602 = vld [vmem:[%s4 + $0x190] sm:$0xff]
  %v3603 = vld [vmem:[%s4 + $0x198] sm:$0xff]
  %v3604 = vld [vmem:[%s4 + $0x1a0] sm:$0xff]
  %v3605 = vld [vmem:[%s4 + $0x1a8] sm:$0xff]
  %v3606 = vld [vmem:[%s4 + $0x1b0] sm:$0xff]
  %v3607 = vld [vmem:[%s4 + $0x1b8] sm:$0xff]
  %v3608 = vld [vmem:[%s4 + $0x1c0] sm:$0xff]
  %v3609 = vld [vmem:[%s4 + $0x1c8] sm:$0xff]
  %v3610 = vld [vmem:[%s4 + $0x1d0] sm:$0xff]
  %v3611 = vld [vmem:[%s4 + $0x1d8] sm:$0xff]
  %v3612 = vld [vmem:[%s4 + $0x1e0] sm:$0xff]
  %v3613 = vld [vmem:[%s4 + $0x1e8] sm:$0xff]
  %v3614 = vld [vmem:[%s4 + $0x1f0] sm:$0xff]
  %v3615 = vld [vmem:[%s4 + $0x1f8] sm:$0xff]
  %v3616 = vld [vmem:[%s4 + $0x200] sm:$0xff]
  %v3617 = vld [vmem:[%s4 + $0x208] sm:$0xff]
  %v3618 = vld [vmem:[%s4 + $0x210] sm:$0xff]
  %v3619 = vld [vmem:[%s4 + $0x218] sm:$0xff]
  %v3620 = vld [vmem:[%s4 + $0x220] sm:$0xff]
  %v3621 = vld [vmem:[%s4 + $0x228] sm:$0xff]
  %v3622 = vld [vmem:[%s4 + $0x230] sm:$0xff]
  %v3623 = vld [vmem:[%s4 + $0x238] sm:$0xff]
  %v3624 = vld [vmem:[%s4 + $0x240] sm:$0xff]
  %v3625 = vld [vmem:[%s4 + $0x248] sm:$0xff]
  %v3626 = vld [vmem:[%s4 + $0x250] sm:$0xff]
  %v3627 = vld [vmem:[%s4 + $0x258] sm:$0xff]
  %v3628 = vld [vmem:[%s4 + $0x260] sm:$0xff]
  %v3629 = vld [vmem:[%s4 + $0x268] sm:$0xff]
  %v3630 = vld [vmem:[%s4 + $0x270] sm:$0xff]
  %v3631 = vld [vmem:[%s4 + $0x278] sm:$0xff]
  %v3632 = vld [vmem:[%s4 + $0x280] sm:$0xff]
  %v3633 = vld [vmem:[%s4 + $0x288] sm:$0xff]
  %v3634 = vld [vmem:[%s4 + $0x290] sm:$0xff]
  %v3635 = vld [vmem:[%s4 + $0x298] sm:$0xff]
  %v3636 = vld [vmem:[%s4 + $0x2a0] sm:$0xff]
  %v3637 = vld [vmem:[%s4 + $0x2a8] sm:$0xff]
  %v3638 = vld [vmem:[%s4 + $0x2b0] sm:$0xff]
  %v3639 = vld [vmem:[%s4 + $0x2b8] sm:$0xff]
  %v3640 = vld [vmem:[%s4 + $0x2c0] sm:$0xff]
  %v3641 = vld [vmem:[%s4 + $0x2c8] sm:$0xff]
  %v3642 = vld [vmem:[%s4 + $0x2d0] sm:$0xff]
  %v3643 = vld [vmem:[%s4 + $0x2d8] sm:$0xff]
  %v3644 = vld [vmem:[%s4 + $0x2e0] sm:$0xff]
  %v3645 = vld [vmem:[%s4 + $0x2e8] sm:$0xff]
  %v3646 = vld [vmem:[%s4 + $0x2f0] sm:$0xff]
  %v3647 = vld [vmem:[%s4 + $0x2f8] sm:$0xff]
  %3648 = vmatprep.subr.mxu0 %v3583
  %3649 = vmatpush1.msra.mxu0 %v3582
  %3650 = vmatprep.subr.mxu0 %v3581
  %3651 = vmatpush1.msra.mxu0 %v3580
  %3652 = vmatprep.subr.mxu0 %v3579
  %3653 = vmatpush1.msra.mxu0 %v3578
  %3654 = vmatprep.subr.mxu0 %v3577
  %3655 = vmatpush1.msra.mxu0 %v3576
  %3656 = vmatprep.subr.mxu0 %v3575
  %3657 = vmatpush1.msra.mxu0 %v3574
  %3658 = vmatprep.subr.mxu0 %v3573
  %3659 = vmatpush1.msra.mxu0 %v3572
  %3660 = vmatprep.subr.mxu0 %v3571
  %3661 = vmatpush1.msra.mxu0 %v3570
  %3662 = vmatprep.subr.mxu0 %v3569
  %3663 = vmatpush1.msra.mxu0 %v3568
  %3664 = vmatprep.subr.mxu0 %v3567
  %3665 = vmatpush1.msra.mxu0 %v3566
  %3666 = vmatprep.subr.mxu0 %v3565
  %3667 = vmatpush1.msra.mxu0 %v3564
  %3668 = vmatprep.subr.mxu0 %v3563
  %3669 = vmatpush1.msra.mxu0 %v3562
  %3670 = vmatprep.subr.mxu0 %v3561
  %3671 = vmatpush1.msra.mxu0 %v3560
  %3672 = vmatprep.subr.mxu0 %v3559
  %3673 = vmatpush1.msra.mxu0 %v3558
  %3674 = vmatprep.subr.mxu0 %v3557
  %3675 = vmatpush1.msra.mxu0 %v3556
  %3676 = vmatprep.subr.mxu0 %v3555
  %3677 = vmatpush1.msra.mxu0 %v3554
  %3678 = vmatprep.subr.mxu0 %v3553
  %3679 = vmatpush1.msra.mxu0 %v3552
  %3680 = vmatprep.subr.mxu0 %v3615
  %3681 = vmatpush2.msra.mxu0 %v3614
  %3682 = vmatprep.subr.mxu0 %v3613
  %3683 = vmatpush2.msra.mxu0 %v3612
  %3684 = vmatprep.subr.mxu0 %v3611
  %3685 = vmatpush2.msra.mxu0 %v3610
  %3686 = vmatprep.subr.mxu0 %v3609
  %3687 = vmatpush2.msra.mxu0 %v3608
  %3688 = vmatprep.subr.mxu0 %v3607
  %3689 = vmatpush2.msra.mxu0 %v3606
  %3690 = vmatprep.subr.mxu0 %v3605
  %3691 = vmatpush2.msra.mxu0 %v3604
  %3692 = vmatprep.subr.mxu0 %v3603
  %3693 = vmatpush2.msra.mxu0 %v3602
  %3694 = vmatprep.subr.mxu0 %v3601
  %3695 = vmatpush2.msra.mxu0 %v3600
  %3696 = vmatprep.subr.mxu0 %v3599
  %3697 = vmatpush2.msra.mxu0 %v3598
  %3698 = vmatprep.subr.mxu0 %v3597
  %3699 = vmatpush2.msra.mxu0 %v3596
  %3700 = vmatprep.subr.mxu0 %v3595
  %3701 = vmatpush2.msra.mxu0 %v3594
  %3702 = vmatprep.subr.mxu0 %v3593
  %3703 = vmatpush2.msra.mxu0 %v3592
  %3704 = vmatprep.subr.mxu0 %v3591
  %3705 = vmatpush2.msra.mxu0 %v3590
  %3706 = vmatprep.subr.mxu0 %v3589
  %3707 = vmatpush2.msra.mxu0 %v3588
  %3708 = vmatprep.subr.mxu0 %v3587
  %3709 = vmatpush2.msra.mxu0 %v3586
  %3710 = vmatprep.subr.mxu0 %v3585
  %3711 = vmatpush2.msra.mxu0 %v3584
  %3712 = vmatprep.mubr.f32.mxu0 %v3386
  %3713 = vmatmul.mubr.f32.gmra.mxu0 %v3222
  %v3714 = vpop.f32.mrf.mxu0
  %v3715 = vadd.f32 0.0, %v3714
  %v3716 = vpop.f32.mrf.mxu0
  %v3717 = vadd.f32 0.0, %v3716
  %3718 = vdwg.mxu0
  %3719 = vmatprep.subr.mxu0 %v3647
  %3720 = vmatpush1.msra.mxu0 %v3646
  %3721 = vmatprep.subr.mxu0 %v3645
  %3722 = vmatpush1.msra.mxu0 %v3644
  %3723 = vmatprep.subr.mxu0 %v3643
  %3724 = vmatpush1.msra.mxu0 %v3642
  %3725 = vmatprep.subr.mxu0 %v3641
  %3726 = vmatpush1.msra.mxu0 %v3640
  %3727 = vmatprep.subr.mxu0 %v3639
  %3728 = vmatpush1.msra.mxu0 %v3638
  %3729 = vmatprep.subr.mxu0 %v3637
  %3730 = vmatpush1.msra.mxu0 %v3636
  %3731 = vmatprep.subr.mxu0 %v3635
  %3732 = vmatpush1.msra.mxu0 %v3634
  %3733 = vmatprep.subr.mxu0 %v3633
  %3734 = vmatpush1.msra.mxu0 %v3632
  %3735 = vmatprep.subr.mxu0 %v3631
  %3736 = vmatpush1.msra.mxu0 %v3630
  %3737 = vmatprep.subr.mxu0 %v3629
  %3738 = vmatpush1.msra.mxu0 %v3628
  %3739 = vmatprep.subr.mxu0 %v3627
  %3740 = vmatpush1.msra.mxu0 %v3626
  %3741 = vmatprep.subr.mxu0 %v3625
  %3742 = vmatpush1.msra.mxu0 %v3624
  %3743 = vmatprep.subr.mxu0 %v3623
  %3744 = vmatpush1.msra.mxu0 %v3622
  %3745 = vmatprep.subr.mxu0 %v3621
  %3746 = vmatpush1.msra.mxu0 %v3620
  %3747 = vmatprep.subr.mxu0 %v3619
  %3748 = vmatpush1.msra.mxu0 %v3618
  %3749 = vmatprep.subr.mxu0 %v3617
  %3750 = vmatpush1.msra.mxu0 %v3616
  %3751 = vmatprep.subr.mxu0 0.0
  %3752 = vmatpush2.msra.mxu0 0.0
  %3753 = vmatprep.subr.mxu0 0.0
  %3754 = vmatpush2.msra.mxu0 0.0
  %3755 = vmatprep.subr.mxu0 0.0
  %3756 = vmatpush2.msra.mxu0 0.0
  %3757 = vmatprep.subr.mxu0 0.0
  %3758 = vmatpush2.msra.mxu0 0.0
  %3759 = vmatprep.subr.mxu0 0.0
  %3760 = vmatpush2.msra.mxu0 0.0
  %3761 = vmatprep.subr.mxu0 0.0
  %3762 = vmatpush2.msra.mxu0 0.0
  %3763 = vmatprep.subr.mxu0 0.0
  %3764 = vmatpush2.msra.mxu0 0.0
  %3765 = vmatprep.subr.mxu0 0.0
  %3766 = vmatpush2.msra.mxu0 0.0
  %3767 = vmatprep.subr.mxu0 0.0
  %3768 = vmatpush2.msra.mxu0 0.0
  %3769 = vmatprep.subr.mxu0 0.0
  %3770 = vmatpush2.msra.mxu0 0.0
  %3771 = vmatprep.subr.mxu0 0.0
  %3772 = vmatpush2.msra.mxu0 0.0
  %3773 = vmatprep.subr.mxu0 0.0
  %3774 = vmatpush2.msra.mxu0 0.0
  %3775 = vmatprep.subr.mxu0 0.0
  %3776 = vmatpush2.msra.mxu0 0.0
  %3777 = vmatprep.subr.mxu0 0.0
  %3778 = vmatpush2.msra.mxu0 0.0
  %3779 = vmatprep.subr.mxu0 0.0
  %3780 = vmatpush2.msra.mxu0 0.0
  %3781 = vmatprep.subr.mxu0 0.0
  %3782 = vmatpush2.msra.mxu0 0.0
  %3783 = vmatprep.mubr.f32.mxu0 0.0
  %3784 = vmatmul.mubr.f32.gmra.mxu0 %v3549
  %v3785 = vpop.f32.mrf.mxu0
  %v3786 = vadd.f32 %v3715, %v3785
  %v3787 = vpop.f32.mrf.mxu0
  %v3788 = vadd.f32 %v3717, %v3787
  %3789 = vdwg.mxu0
  %v3790 = vxor.u32 %v3786, 2147483648
  %v3791 = vxor.u32 %v3788, 2147483648
  %v3792 = vmul.f32 %v3790, 1.442695
  %v3793 = vpow.pop %v3792
  %v3794 = vmul.f32 %v3791, 1.442695
  %v3795 = vpow.pop %v3794
  %v3796 = vadd.f32 %v3793, 1.0
  %v3797 = vadd.f32 %v3795, 1.0
  %v3798 = vrcp.pop %v3796
  %v3799 = vmul.f32 1.0, %v3798
  %v3800 = vrcp.pop %v3797
  %v3801 = vmul.f32 1.0, %v3800
  %v3802 = vld [vmem:[%s5] sm:$0xff]
  %v3803 = vld [vmem:[%s5 + $0x8] sm:$0xff]
  %v3804 = vld [vmem:[%s5 + $0x10] sm:$0xff]
  %v3805 = vld [vmem:[%s5 + $0x18] sm:$0xff]
  %v3806 = vld [vmem:[%s5 + $0x20] sm:$0xff]
  %v3807 = vld [vmem:[%s5 + $0x28] sm:$0xff]
  %v3808 = vld [vmem:[%s5 + $0x30] sm:$0xff]
  %v3809 = vld [vmem:[%s5 + $0x38] sm:$0xff]
  %v3810 = vld [vmem:[%s5 + $0x40] sm:$0xff]
  %v3811 = vld [vmem:[%s5 + $0x48] sm:$0xff]
  %v3812 = vld [vmem:[%s5 + $0x50] sm:$0xff]
  %v3813 = vld [vmem:[%s5 + $0x58] sm:$0xff]
  %v3814 = vld [vmem:[%s5 + $0x60] sm:$0xff]
  %v3815 = vld [vmem:[%s5 + $0x68] sm:$0xff]
  %v3816 = vld [vmem:[%s5 + $0x70] sm:$0xff]
  %v3817 = vld [vmem:[%s5 + $0x78] sm:$0xff]
  %v3818 = vld [vmem:[%s5 + $0x80] sm:$0xff]
  %v3819 = vld [vmem:[%s5 + $0x88] sm:$0xff]
  %v3820 = vld [vmem:[%s5 + $0x90] sm:$0xff]
  %v3821 = vld [vmem:[%s5 + $0x98] sm:$0xff]
  %v3822 = vld [vmem:[%s5 + $0xa0] sm:$0xff]
  %v3823 = vld [vmem:[%s5 + $0xa8] sm:$0xff]
  %v3824 = vld [vmem:[%s5 + $0xb0] sm:$0xff]
  %v3825 = vld [vmem:[%s5 + $0xb8] sm:$0xff]
  %v3826 = vld [vmem:[%s5 + $0xc0] sm:$0xff]
  %v3827 = vld [vmem:[%s5 + $0xc8] sm:$0xff]
  %v3828 = vld [vmem:[%s5 + $0xd0] sm:$0xff]
  %v3829 = vld [vmem:[%s5 + $0xd8] sm:$0xff]
  %v3830 = vld [vmem:[%s5 + $0xe0] sm:$0xff]
  %v3831 = vld [vmem:[%s5 + $0xe8] sm:$0xff]
  %v3832 = vld [vmem:[%s5 + $0xf0] sm:$0xff]
  %v3833 = vld [vmem:[%s5 + $0xf8] sm:$0xff]
  %3834 = vmatprep.subr.mxu0 0.0
  %3835 = vmatpush1.msra.mxu0 %v3817
  %3836 = vmatprep.subr.mxu0 0.0
  %3837 = vmatpush1.msra.mxu0 %v3816
  %3838 = vmatprep.subr.mxu0 0.0
  %3839 = vmatpush1.msra.mxu0 %v3815
  %3840 = vmatprep.subr.mxu0 0.0
  %3841 = vmatpush1.msra.mxu0 %v3814
  %3842 = vmatprep.subr.mxu0 0.0
  %3843 = vmatpush1.msra.mxu0 %v3813
  %3844 = vmatprep.subr.mxu0 0.0
  %3845 = vmatpush1.msra.mxu0 %v3812
  %3846 = vmatprep.subr.mxu0 0.0
  %3847 = vmatpush1.msra.mxu0 %v3811
  %3848 = vmatprep.subr.mxu0 0.0
  %3849 = vmatpush1.msra.mxu0 %v3810
  %3850 = vmatprep.subr.mxu0 0.0
  %3851 = vmatpush1.msra.mxu0 %v3809
  %3852 = vmatprep.subr.mxu0 0.0
  %3853 = vmatpush1.msra.mxu0 %v3808
  %3854 = vmatprep.subr.mxu0 0.0
  %3855 = vmatpush1.msra.mxu0 %v3807
  %3856 = vmatprep.subr.mxu0 0.0
  %3857 = vmatpush1.msra.mxu0 %v3806
  %3858 = vmatprep.subr.mxu0 0.0
  %3859 = vmatpush1.msra.mxu0 %v3805
  %3860 = vmatprep.subr.mxu0 0.0
  %3861 = vmatpush1.msra.mxu0 %v3804
  %3862 = vmatprep.subr.mxu0 0.0
  %3863 = vmatpush1.msra.mxu0 %v3803
  %3864 = vmatprep.subr.mxu0 0.0
  %3865 = vmatpush1.msra.mxu0 %v3802
  %3866 = vmatprep.subr.mxu0 0.0
  %3867 = vmatpush2.msra.mxu0 %v3833
  %3868 = vmatprep.subr.mxu0 0.0
  %3869 = vmatpush2.msra.mxu0 %v3832
  %3870 = vmatprep.subr.mxu0 0.0
  %3871 = vmatpush2.msra.mxu0 %v3831
  %3872 = vmatprep.subr.mxu0 0.0
  %3873 = vmatpush2.msra.mxu0 %v3830
  %3874 = vmatprep.subr.mxu0 0.0
  %3875 = vmatpush2.msra.mxu0 %v3829
  %3876 = vmatprep.subr.mxu0 0.0
  %3877 = vmatpush2.msra.mxu0 %v3828
  %3878 = vmatprep.subr.mxu0 0.0
  %3879 = vmatpush2.msra.mxu0 %v3827
  %3880 = vmatprep.subr.mxu0 0.0
  %3881 = vmatpush2.msra.mxu0 %v3826
  %3882 = vmatprep.subr.mxu0 0.0
  %3883 = vmatpush2.msra.mxu0 %v3825
  %3884 = vmatprep.subr.mxu0 0.0
  %3885 = vmatpush2.msra.mxu0 %v3824
  %3886 = vmatprep.subr.mxu0 0.0
  %3887 = vmatpush2.msra.mxu0 %v3823
  %3888 = vmatprep.subr.mxu0 0.0
  %3889 = vmatpush2.msra.mxu0 %v3822
  %3890 = vmatprep.subr.mxu0 0.0
  %3891 = vmatpush2.msra.mxu0 %v3821
  %3892 = vmatprep.subr.mxu0 0.0
  %3893 = vmatpush2.msra.mxu0 %v3820
  %3894 = vmatprep.subr.mxu0 0.0
  %3895 = vmatpush2.msra.mxu0 %v3819
  %3896 = vmatprep.subr.mxu0 0.0
  %3897 = vmatpush2.msra.mxu0 %v3818
  %3898 = vmatprep.mubr.f32.mxu0 %v3801
  %3899 = vmatmul.mubr.f32.gmra.mxu0 %v3799
  %v3900 = vpop.f32.mrf.mxu0
  %v3901 = vadd.f32 0.0, %v3900
  %v3902 = vpop.f32.mrf.mxu0
  %3903 = vdwg.mxu0
  %v3904 = vxor.u32 %v3901, 2147483648
  %v3905 = vmul.f32 %v3904, 1.442695
  %v3906 = vpow.pop %v3905
  %v3907 = vadd.f32 %v3906, 1.0
  %v3908 = vrcp.pop %v3907
  %v3909 = vmul.f32 1.0, %v3908
  %3910 = vst [vmem:[#allocation2 + $0x3] sm:$0x1] %v3909
  %v3911 = vld [vmem:[#allocation2 + $0x3] sm:$0x1]
  %v3912 = vld [vmem:[%s6] sm:$0xff]
  %v3913 = vld [vmem:[%s6 + $0x8] sm:$0xff]
  %v3914 = vld [vmem:[%s6 + $0x10] sm:$0xff]
  %v3915 = vld [vmem:[%s6 + $0x18] sm:$0xff]
  %v3916 = vld [vmem:[%s6 + $0x20] sm:$0xff]
  %v3917 = vld [vmem:[%s6 + $0x28] sm:$0xff]
  %v3918 = vld [vmem:[%s6 + $0x30] sm:$0xff]
  %v3919 = vld [vmem:[%s6 + $0x38] sm:$0xff]
  %v3920 = vld [vmem:[%s6 + $0x40] sm:$0xff]
  %v3921 = vld [vmem:[%s6 + $0x48] sm:$0xff]
  %v3922 = vld [vmem:[%s6 + $0x50] sm:$0xff]
  %v3923 = vld [vmem:[%s6 + $0x58] sm:$0xff]
  %v3924 = vld [vmem:[%s6 + $0x60] sm:$0xff]
  %v3925 = vld [vmem:[%s6 + $0x68] sm:$0xff]
  %v3926 = vld [vmem:[%s6 + $0x70] sm:$0xff]
  %v3927 = vld [vmem:[%s6 + $0x78] sm:$0xff]
  %v3928 = vld [vmem:[%s7] sm:$0x1]
  %3929 = vmatprep.subr.mxu0 0.0
  %3930 = vmatpush1.msra.mxu0 %v3927
  %3931 = vmatprep.subr.mxu0 0.0
  %3932 = vmatpush1.msra.mxu0 %v3926
  %3933 = vmatprep.subr.mxu0 0.0
  %3934 = vmatpush1.msra.mxu0 %v3925
  %3935 = vmatprep.subr.mxu0 0.0
  %3936 = vmatpush1.msra.mxu0 %v3924
  %3937 = vmatprep.subr.mxu0 0.0
  %3938 = vmatpush1.msra.mxu0 %v3923
  %3939 = vmatprep.subr.mxu0 0.0
  %3940 = vmatpush1.msra.mxu0 %v3922
  %3941 = vmatprep.subr.mxu0 0.0
  %3942 = vmatpush1.msra.mxu0 %v3921
  %3943 = vmatprep.subr.mxu0 0.0
  %3944 = vmatpush1.msra.mxu0 %v3920
  %3945 = vmatprep.subr.mxu0 0.0
  %3946 = vmatpush1.msra.mxu0 %v3919
  %3947 = vmatprep.subr.mxu0 0.0
  %3948 = vmatpush1.msra.mxu0 %v3918
  %3949 = vmatprep.subr.mxu0 0.0
  %3950 = vmatpush1.msra.mxu0 %v3917
  %3951 = vmatprep.subr.mxu0 0.0
  %3952 = vmatpush1.msra.mxu0 %v3916
  %3953 = vmatprep.subr.mxu0 0.0
  %3954 = vmatpush1.msra.mxu0 %v3915
  %3955 = vmatprep.subr.mxu0 0.0
  %3956 = vmatpush1.msra.mxu0 %v3914
  %3957 = vmatprep.subr.mxu0 0.0
  %3958 = vmatpush1.msra.mxu0 %v3913
  %3959 = vmatprep.subr.mxu0 0.0
  %3960 = vmatpush1.msra.mxu0 %v3912
  %3961 = vmatprep.subr.mxu0 0.0
  %3962 = vmatpush2.msra.mxu0 0.0
  %3963 = vmatprep.subr.mxu0 0.0
  %3964 = vmatpush2.msra.mxu0 0.0
  %3965 = vmatprep.subr.mxu0 0.0
  %3966 = vmatpush2.msra.mxu0 0.0
  %3967 = vmatprep.subr.mxu0 0.0
  %3968 = vmatpush2.msra.mxu0 0.0
  %3969 = vmatprep.subr.mxu0 0.0
  %3970 = vmatpush2.msra.mxu0 0.0
  %3971 = vmatprep.subr.mxu0 0.0
  %3972 = vmatpush2.msra.mxu0 0.0
  %3973 = vmatprep.subr.mxu0 0.0
  %3974 = vmatpush2.msra.mxu0 0.0
  %3975 = vmatprep.subr.mxu0 0.0
  %3976 = vmatpush2.msra.mxu0 0.0
  %3977 = vmatprep.subr.mxu0 0.0
  %3978 = vmatpush2.msra.mxu0 0.0
  %3979 = vmatprep.subr.mxu0 0.0
  %3980 = vmatpush2.msra.mxu0 0.0
  %3981 = vmatprep.subr.mxu0 0.0
  %3982 = vmatpush2.msra.mxu0 0.0
  %3983 = vmatprep.subr.mxu0 0.0
  %3984 = vmatpush2.msra.mxu0 0.0
  %3985 = vmatprep.subr.mxu0 0.0
  %3986 = vmatpush2.msra.mxu0 0.0
  %3987 = vmatprep.subr.mxu0 0.0
  %3988 = vmatpush2.msra.mxu0 0.0
  %3989 = vmatprep.subr.mxu0 0.0
  %3990 = vmatpush2.msra.mxu0 0.0
  %3991 = vmatprep.subr.mxu0 0.0
  %3992 = vmatpush2.msra.mxu0 0.0
  %3993 = vmatprep.mubr.f32.mxu0 0.0
  %3994 = vmatmul.mubr.f32.gmra.mxu0 %v3911
  %v3995 = vpop.f32.mrf.mxu0
  %v3996 = vadd.f32 %v3928, %v3995
  %v3997 = vpop.f32.mrf.mxu0
  %3998 = vdwg.mxu0
  %vm3999 = vcmask 1040384
  %v4000 = vsel %vm3999, %v3996, -inf
  %4001 = vmax.xlane.f32.xlu0 %v4000
  %v4002 = vpop.xlane.xlu0 %4001
  %v4003 = vsub.f32 %v3996, %v4002
  %v4004 = vmul.f32 %v4003, 1.442695
  %v4005 = vpow.pop %v4004
  %v4006 = vsel %vm3999, %v4005, 0.0
  %4007 = vadd.xlane.f32.xlu0 %v4006
  %v4008 = vpop.xlane.xlu0 %4007
  %v4009 = vrcp.pop %v4008
  %v4010 = vmul.f32 %v4005, %v4009
  %4011 = vst [vmem:[%s8] sm:$0x1] %v4010
  // Predicated region
  $region26: #{multi_attention_fcn_forward.1} parent=0 // pred_check
    _
  $region27: #{multi_attention_fcn_forward.1} parent=0 // pred_check_branch
    %4013 = sbr.rel (0) target = $region29
  $region28: #{multi_attention_fcn_forward.1} parent=0 // pred_region
    _
  $region29: #{multi_attention_fcn_forward.1} parent=0 // pred_fallthru
    _
  // Predicated region
  $region30: #{multi_attention_fcn_forward.1} parent=0 // pred_check
    _
  $region31: #{multi_attention_fcn_forward.1} parent=0 // pred_check_branch
    %4015 = sbr.rel (0) target = $region33
  $region32: #{multi_attention_fcn_forward.1} parent=0 // pred_region
    _
  $region33: #{multi_attention_fcn_forward.1} parent=0 // pred_fallthru
    _

</llo_original>
